<compile_context>
chip_gen: v6e
topology: v6e:2x2x1
jax: 0.10.0
libtpu: 0.0.40
codegen_flags: <defaults>
</compile_context>

<pallas_src>
import numpy as np

import jax
import jax.numpy as jnp
from jax import lax
from jax.experimental import pallas as pl
from jax.experimental.pallas import tpu as pltpu


# ----------------------------------------------------------------------------
# Parameters (deterministic, PyTorch-default-style uniform init, PyTorch layout)
# ----------------------------------------------------------------------------
def _uniform(key, shape, fan_in):
    bound = 1.0 / jnp.sqrt(float(fan_in))
    return jax.random.uniform(key, shape, jnp.float32, -bound, bound)


def init_params(key):
    ks = jax.random.split(key, 10)
    return {
        "conv1_w": _uniform(ks[0], (6, 3, 5, 5), 3 * 5 * 5),
        "conv1_b": _uniform(ks[1], (6,), 3 * 5 * 5),
        "conv2_w": _uniform(ks[2], (16, 6, 5, 5), 6 * 5 * 5),
        "conv2_b": _uniform(ks[3], (16,), 6 * 5 * 5),
        "fc1_w": _uniform(ks[4], (120, 16 * 5 * 5), 16 * 5 * 5),
        "fc1_b": _uniform(ks[5], (120,), 16 * 5 * 5),
        "fc2_w": _uniform(ks[6], (84, 120), 120),
        "fc2_b": _uniform(ks[7], (84,), 120),
        "fc3_w": _uniform(ks[8], (10, 84), 84),
        "fc3_b": _uniform(ks[9], (10,), 84),
    }


# ----------------------------------------------------------------------------
# One-time host packing of weights into lane-dense block-Toeplitz matrices
# ----------------------------------------------------------------------------
# Lane layouts used by the kernel:
#   input / conv1 output / pool1 output : lane = w * 8  + c   (w<32 groups of 8)
#   conv2 output / pool2 output         : lane = w * 16 + c   (16 groups of 16)
#   fc activations                      : 128 lanes, features 0..N-1, rest 0
def pack_params(params):
    W1 = np.asarray(params["conv1_w"], np.float32)   # (6, 3, 5, 5)
    b1 = np.asarray(params["conv1_b"], np.float32)
    W2 = np.asarray(params["conv2_w"], np.float32)   # (16, 6, 5, 5)
    b2 = np.asarray(params["conv2_b"], np.float32)
    F1 = np.asarray(params["fc1_w"], np.float32)     # (120, 400)
    f1b = np.asarray(params["fc1_b"], np.float32)
    F2 = np.asarray(params["fc2_w"], np.float32)     # (84, 120)
    f2b = np.asarray(params["fc2_b"], np.float32)
    F3 = np.asarray(params["fc3_w"], np.float32)     # (10, 84)
    f3b = np.asarray(params["fc3_b"], np.float32)

    # conv1: T1[dh, w*8+ci, w1*8+co] = W1[co, ci, dh, w-w1]   (0 <= w-w1 <= 4)
    T1 = np.zeros((5, 256, 256), np.float32)
    for dh in range(5):
        for w1 in range(28):
            for dw in range(5):
                w = w1 + dw
                T1[dh, w * 8:w * 8 + 3, w1 * 8:w1 * 8 + 6] = W1[:, :, dh, dw].T
    B1L = np.zeros((1, 256), np.float32)
    for w1 in range(28):
        B1L[0, w1 * 8:w1 * 8 + 6] = b1

    # conv2 consumes pool1 output that lives at even (row, column-group)
    # positions of the original grid; the stride-2 is folded into T2:
    # T2[dh, (2*(w2+dw))*8+ci, w2*16+co] = W2[co, ci, dh, dw]
    T2 = np.zeros((5, 256, 256), np.float32)
    for dh in range(5):
        for w2 in range(10):
            for dw in range(5):
                u = 2 * (w2 + dw)
                T2[dh, u * 8:u * 8 + 6, w2 * 16:w2 * 16 + 16] = W2[:, :, dh, dw].T
    B2L = np.zeros((1, 256), np.float32)
    for w2 in range(10):
        B2L[0, w2 * 16:w2 * 16 + 16] = b2

    # fc1: pool2 value for (h3, w3, c) sits at lane (2*w3)*16 + c of the row
    # belonging to image-row 4*h3; PyTorch flatten order is c*25 + h3*5 + w3.
    G = np.zeros((5, 256, 128), np.float32)
    for h3 in range(5):
        for w3 in range(5):
            for c in range(16):
                G[h3, (2 * w3) * 16 + c, :120] = F1[:, c * 25 + h3 * 5 + w3]
    BF1 = np.zeros((1, 128), np.float32)
    BF1[0, :120] = f1b

    WF2 = np.zeros((128, 128), np.float32)
    WF2[:120, :84] = F2.T
    BF2 = np.zeros((1, 128), np.float32)
    BF2[0, :84] = f2b

    WF3 = np.zeros((128, 128), np.float32)
    WF3[:84, :10] = F3.T
    BF3 = np.zeros((1, 128), np.float32)
    BF3[0, :10] = f3b

    return {
        "t1": jnp.asarray(T1), "b1": jnp.asarray(B1L),
        "t2": jnp.asarray(T2), "b2": jnp.asarray(B2L),
        "g": jnp.asarray(G), "bf1": jnp.asarray(BF1),
        "wf2": jnp.asarray(WF2), "bf2": jnp.asarray(BF2),
        "wf3": jnp.asarray(WF3), "bf3": jnp.asarray(BF3),
    }


def pack_input(x):
    """(B, 3, 32, 32) NCHW -> (32*B + 8*B, 256) with row = h*B + b, lane = w*8 + c."""
    bsz = x.shape[0]
    xt = jnp.transpose(x, (2, 0, 3, 1))                  # (H, B, W, C)
    xt = jnp.pad(xt, ((0, 0), (0, 0), (0, 0), (0, 5)))   # C: 3 -> 8
    xt = xt.reshape(32 * bsz, 32 * 8)
    xt = jnp.pad(xt, ((0, 8 * bsz), (0, 0)))             # zero pad rows for shifted reads
    return xt


# ----------------------------------------------------------------------------
# Fused forward pass: one Pallas kernel for the whole network
# ----------------------------------------------------------------------------
def lenet_forward(packed, x):
    bsz = x.shape[0]
    R = 32 * bsz          # data rows
    PAD = 8 * bsz         # zero-padded tail rows (max row shift = 8*bsz)
    xp = pack_input(x)    # (R + PAD, 256)

    def kernel(x_ref, t1_ref, b1_ref, t2_ref, b2_ref, g_ref, bf1_ref,
               wf2_ref, bf2_ref, wf3_ref, bf3_ref, out_ref, s1, s2, s3, s4):
        f32 = jnp.float32

        # 0/1 lane-group shift matrices (pool along W via MXU; avoids any
        # lane-level data movement primitives).
        rr = lax.broadcasted_iota(jnp.int32, (256, 256), 0)
        cc = lax.broadcasted_iota(jnp.int32, (256, 256), 1)
        p8 = (rr == cc + 8).astype(f32)
        p16 = (rr == cc + 16).astype(f32)

        # zero the scratch pad rows so shifted slab reads stay well defined
        zpad = jnp.zeros((PAD, 256), f32)
        s1[R:R + PAD, :] = zpad
        s2[R:R + PAD, :] = zpad
        s3[R:R + PAD, :] = zpad
        s4[R:R + PAD, :] = zpad

        # ---- conv1 (5x5, 3->6) + bias + ReLU ---------------------------------
        acc = jnp.zeros((R, 256), f32)
        for dh in range(5):
            acc = acc + jnp.dot(x_ref[pl.ds(dh * bsz, R), :], t1_ref[dh],
                                preferred_element_type=f32)
        s1[0:R, :] = jnp.maximum(acc + b1_ref[...], 0.0)

        # ---- maxpool 2x2 (rows via shifted slab, columns via shift matmul) ---
        a = jnp.maximum(s1[pl.ds(0, R), :], s1[pl.ds(bsz, R), :])
        s2[0:R, :] = jnp.maximum(a, jnp.dot(a, p8, preferred_element_type=f32))

        # ---- conv2 (5x5, 6->16) + bias + ReLU --------------------------------
        acc = jnp.zeros((R, 256), f32)
        for dh in range(5):
            acc = acc + jnp.dot(s2[pl.ds(2 * dh * bsz, R), :], t2_ref[dh],
                                preferred_element_type=f32)
        s3[0:R, :] = jnp.maximum(acc + b2_ref[...], 0.0)

        # ---- maxpool 2x2 -----------------------------------------------------
        a2 = jnp.maximum(s3[pl.ds(0, R), :], s3[pl.ds(2 * bsz, R), :])
        s4[0:R, :] = jnp.maximum(a2, jnp.dot(a2, p16, preferred_element_type=f32))

        # ---- fc1 (400->120) as 5 row-blocks, then fc2, fc3 (padded to 128) ---
        h = jnp.zeros((bsz, 128), f32)
        for h3 in range(5):
            h = h + jnp.dot(s4[pl.ds(4 * h3 * bsz, bsz), :], g_ref[h3],
                            preferred_element_type=f32)
        h = jnp.maximum(h + bf1_ref[...], 0.0)
        h = jnp.maximum(jnp.dot(h, wf2_ref[...], preferred_element_type=f32)
                        + bf2_ref[...], 0.0)
        out_ref[...] = (jnp.dot(h, wf3_ref[...], preferred_element_type=f32)
                        + bf3_ref[...])

    def full(shape):
        return pl.BlockSpec(shape, lambda i: (0,) * len(shape))

    ins = [xp, packed["t1"], packed["b1"], packed["t2"], packed["b2"],
           packed["g"], packed["bf1"], packed["wf2"], packed["bf2"],
           packed["wf3"], packed["bf3"]]

    out = pl.pallas_call(
        kernel,
        out_shape=jax.ShapeDtypeStruct((bsz, 128), jnp.float32),
        grid=(1,),
        in_specs=[full(a.shape) for a in ins],
        out_specs=full((bsz, 128)),
        scratch_shapes=[pltpu.VMEM((R + PAD, 256), jnp.float32) for _ in range(4)],
    )(*ins)

    return out[:, :10]


# ----------------------------------------------------------------------------
# Plain-JAX reference of the PyTorch module (for in-script verification)
# ----------------------------------------------------------------------------
def reference_forward(params, x):
    hi = lax.Precision.HIGHEST
    y = lax.conv_general_dilated(
        x, params["conv1_w"], (1, 1), "VALID",
        dimension_numbers=("NCHW", "OIHW", "NCHW"), precision=hi)
    y = jnp.maximum(y + params["conv1_b"][None, :, None, None], 0.0)
    y = lax.reduce_window(y, -jnp.inf, lax.max, (1, 1, 2, 2), (1, 1, 2, 2), "VALID")
    y = lax.conv_general_dilated(
        y, params["conv2_w"], (1, 1), "VALID",
        dimension_numbers=("NCHW", "OIHW", "NCHW"), precision=hi)
    y = jnp.maximum(y + params["conv2_b"][None, :, None, None], 0.0)
    y = lax.reduce_window(y, -jnp.inf, lax.max, (1, 1, 2, 2), (1, 1, 2, 2), "VALID")
    y = y.reshape(y.shape[0], -1)                                   # NCHW flatten (C,H,W)
    y = jnp.maximum(jnp.dot(y, params["fc1_w"].T, precision=hi) + params["fc1_b"], 0.0)
    y = jnp.maximum(jnp.dot(y, params["fc2_w"].T, precision=hi) + params["fc2_b"], 0.0)
    return jnp.dot(y, params["fc3_w"].T, precision=hi) + params["fc3_b"]


if __name__ == "__main__":
    key = jax.random.PRNGKey(0)
    k_params, k_x = jax.random.split(key)
    params = init_params(k_params)
    # input must be (B, 3, 32, 32) so the flatten matches fc1's 16*5*5 features
    x = jax.random.normal(k_x, (2, 3, 32, 32), jnp.float32)

    packed = pack_params(params)
    out = jax.jit(lenet_forward)(packed, x)
    out = jax.block_until_ready(out)
    assert out.shape == (2, 10), out.shape

    ref = reference_forward(params, x)
    max_err = float(jnp.max(jnp.abs(out - ref)))
    assert max_err < 5e-2, f"kernel/reference mismatch: max abs err {max_err}"

    print("KERNEL_OK")
</pallas_src>

<mosaic_0001>
module attributes {stable_mosaic.version = 11 : i64} {
  func.func @kernel(%arg0: i32, %arg1: memref<80x256xf32, #tpu.memory_space<vmem>>, %arg2: memref<5x256x256xf32, #tpu.memory_space<vmem>>, %arg3: memref<1x256xf32, #tpu.memory_space<vmem>>, %arg4: memref<5x256x256xf32, #tpu.memory_space<vmem>>, %arg5: memref<1x256xf32, #tpu.memory_space<vmem>>, %arg6: memref<5x256x128xf32, #tpu.memory_space<vmem>>, %arg7: memref<1x128xf32, #tpu.memory_space<vmem>>, %arg8: memref<128x128xf32, #tpu.memory_space<vmem>>, %arg9: memref<1x128xf32, #tpu.memory_space<vmem>>, %arg10: memref<128x128xf32, #tpu.memory_space<vmem>>, %arg11: memref<1x128xf32, #tpu.memory_space<vmem>>, %arg12: memref<2x128xf32, #tpu.memory_space<vmem>>, %arg13: memref<80x256xf32, #tpu.memory_space<vmem>>, %arg14: memref<80x256xf32, #tpu.memory_space<vmem>>, %arg15: memref<80x256xf32, #tpu.memory_space<vmem>>, %arg16: memref<80x256xf32, #tpu.memory_space<vmem>>) attributes {dimension_semantics = [#tpu.dimension_semantics<arbitrary>], iteration_bounds = array<i64: 1>, scalar_prefetch = 0 : i64, scratch_operands = 4 : i64, tpu.core_type = #tpu.core_type<tc>, window_params = [{pipeline_mode = #tpu.pipeline_mode<synchronous>, transform_indices = @transform_0, window_bounds = array<i64: 80, 256>}, {pipeline_mode = #tpu.pipeline_mode<synchronous>, transform_indices = @transform_1, window_bounds = array<i64: 5, 256, 256>}, {pipeline_mode = #tpu.pipeline_mode<synchronous>, transform_indices = @transform_2, window_bounds = array<i64: 1, 256>}, {pipeline_mode = #tpu.pipeline_mode<synchronous>, transform_indices = @transform_3, window_bounds = array<i64: 5, 256, 256>}, {pipeline_mode = #tpu.pipeline_mode<synchronous>, transform_indices = @transform_4, window_bounds = array<i64: 1, 256>}, {pipeline_mode = #tpu.pipeline_mode<synchronous>, transform_indices = @transform_5, window_bounds = array<i64: 5, 256, 128>}, {pipeline_mode = #tpu.pipeline_mode<synchronous>, transform_indices = @transform_6, window_bounds = array<i64: 1, 128>}, {pipeline_mode = #tpu.pipeline_mode<synchronous>, transform_indices = @transform_7, window_bounds = array<i64: 128, 128>}, {pipeline_mode = #tpu.pipeline_mode<synchronous>, transform_indices = @transform_8, window_bounds = array<i64: 1, 128>}, {pipeline_mode = #tpu.pipeline_mode<synchronous>, transform_indices = @transform_9, window_bounds = array<i64: 128, 128>}, {pipeline_mode = #tpu.pipeline_mode<synchronous>, transform_indices = @transform_10, window_bounds = array<i64: 1, 128>}, {pipeline_mode = #tpu.pipeline_mode<synchronous>, transform_indices = @transform_11, window_bounds = array<i64: 2, 128>}]} {
    %0 = tpu.iota {dimensions = array<i32: 0>} : vector<256x256xi32>
    %1 = tpu.iota {dimensions = array<i32: 1>} : vector<256x256xi32>
    %c8_i32 = arith.constant 8 : i32
    %2 = vector.broadcast %c8_i32 : i32 to vector<256x256xi32>
    %3 = arith.addi %1, %2 : vector<256x256xi32>
    %4 = arith.cmpi eq, %0, %3 : vector<256x256xi32>
    %5 = arith.extui %4 : vector<256x256xi1> to vector<256x256xi32>
    %6 = arith.sitofp %5 : vector<256x256xi32> to vector<256x256xf32>
    %c16_i32 = arith.constant 16 : i32
    %7 = vector.broadcast %c16_i32 : i32 to vector<256x256xi32>
    %8 = arith.addi %1, %7 : vector<256x256xi32>
    %9 = arith.cmpi eq, %0, %8 : vector<256x256xi32>
    %10 = arith.extui %9 : vector<256x256xi1> to vector<256x256xi32>
    %11 = arith.sitofp %10 : vector<256x256xi32> to vector<256x256xf32>
    %cst = arith.constant 0.000000e+00 : f32
    %12 = vector.broadcast %cst : f32 to vector<16x256xf32>
    %c64 = arith.constant 64 : index
    %c0 = arith.constant 0 : index
    %13 = vector.load %arg13[%c64, %c0] : memref<80x256xf32, #tpu.memory_space<vmem>>, vector<16x256xf32>
    tpu.vector_store %arg13[%c64, %c0], %12 {strides = array<i32>} : memref<80x256xf32, #tpu.memory_space<vmem>>, vector<16x256xf32>,
    %c64_0 = arith.constant 64 : index
    %c0_1 = arith.constant 0 : index
    %14 = vector.load %arg14[%c64_0, %c0_1] : memref<80x256xf32, #tpu.memory_space<vmem>>, vector<16x256xf32>
    tpu.vector_store %arg14[%c64_0, %c0_1], %12 {strides = array<i32>} : memref<80x256xf32, #tpu.memory_space<vmem>>, vector<16x256xf32>,
    %c64_2 = arith.constant 64 : index
    %c0_3 = arith.constant 0 : index
    %15 = vector.load %arg15[%c64_2, %c0_3] : memref<80x256xf32, #tpu.memory_space<vmem>>, vector<16x256xf32>
    tpu.vector_store %arg15[%c64_2, %c0_3], %12 {strides = array<i32>} : memref<80x256xf32, #tpu.memory_space<vmem>>, vector<16x256xf32>,
    %c64_4 = arith.constant 64 : index
    %c0_5 = arith.constant 0 : index
    %16 = vector.load %arg16[%c64_4, %c0_5] : memref<80x256xf32, #tpu.memory_space<vmem>>, vector<16x256xf32>
    tpu.vector_store %arg16[%c64_4, %c0_5], %12 {strides = array<i32>} : memref<80x256xf32, #tpu.memory_space<vmem>>, vector<16x256xf32>,
    %cst_6 = arith.constant 0.000000e+00 : f32
    %17 = vector.broadcast %cst_6 : f32 to vector<64x256xf32>
    %c0_7 = arith.constant 0 : index
    %c0_8 = arith.constant 0 : index
    %18 = vector.load %arg1[%c0_7, %c0_8] : memref<80x256xf32, #tpu.memory_space<vmem>>, vector<64x256xf32>
    %c0_9 = arith.constant 0 : index
    %c0_10 = arith.constant 0 : index
    %c0_11 = arith.constant 0 : index
    %19 = vector.load %arg2[%c0_9, %c0_10, %c0_11] : memref<5x256x256xf32, #tpu.memory_space<vmem>>, vector<1x256x256xf32>
    %20 = vector.shape_cast %19 : vector<1x256x256xf32> to vector<256x256xf32>
    %cst_12 = arith.constant dense<0.000000e+00> : vector<64x256xf32>
    %21 = tpu.matmul %18, %20, %cst_12 {dimension_numbers = #tpu.dot_dimension_numbers<[1], [0], [0], [1], [0, 0, 1, 1], [], []>} : vector<64x256xf32>, vector<256x256xf32>, vector<64x256xf32> -> vector<64x256xf32>
    %22 = arith.addf %17, %21 : vector<64x256xf32>
    %c2 = arith.constant 2 : index
    %c0_13 = arith.constant 0 : index
    %23 = vector.load %arg1[%c2, %c0_13] : memref<80x256xf32, #tpu.memory_space<vmem>>, vector<64x256xf32>
    %c1 = arith.constant 1 : index
    %c0_14 = arith.constant 0 : index
    %c0_15 = arith.constant 0 : index
    %24 = vector.load %arg2[%c1, %c0_14, %c0_15] : memref<5x256x256xf32, #tpu.memory_space<vmem>>, vector<1x256x256xf32>
    %25 = vector.shape_cast %24 : vector<1x256x256xf32> to vector<256x256xf32>
    %cst_16 = arith.constant dense<0.000000e+00> : vector<64x256xf32>
    %26 = tpu.matmul %23, %25, %cst_16 {dimension_numbers = #tpu.dot_dimension_numbers<[1], [0], [0], [1], [0, 0, 1, 1], [], []>} : vector<64x256xf32>, vector<256x256xf32>, vector<64x256xf32> -> vector<64x256xf32>
    %27 = arith.addf %22, %26 : vector<64x256xf32>
    %c4 = arith.constant 4 : index
    %c0_17 = arith.constant 0 : index
    %28 = vector.load %arg1[%c4, %c0_17] : memref<80x256xf32, #tpu.memory_space<vmem>>, vector<64x256xf32>
    %c2_18 = arith.constant 2 : index
    %c0_19 = arith.constant 0 : index
    %c0_20 = arith.constant 0 : index
    %29 = vector.load %arg2[%c2_18, %c0_19, %c0_20] : memref<5x256x256xf32, #tpu.memory_space<vmem>>, vector<1x256x256xf32>
    %30 = vector.shape_cast %29 : vector<1x256x256xf32> to vector<256x256xf32>
    %cst_21 = arith.constant dense<0.000000e+00> : vector<64x256xf32>
    %31 = tpu.matmul %28, %30, %cst_21 {dimension_numbers = #tpu.dot_dimension_numbers<[1], [0], [0], [1], [0, 0, 1, 1], [], []>} : vector<64x256xf32>, vector<256x256xf32>, vector<64x256xf32> -> vector<64x256xf32>
    %32 = arith.addf %27, %31 : vector<64x256xf32>
    %c6 = arith.constant 6 : index
    %c0_22 = arith.constant 0 : index
    %33 = vector.load %arg1[%c6, %c0_22] : memref<80x256xf32, #tpu.memory_space<vmem>>, vector<64x256xf32>
    %c3 = arith.constant 3 : index
    %c0_23 = arith.constant 0 : index
    %c0_24 = arith.constant 0 : index
    %34 = vector.load %arg2[%c3, %c0_23, %c0_24] : memref<5x256x256xf32, #tpu.memory_space<vmem>>, vector<1x256x256xf32>
    %35 = vector.shape_cast %34 : vector<1x256x256xf32> to vector<256x256xf32>
    %cst_25 = arith.constant dense<0.000000e+00> : vector<64x256xf32>
    %36 = tpu.matmul %33, %35, %cst_25 {dimension_numbers = #tpu.dot_dimension_numbers<[1], [0], [0], [1], [0, 0, 1, 1], [], []>} : vector<64x256xf32>, vector<256x256xf32>, vector<64x256xf32> -> vector<64x256xf32>
    %37 = arith.addf %32, %36 : vector<64x256xf32>
    %c8 = arith.constant 8 : index
    %c0_26 = arith.constant 0 : index
    %38 = vector.load %arg1[%c8, %c0_26] : memref<80x256xf32, #tpu.memory_space<vmem>>, vector<64x256xf32>
    %c4_27 = arith.constant 4 : index
    %c0_28 = arith.constant 0 : index
    %c0_29 = arith.constant 0 : index
    %39 = vector.load %arg2[%c4_27, %c0_28, %c0_29] : memref<5x256x256xf32, #tpu.memory_space<vmem>>, vector<1x256x256xf32>
    %40 = vector.shape_cast %39 : vector<1x256x256xf32> to vector<256x256xf32>
    %cst_30 = arith.constant dense<0.000000e+00> : vector<64x256xf32>
    %41 = tpu.matmul %38, %40, %cst_30 {dimension_numbers = #tpu.dot_dimension_numbers<[1], [0], [0], [1], [0, 0, 1, 1], [], []>} : vector<64x256xf32>, vector<256x256xf32>, vector<64x256xf32> -> vector<64x256xf32>
    %42 = arith.addf %37, %41 : vector<64x256xf32>
    %c0_31 = arith.constant 0 : index
    %c0_32 = arith.constant 0 : index
    %43 = vector.load %arg3[%c0_31, %c0_32] : memref<1x256xf32, #tpu.memory_space<vmem>>, vector<1x256xf32>
    %44 = vector.broadcast %43 : vector<1x256xf32> to vector<64x256xf32>
    %45 = arith.addf %42, %44 : vector<64x256xf32>
    %cst_33 = arith.constant 0.000000e+00 : f32
    %46 = vector.broadcast %cst_33 : f32 to vector<64x256xf32>
    %47 = arith.maximumf %45, %46 : vector<64x256xf32>
    %c0_34 = arith.constant 0 : index
    %c0_35 = arith.constant 0 : index
    %48 = vector.load %arg13[%c0_34, %c0_35] : memref<80x256xf32, #tpu.memory_space<vmem>>, vector<64x256xf32>
    tpu.vector_store %arg13[%c0_34, %c0_35], %47 {strides = array<i32>} : memref<80x256xf32, #tpu.memory_space<vmem>>, vector<64x256xf32>,
    %c0_36 = arith.constant 0 : index
    %c0_37 = arith.constant 0 : index
    %49 = vector.load %arg13[%c0_36, %c0_37] : memref<80x256xf32, #tpu.memory_space<vmem>>, vector<64x256xf32>
    %c2_38 = arith.constant 2 : index
    %c0_39 = arith.constant 0 : index
    %50 = vector.load %arg13[%c2_38, %c0_39] : memref<80x256xf32, #tpu.memory_space<vmem>>, vector<64x256xf32>
    %51 = arith.maximumf %49, %50 : vector<64x256xf32>
    %cst_40 = arith.constant dense<0.000000e+00> : vector<64x256xf32>
    %52 = tpu.matmul %51, %6, %cst_40 {dimension_numbers = #tpu.dot_dimension_numbers<[1], [0], [0], [1], [0, 0, 1, 1], [], []>} : vector<64x256xf32>, vector<256x256xf32>, vector<64x256xf32> -> vector<64x256xf32>
    %53 = arith.maximumf %51, %52 : vector<64x256xf32>
    %c0_41 = arith.constant 0 : index
    %c0_42 = arith.constant 0 : index
    %54 = vector.load %arg14[%c0_41, %c0_42] : memref<80x256xf32, #tpu.memory_space<vmem>>, vector<64x256xf32>
    tpu.vector_store %arg14[%c0_41, %c0_42], %53 {strides = array<i32>} : memref<80x256xf32, #tpu.memory_space<vmem>>, vector<64x256xf32>,
    %cst_43 = arith.constant 0.000000e+00 : f32
    %55 = vector.broadcast %cst_43 : f32 to vector<64x256xf32>
    %c0_44 = arith.constant 0 : index
    %c0_45 = arith.constant 0 : index
    %56 = vector.load %arg14[%c0_44, %c0_45] : memref<80x256xf32, #tpu.memory_space<vmem>>, vector<64x256xf32>
    %c0_46 = arith.constant 0 : index
    %c0_47 = arith.constant 0 : index
    %c0_48 = arith.constant 0 : index
    %57 = vector.load %arg4[%c0_46, %c0_47, %c0_48] : memref<5x256x256xf32, #tpu.memory_space<vmem>>, vector<1x256x256xf32>
    %58 = vector.shape_cast %57 : vector<1x256x256xf32> to vector<256x256xf32>
    %cst_49 = arith.constant dense<0.000000e+00> : vector<64x256xf32>
    %59 = tpu.matmul %56, %58, %cst_49 {dimension_numbers = #tpu.dot_dimension_numbers<[1], [0], [0], [1], [0, 0, 1, 1], [], []>} : vector<64x256xf32>, vector<256x256xf32>, vector<64x256xf32> -> vector<64x256xf32>
    %60 = arith.addf %55, %59 : vector<64x256xf32>
    %c4_50 = arith.constant 4 : index
    %c0_51 = arith.constant 0 : index
    %61 = vector.load %arg14[%c4_50, %c0_51] : memref<80x256xf32, #tpu.memory_space<vmem>>, vector<64x256xf32>
    %c1_52 = arith.constant 1 : index
    %c0_53 = arith.constant 0 : index
    %c0_54 = arith.constant 0 : index
    %62 = vector.load %arg4[%c1_52, %c0_53, %c0_54] : memref<5x256x256xf32, #tpu.memory_space<vmem>>, vector<1x256x256xf32>
    %63 = vector.shape_cast %62 : vector<1x256x256xf32> to vector<256x256xf32>
    %cst_55 = arith.constant dense<0.000000e+00> : vector<64x256xf32>
    %64 = tpu.matmul %61, %63, %cst_55 {dimension_numbers = #tpu.dot_dimension_numbers<[1], [0], [0], [1], [0, 0, 1, 1], [], []>} : vector<64x256xf32>, vector<256x256xf32>, vector<64x256xf32> -> vector<64x256xf32>
    %65 = arith.addf %60, %64 : vector<64x256xf32>
    %c8_56 = arith.constant 8 : index
    %c0_57 = arith.constant 0 : index
    %66 = vector.load %arg14[%c8_56, %c0_57] : memref<80x256xf32, #tpu.memory_space<vmem>>, vector<64x256xf32>
    %c2_58 = arith.constant 2 : index
    %c0_59 = arith.constant 0 : index
    %c0_60 = arith.constant 0 : index
    %67 = vector.load %arg4[%c2_58, %c0_59, %c0_60] : memref<5x256x256xf32, #tpu.memory_space<vmem>>, vector<1x256x256xf32>
    %68 = vector.shape_cast %67 : vector<1x256x256xf32> to vector<256x256xf32>
    %cst_61 = arith.constant dense<0.000000e+00> : vector<64x256xf32>
    %69 = tpu.matmul %66, %68, %cst_61 {dimension_numbers = #tpu.dot_dimension_numbers<[1], [0], [0], [1], [0, 0, 1, 1], [], []>} : vector<64x256xf32>, vector<256x256xf32>, vector<64x256xf32> -> vector<64x256xf32>
    %70 = arith.addf %65, %69 : vector<64x256xf32>
    %c12 = arith.constant 12 : index
    %c0_62 = arith.constant 0 : index
    %71 = vector.load %arg14[%c12, %c0_62] : memref<80x256xf32, #tpu.memory_space<vmem>>, vector<64x256xf32>
    %c3_63 = arith.constant 3 : index
    %c0_64 = arith.constant 0 : index
    %c0_65 = arith.constant 0 : index
    %72 = vector.load %arg4[%c3_63, %c0_64, %c0_65] : memref<5x256x256xf32, #tpu.memory_space<vmem>>, vector<1x256x256xf32>
    %73 = vector.shape_cast %72 : vector<1x256x256xf32> to vector<256x256xf32>
    %cst_66 = arith.constant dense<0.000000e+00> : vector<64x256xf32>
    %74 = tpu.matmul %71, %73, %cst_66 {dimension_numbers = #tpu.dot_dimension_numbers<[1], [0], [0], [1], [0, 0, 1, 1], [], []>} : vector<64x256xf32>, vector<256x256xf32>, vector<64x256xf32> -> vector<64x256xf32>
    %75 = arith.addf %70, %74 : vector<64x256xf32>
    %c16 = arith.constant 16 : index
    %c0_67 = arith.constant 0 : index
    %76 = vector.load %arg14[%c16, %c0_67] : memref<80x256xf32, #tpu.memory_space<vmem>>, vector<64x256xf32>
    %c4_68 = arith.constant 4 : index
    %c0_69 = arith.constant 0 : index
    %c0_70 = arith.constant 0 : index
    %77 = vector.load %arg4[%c4_68, %c0_69, %c0_70] : memref<5x256x256xf32, #tpu.memory_space<vmem>>, vector<1x256x256xf32>
    %78 = vector.shape_cast %77 : vector<1x256x256xf32> to vector<256x256xf32>
    %cst_71 = arith.constant dense<0.000000e+00> : vector<64x256xf32>
    %79 = tpu.matmul %76, %78, %cst_71 {dimension_numbers = #tpu.dot_dimension_numbers<[1], [0], [0], [1], [0, 0, 1, 1], [], []>} : vector<64x256xf32>, vector<256x256xf32>, vector<64x256xf32> -> vector<64x256xf32>
    %80 = arith.addf %75, %79 : vector<64x256xf32>
    %c0_72 = arith.constant 0 : index
    %c0_73 = arith.constant 0 : index
    %81 = vector.load %arg5[%c0_72, %c0_73] : memref<1x256xf32, #tpu.memory_space<vmem>>, vector<1x256xf32>
    %82 = vector.broadcast %81 : vector<1x256xf32> to vector<64x256xf32>
    %83 = arith.addf %80, %82 : vector<64x256xf32>
    %cst_74 = arith.constant 0.000000e+00 : f32
    %84 = vector.broadcast %cst_74 : f32 to vector<64x256xf32>
    %85 = arith.maximumf %83, %84 : vector<64x256xf32>
    %c0_75 = arith.constant 0 : index
    %c0_76 = arith.constant 0 : index
    %86 = vector.load %arg15[%c0_75, %c0_76] : memref<80x256xf32, #tpu.memory_space<vmem>>, vector<64x256xf32>
    tpu.vector_store %arg15[%c0_75, %c0_76], %85 {strides = array<i32>} : memref<80x256xf32, #tpu.memory_space<vmem>>, vector<64x256xf32>,
    %c0_77 = arith.constant 0 : index
    %c0_78 = arith.constant 0 : index
    %87 = vector.load %arg15[%c0_77, %c0_78] : memref<80x256xf32, #tpu.memory_space<vmem>>, vector<64x256xf32>
    %c4_79 = arith.constant 4 : index
    %c0_80 = arith.constant 0 : index
    %88 = vector.load %arg15[%c4_79, %c0_80] : memref<80x256xf32, #tpu.memory_space<vmem>>, vector<64x256xf32>
    %89 = arith.maximumf %87, %88 : vector<64x256xf32>
    %cst_81 = arith.constant dense<0.000000e+00> : vector<64x256xf32>
    %90 = tpu.matmul %89, %11, %cst_81 {dimension_numbers = #tpu.dot_dimension_numbers<[1], [0], [0], [1], [0, 0, 1, 1], [], []>} : vector<64x256xf32>, vector<256x256xf32>, vector<64x256xf32> -> vector<64x256xf32>
    %91 = arith.maximumf %89, %90 : vector<64x256xf32>
    %c0_82 = arith.constant 0 : index
    %c0_83 = arith.constant 0 : index
    %92 = vector.load %arg16[%c0_82, %c0_83] : memref<80x256xf32, #tpu.memory_space<vmem>>, vector<64x256xf32>
    tpu.vector_store %arg16[%c0_82, %c0_83], %91 {strides = array<i32>} : memref<80x256xf32, #tpu.memory_space<vmem>>, vector<64x256xf32>,
    %cst_84 = arith.constant 0.000000e+00 : f32
    %93 = vector.broadcast %cst_84 : f32 to vector<2x128xf32>
    %c0_85 = arith.constant 0 : index
    %c0_86 = arith.constant 0 : index
    %94 = vector.load %arg16[%c0_85, %c0_86] : memref<80x256xf32, #tpu.memory_space<vmem>>, vector<2x256xf32>
    %c0_87 = arith.constant 0 : index
    %c0_88 = arith.constant 0 : index
    %c0_89 = arith.constant 0 : index
    %95 = vector.load %arg6[%c0_87, %c0_88, %c0_89] : memref<5x256x128xf32, #tpu.memory_space<vmem>>, vector<1x256x128xf32>
    %96 = vector.shape_cast %95 : vector<1x256x128xf32> to vector<256x128xf32>
    %cst_90 = arith.constant dense<0.000000e+00> : vector<2x128xf32>
    %97 = tpu.matmul %94, %96, %cst_90 {dimension_numbers = #tpu.dot_dimension_numbers<[1], [0], [0], [1], [0, 0, 1, 1], [], []>} : vector<2x256xf32>, vector<256x128xf32>, vector<2x128xf32> -> vector<2x128xf32>
    %98 = arith.addf %93, %97 : vector<2x128xf32>
    %c8_91 = arith.constant 8 : index
    %c0_92 = arith.constant 0 : index
    %99 = vector.load %arg16[%c8_91, %c0_92] : memref<80x256xf32, #tpu.memory_space<vmem>>, vector<2x256xf32>
    %c1_93 = arith.constant 1 : index
    %c0_94 = arith.constant 0 : index
    %c0_95 = arith.constant 0 : index
    %100 = vector.load %arg6[%c1_93, %c0_94, %c0_95] : memref<5x256x128xf32, #tpu.memory_space<vmem>>, vector<1x256x128xf32>
    %101 = vector.shape_cast %100 : vector<1x256x128xf32> to vector<256x128xf32>
    %cst_96 = arith.constant dense<0.000000e+00> : vector<2x128xf32>
    %102 = tpu.matmul %99, %101, %cst_96 {dimension_numbers = #tpu.dot_dimension_numbers<[1], [0], [0], [1], [0, 0, 1, 1], [], []>} : vector<2x256xf32>, vector<256x128xf32>, vector<2x128xf32> -> vector<2x128xf32>
    %103 = arith.addf %98, %102 : vector<2x128xf32>
    %c16_97 = arith.constant 16 : index
    %c0_98 = arith.constant 0 : index
    %104 = vector.load %arg16[%c16_97, %c0_98] : memref<80x256xf32, #tpu.memory_space<vmem>>, vector<2x256xf32>
    %c2_99 = arith.constant 2 : index
    %c0_100 = arith.constant 0 : index
    %c0_101 = arith.constant 0 : index
    %105 = vector.load %arg6[%c2_99, %c0_100, %c0_101] : memref<5x256x128xf32, #tpu.memory_space<vmem>>, vector<1x256x128xf32>
    %106 = vector.shape_cast %105 : vector<1x256x128xf32> to vector<256x128xf32>
    %cst_102 = arith.constant dense<0.000000e+00> : vector<2x128xf32>
    %107 = tpu.matmul %104, %106, %cst_102 {dimension_numbers = #tpu.dot_dimension_numbers<[1], [0], [0], [1], [0, 0, 1, 1], [], []>} : vector<2x256xf32>, vector<256x128xf32>, vector<2x128xf32> -> vector<2x128xf32>
    %108 = arith.addf %103, %107 : vector<2x128xf32>
    %c24 = arith.constant 24 : index
    %c0_103 = arith.constant 0 : index
    %109 = vector.load %arg16[%c24, %c0_103] : memref<80x256xf32, #tpu.memory_space<vmem>>, vector<2x256xf32>
    %c3_104 = arith.constant 3 : index
    %c0_105 = arith.constant 0 : index
    %c0_106 = arith.constant 0 : index
    %110 = vector.load %arg6[%c3_104, %c0_105, %c0_106] : memref<5x256x128xf32, #tpu.memory_space<vmem>>, vector<1x256x128xf32>
    %111 = vector.shape_cast %110 : vector<1x256x128xf32> to vector<256x128xf32>
    %cst_107 = arith.constant dense<0.000000e+00> : vector<2x128xf32>
    %112 = tpu.matmul %109, %111, %cst_107 {dimension_numbers = #tpu.dot_dimension_numbers<[1], [0], [0], [1], [0, 0, 1, 1], [], []>} : vector<2x256xf32>, vector<256x128xf32>, vector<2x128xf32> -> vector<2x128xf32>
    %113 = arith.addf %108, %112 : vector<2x128xf32>
    %c32 = arith.constant 32 : index
    %c0_108 = arith.constant 0 : index
    %114 = vector.load %arg16[%c32, %c0_108] : memref<80x256xf32, #tpu.memory_space<vmem>>, vector<2x256xf32>
    %c4_109 = arith.constant 4 : index
    %c0_110 = arith.constant 0 : index
    %c0_111 = arith.constant 0 : index
    %115 = vector.load %arg6[%c4_109, %c0_110, %c0_111] : memref<5x256x128xf32, #tpu.memory_space<vmem>>, vector<1x256x128xf32>
    %116 = vector.shape_cast %115 : vector<1x256x128xf32> to vector<256x128xf32>
    %cst_112 = arith.constant dense<0.000000e+00> : vector<2x128xf32>
    %117 = tpu.matmul %114, %116, %cst_112 {dimension_numbers = #tpu.dot_dimension_numbers<[1], [0], [0], [1], [0, 0, 1, 1], [], []>} : vector<2x256xf32>, vector<256x128xf32>, vector<2x128xf32> -> vector<2x128xf32>
    %118 = arith.addf %113, %117 : vector<2x128xf32>
    %c0_113 = arith.constant 0 : index
    %c0_114 = arith.constant 0 : index
    %119 = vector.load %arg7[%c0_113, %c0_114] : memref<1x128xf32, #tpu.memory_space<vmem>>, vector<1x128xf32>
    %120 = vector.broadcast %119 : vector<1x128xf32> to vector<2x128xf32>
    %121 = arith.addf %118, %120 : vector<2x128xf32>
    %cst_115 = arith.constant 0.000000e+00 : f32
    %122 = vector.broadcast %cst_115 : f32 to vector<2x128xf32>
    %123 = arith.maximumf %121, %122 : vector<2x128xf32>
    %c0_116 = arith.constant 0 : index
    %c0_117 = arith.constant 0 : index
    %124 = vector.load %arg8[%c0_116, %c0_117] : memref<128x128xf32, #tpu.memory_space<vmem>>, vector<128x128xf32>
    %cst_118 = arith.constant dense<0.000000e+00> : vector<2x128xf32>
    %125 = tpu.matmul %123, %124, %cst_118 {dimension_numbers = #tpu.dot_dimension_numbers<[1], [0], [0], [1], [0, 0, 1, 1], [], []>} : vector<2x128xf32>, vector<128x128xf32>, vector<2x128xf32> -> vector<2x128xf32>
    %c0_119 = arith.constant 0 : index
    %c0_120 = arith.constant 0 : index
    %126 = vector.load %arg9[%c0_119, %c0_120] : memref<1x128xf32, #tpu.memory_space<vmem>>, vector<1x128xf32>
    %127 = vector.broadcast %126 : vector<1x128xf32> to vector<2x128xf32>
    %128 = arith.addf %125, %127 : vector<2x128xf32>
    %cst_121 = arith.constant 0.000000e+00 : f32
    %129 = vector.broadcast %cst_121 : f32 to vector<2x128xf32>
    %130 = arith.maximumf %128, %129 : vector<2x128xf32>
    %c0_122 = arith.constant 0 : index
    %c0_123 = arith.constant 0 : index
    %131 = vector.load %arg10[%c0_122, %c0_123] : memref<128x128xf32, #tpu.memory_space<vmem>>, vector<128x128xf32>
    %cst_124 = arith.constant dense<0.000000e+00> : vector<2x128xf32>
    %132 = tpu.matmul %130, %131, %cst_124 {dimension_numbers = #tpu.dot_dimension_numbers<[1], [0], [0], [1], [0, 0, 1, 1], [], []>} : vector<2x128xf32>, vector<128x128xf32>, vector<2x128xf32> -> vector<2x128xf32>
    %c0_125 = arith.constant 0 : index
    %c0_126 = arith.constant 0 : index
    %133 = vector.load %arg11[%c0_125, %c0_126] : memref<1x128xf32, #tpu.memory_space<vmem>>, vector<1x128xf32>
    %134 = vector.broadcast %133 : vector<1x128xf32> to vector<2x128xf32>
    %135 = arith.addf %132, %134 : vector<2x128xf32>
    %c0_127 = arith.constant 0 : index
    %c0_128 = arith.constant 0 : index
    %136 = vector.load %arg12[%c0_127, %c0_128] : memref<2x128xf32, #tpu.memory_space<vmem>>, vector<2x128xf32>
    tpu.vector_store %arg12[%c0_127, %c0_128], %135 {strides = array<i32>} : memref<2x128xf32, #tpu.memory_space<vmem>>, vector<2x128xf32>,
    return
  }
  func.func @transform_0(%arg0: i32) -> (i32, i32) {
    %c0_i32 = arith.constant 0 : i32
    %c0_i32_0 = arith.constant 0 : i32
    %c0_i32_1 = arith.constant 0 : i32
    return %c0_i32, %c0_i32_0 : i32, i32
  }
  func.func @transform_1(%arg0: i32) -> (i32, i32, i32) {
    %c0_i32 = arith.constant 0 : i32
    %c0_i32_0 = arith.constant 0 : i32
    %c0_i32_1 = arith.constant 0 : i32
    %c0_i32_2 = arith.constant 0 : i32
    return %c0_i32, %c0_i32_0, %c0_i32_1 : i32, i32, i32
  }
  func.func @transform_2(%arg0: i32) -> (i32, i32) {
    %c0_i32 = arith.constant 0 : i32
    %c0_i32_0 = arith.constant 0 : i32
    %c0_i32_1 = arith.constant 0 : i32
    return %c0_i32, %c0_i32_0 : i32, i32
  }
  func.func @transform_3(%arg0: i32) -> (i32, i32, i32) {
    %c0_i32 = arith.constant 0 : i32
    %c0_i32_0 = arith.constant 0 : i32
    %c0_i32_1 = arith.constant 0 : i32
    %c0_i32_2 = arith.constant 0 : i32
    return %c0_i32, %c0_i32_0, %c0_i32_1 : i32, i32, i32
  }
  func.func @transform_4(%arg0: i32) -> (i32, i32) {
    %c0_i32 = arith.constant 0 : i32
    %c0_i32_0 = arith.constant 0 : i32
    %c0_i32_1 = arith.constant 0 : i32
    return %c0_i32, %c0_i32_0 : i32, i32
  }
  func.func @transform_5(%arg0: i32) -> (i32, i32, i32) {
    %c0_i32 = arith.constant 0 : i32
    %c0_i32_0 = arith.constant 0 : i32
    %c0_i32_1 = arith.constant 0 : i32
    %c0_i32_2 = arith.constant 0 : i32
    return %c0_i32, %c0_i32_0, %c0_i32_1 : i32, i32, i32
  }
  func.func @transform_6(%arg0: i32) -> (i32, i32) {
    %c0_i32 = arith.constant 0 : i32
    %c0_i32_0 = arith.constant 0 : i32
    %c0_i32_1 = arith.constant 0 : i32
    return %c0_i32, %c0_i32_0 : i32, i32
  }
  func.func @transform_7(%arg0: i32) -> (i32, i32) {
    %c0_i32 = arith.constant 0 : i32
    %c0_i32_0 = arith.constant 0 : i32
    %c0_i32_1 = arith.constant 0 : i32
    return %c0_i32, %c0_i32_0 : i32, i32
  }
  func.func @transform_8(%arg0: i32) -> (i32, i32) {
    %c0_i32 = arith.constant 0 : i32
    %c0_i32_0 = arith.constant 0 : i32
    %c0_i32_1 = arith.constant 0 : i32
    return %c0_i32, %c0_i32_0 : i32, i32
  }
  func.func @transform_9(%arg0: i32) -> (i32, i32) {
    %c0_i32 = arith.constant 0 : i32
    %c0_i32_0 = arith.constant 0 : i32
    %c0_i32_1 = arith.constant 0 : i32
    return %c0_i32, %c0_i32_0 : i32, i32
  }
  func.func @transform_10(%arg0: i32) -> (i32, i32) {
    %c0_i32 = arith.constant 0 : i32
    %c0_i32_0 = arith.constant 0 : i32
    %c0_i32_1 = arith.constant 0 : i32
    return %c0_i32, %c0_i32_0 : i32, i32
  }
  func.func @transform_11(%arg0: i32) -> (i32, i32) {
    %c0_i32 = arith.constant 0 : i32
    %c0_i32_0 = arith.constant 0 : i32
    %c0_i32_1 = arith.constant 0 : i32
    return %c0_i32, %c0_i32_0 : i32, i32
  }
}

</mosaic_0001>

<llo_original>
// kernel: lenet_forward.1
$region0: #{lenet_forward.1}
  #allocation0 [shape = 'u32[]', space=smem, size = 0x4, offset = 0x4, fixed_abs, tag = 'smem constant byte address 0x4 - core index']
  #allocation1 [shape = 'u32[144,128]{1,0:T(1,128)}', space=vmem, size = 0x12000, scoped, tag = 'internal scratch']
  #allocation2 [shape = 'f32[80,256]{1,0:T(8,128)}', space=vmem, size = 0x14000, scoped, tag = 'scratch operand']
  #allocation3 [shape = 'f32[80,256]{1,0:T(8,128)}', space=vmem, size = 0x14000, scoped, tag = 'scratch operand']
  #allocation4 [shape = 'f32[80,256]{1,0:T(8,128)}', space=vmem, size = 0x14000, scoped, tag = 'scratch operand']
  #allocation5 [shape = 'f32[80,256]{1,0:T(8,128)}', space=vmem, size = 0x14000, scoped, tag = 'scratch operand']
  %s0 = inlined_call_operand.vmem [shape: f32[80,256], index: 0, kind: input, shape index: {}]
  %s1 = inlined_call_operand.vmem [shape: f32[5,256,256], index: 1, kind: input, shape index: {}]
  %s2 = inlined_call_operand.vmem [shape: f32[1,256], index: 2, kind: input, shape index: {}]
  %s3 = inlined_call_operand.vmem [shape: f32[5,256,256], index: 3, kind: input, shape index: {}]
  %s4 = inlined_call_operand.vmem [shape: f32[1,256], index: 4, kind: input, shape index: {}]
  %s5 = inlined_call_operand.vmem [shape: f32[5,256,128], index: 5, kind: input, shape index: {}]
  %s6 = inlined_call_operand.vmem [shape: f32[1,128], index: 6, kind: input, shape index: {}]
  %s7 = inlined_call_operand.vmem [shape: f32[128,128], index: 7, kind: input, shape index: {}]
  %s8 = inlined_call_operand.vmem [shape: f32[1,128], index: 8, kind: input, shape index: {}]
  %s9 = inlined_call_operand.vmem [shape: f32[128,128], index: 9, kind: input, shape index: {}]
  %s10 = inlined_call_operand.vmem [shape: f32[1,128], index: 10, kind: input, shape index: {}]
  %s11 = inlined_call_operand.hbm [shape: f32[2,128], index: 11, kind: output, shape index: {}]
  %s12 = sld [smem:[#allocation0]]
  $region54: #{lenet_forward.1} parent=0
    _
  %s14 = ssub.s32 1, %s12
  %s15 = scalar_select 0, %s14, %s12
  $region1: #{lenet_forward.1} parent=0
    #allocation6 [shape = 'u8[1024]{0}', space=vmem, size = 0x400, scoped, tag = 'output window, operand 0, single buffered']
    #allocation7 [shape = 's32[1]{0}', space=sflag, size = 0x4, scoped, tag = 'scoped memory for lenet_forward.1']
    %16 = vsyncpa [#allocation7], 0
    // Predicated region
    $region2: #{lenet_forward.1} parent=1 // pred_check
      _
    $region3: #{lenet_forward.1} parent=1 // pred_check_branch
      %18 = sbr.rel (0) target = $region5
    $region4: #{lenet_forward.1} parent=1 // pred_region
      _
    $region5: #{lenet_forward.1} parent=1 // pred_fallthru
      _
    // Predicated region
    $region6: #{lenet_forward.1} parent=1 // pred_check
      _
    $region7: #{lenet_forward.1} parent=1 // pred_check_branch
      %20 = sbr.rel (0) target = $region9
    $region8: #{lenet_forward.1} parent=1 // pred_region
      _
    $region9: #{lenet_forward.1} parent=1 // pred_fallthru
      _
    // Predicated region
    $region10: #{lenet_forward.1} parent=1 // pred_check
      _
    $region11: #{lenet_forward.1} parent=1 // pred_check_branch
      %22 = sbr.rel (0) target = $region13
    $region12: #{lenet_forward.1} parent=1 // pred_region
      _
    $region13: #{lenet_forward.1} parent=1 // pred_fallthru
      _
    // Predicated region
    $region14: #{lenet_forward.1} parent=1 // pred_check
      _
    $region15: #{lenet_forward.1} parent=1 // pred_check_branch
      %24 = sbr.rel (0) target = $region17
    $region16: #{lenet_forward.1} parent=1 // pred_region
      _
    $region17: #{lenet_forward.1} parent=1 // pred_fallthru
      _
    // Predicated region
    $region18: #{lenet_forward.1} parent=1 // pred_check
      _
    $region19: #{lenet_forward.1} parent=1 // pred_check_branch
      %26 = sbr.rel (0) target = $region21
    $region20: #{lenet_forward.1} parent=1 // pred_region
      _
    $region21: #{lenet_forward.1} parent=1 // pred_fallthru
      _
    // Predicated region
    $region22: #{lenet_forward.1} parent=1 // pred_check
      _
    $region23: #{lenet_forward.1} parent=1 // pred_check_branch
      %28 = sbr.rel (0) target = $region25
    $region24: #{lenet_forward.1} parent=1 // pred_region
      _
    $region25: #{lenet_forward.1} parent=1 // pred_fallthru
      _
    // Predicated region
    $region26: #{lenet_forward.1} parent=1 // pred_check
      _
    $region27: #{lenet_forward.1} parent=1 // pred_check_branch
      %30 = sbr.rel (0) target = $region29
    $region28: #{lenet_forward.1} parent=1 // pred_region
      _
    $region29: #{lenet_forward.1} parent=1 // pred_fallthru
      _
    // Predicated region
    $region30: #{lenet_forward.1} parent=1 // pred_check
      _
    $region31: #{lenet_forward.1} parent=1 // pred_check_branch
      %32 = sbr.rel (0) target = $region33
    $region32: #{lenet_forward.1} parent=1 // pred_region
      _
    $region33: #{lenet_forward.1} parent=1 // pred_fallthru
      _
    // Predicated region
    $region34: #{lenet_forward.1} parent=1 // pred_check
      _
    $region35: #{lenet_forward.1} parent=1 // pred_check_branch
      %34 = sbr.rel (0) target = $region37
    $region36: #{lenet_forward.1} parent=1 // pred_region
      _
    $region37: #{lenet_forward.1} parent=1 // pred_fallthru
      _
    // Predicated region
    $region38: #{lenet_forward.1} parent=1 // pred_check
      _
    $region39: #{lenet_forward.1} parent=1 // pred_check_branch
      %36 = sbr.rel (0) target = $region41
    $region40: #{lenet_forward.1} parent=1 // pred_region
      _
    $region41: #{lenet_forward.1} parent=1 // pred_fallthru
      _
    // Predicated region
    $region42: #{lenet_forward.1} parent=1 // pred_check
      _
    $region43: #{lenet_forward.1} parent=1 // pred_check_branch
      %38 = sbr.rel (0) target = $region45
    $region44: #{lenet_forward.1} parent=1 // pred_region
      _
    $region45: #{lenet_forward.1} parent=1 // pred_fallthru
      _
    %v39 = vlaneseq
    %v40 = vshrl.u32 %v39, 7
    %v41 = vadd.s32 %v40, 8
    %v42 = vadd.s32 %v40, 16
    %v43 = vadd.s32 %v40, 24
    %v44 = vadd.s32 %v40, 32
    %v45 = vadd.s32 %v40, 40
    %v46 = vadd.s32 %v40, 48
    %v47 = vadd.s32 %v40, 56
    %v48 = vadd.s32 %v40, 64
    %v49 = vadd.s32 %v40, 72
    %v50 = vadd.s32 %v40, 80
    %v51 = vadd.s32 %v40, 88
    %v52 = vadd.s32 %v40, 96
    %v53 = vadd.s32 %v40, 104
    %v54 = vadd.s32 %v40, 112
    %v55 = vadd.s32 %v40, 120
    %v56 = vadd.s32 %v40, 128
    %v57 = vadd.s32 %v40, 136
    %v58 = vadd.s32 %v40, 144
    %v59 = vadd.s32 %v40, 152
    %v60 = vadd.s32 %v40, 160
    %v61 = vadd.s32 %v40, 168
    %v62 = vadd.s32 %v40, 176
    %v63 = vadd.s32 %v40, 184
    %v64 = vadd.s32 %v40, 192
    %v65 = vadd.s32 %v40, 200
    %v66 = vadd.s32 %v40, 208
    %v67 = vadd.s32 %v40, 216
    %v68 = vadd.s32 %v40, 224
    %v69 = vadd.s32 %v40, 232
    %v70 = vadd.s32 %v40, 240
    %v71 = vadd.s32 %v40, 248
    %v72 = vlaneseq
    %v73 = vand.u32 %v72, 127
    %v74 = vadd.s32 %v73, 128
    %v75 = vadd.s32 %v73, 8
    %v76 = vadd.s32 %v74, 8
    %vm77 = vcmp.eq.s32.totalorder %v40, %v75
    %vm78 = vcmp.eq.s32.totalorder %v40, %v76
    %vm79 = vcmp.eq.s32.totalorder %v41, %v75
    %vm80 = vcmp.eq.s32.totalorder %v41, %v76
    %vm81 = vcmp.eq.s32.totalorder %v42, %v75
    %vm82 = vcmp.eq.s32.totalorder %v42, %v76
    %vm83 = vcmp.eq.s32.totalorder %v43, %v75
    %vm84 = vcmp.eq.s32.totalorder %v43, %v76
    %vm85 = vcmp.eq.s32.totalorder %v44, %v75
    %vm86 = vcmp.eq.s32.totalorder %v44, %v76
    %vm87 = vcmp.eq.s32.totalorder %v45, %v75
    %vm88 = vcmp.eq.s32.totalorder %v45, %v76
    %vm89 = vcmp.eq.s32.totalorder %v46, %v75
    %vm90 = vcmp.eq.s32.totalorder %v46, %v76
    %vm91 = vcmp.eq.s32.totalorder %v47, %v75
    %vm92 = vcmp.eq.s32.totalorder %v47, %v76
    %vm93 = vcmp.eq.s32.totalorder %v48, %v75
    %vm94 = vcmp.eq.s32.totalorder %v48, %v76
    %vm95 = vcmp.eq.s32.totalorder %v49, %v75
    %vm96 = vcmp.eq.s32.totalorder %v49, %v76
    %vm97 = vcmp.eq.s32.totalorder %v50, %v75
    %vm98 = vcmp.eq.s32.totalorder %v50, %v76
    %vm99 = vcmp.eq.s32.totalorder %v51, %v75
    %vm100 = vcmp.eq.s32.totalorder %v51, %v76
    %vm101 = vcmp.eq.s32.totalorder %v52, %v75
    %vm102 = vcmp.eq.s32.totalorder %v52, %v76
    %vm103 = vcmp.eq.s32.totalorder %v53, %v75
    %vm104 = vcmp.eq.s32.totalorder %v53, %v76
    %vm105 = vcmp.eq.s32.totalorder %v54, %v75
    %vm106 = vcmp.eq.s32.totalorder %v54, %v76
    %vm107 = vcmp.eq.s32.totalorder %v55, %v75
    %vm108 = vcmp.eq.s32.totalorder %v55, %v76
    %vm109 = vcmp.eq.s32.totalorder %v56, %v75
    %vm110 = vcmp.eq.s32.totalorder %v56, %v76
    %vm111 = vcmp.eq.s32.totalorder %v57, %v75
    %vm112 = vcmp.eq.s32.totalorder %v57, %v76
    %vm113 = vcmp.eq.s32.totalorder %v58, %v75
    %vm114 = vcmp.eq.s32.totalorder %v58, %v76
    %vm115 = vcmp.eq.s32.totalorder %v59, %v75
    %vm116 = vcmp.eq.s32.totalorder %v59, %v76
    %vm117 = vcmp.eq.s32.totalorder %v60, %v75
    %vm118 = vcmp.eq.s32.totalorder %v60, %v76
    %vm119 = vcmp.eq.s32.totalorder %v61, %v75
    %vm120 = vcmp.eq.s32.totalorder %v61, %v76
    %vm121 = vcmp.eq.s32.totalorder %v62, %v75
    %vm122 = vcmp.eq.s32.totalorder %v62, %v76
    %vm123 = vcmp.eq.s32.totalorder %v63, %v75
    %vm124 = vcmp.eq.s32.totalorder %v63, %v76
    %vm125 = vcmp.eq.s32.totalorder %v64, %v75
    %vm126 = vcmp.eq.s32.totalorder %v64, %v76
    %vm127 = vcmp.eq.s32.totalorder %v65, %v75
    %vm128 = vcmp.eq.s32.totalorder %v65, %v76
    %vm129 = vcmp.eq.s32.totalorder %v66, %v75
    %vm130 = vcmp.eq.s32.totalorder %v66, %v76
    %vm131 = vcmp.eq.s32.totalorder %v67, %v75
    %vm132 = vcmp.eq.s32.totalorder %v67, %v76
    %vm133 = vcmp.eq.s32.totalorder %v68, %v75
    %vm134 = vcmp.eq.s32.totalorder %v68, %v76
    %vm135 = vcmp.eq.s32.totalorder %v69, %v75
    %vm136 = vcmp.eq.s32.totalorder %v69, %v76
    %vm137 = vcmp.eq.s32.totalorder %v70, %v75
    %vm138 = vcmp.eq.s32.totalorder %v70, %v76
    %vm139 = vcmp.eq.s32.totalorder %v71, %v75
    %vm140 = vcmp.eq.s32.totalorder %v71, %v76
    %v141 = vsel %vm77, 1, 0
    %v142 = vsel %vm78, 1, 0
    %v143 = vsel %vm79, 1, 0
    %v144 = vsel %vm80, 1, 0
    %v145 = vsel %vm81, 1, 0
    %v146 = vsel %vm82, 1, 0
    %v147 = vsel %vm83, 1, 0
    %v148 = vsel %vm84, 1, 0
    %v149 = vsel %vm85, 1, 0
    %v150 = vsel %vm86, 1, 0
    %v151 = vsel %vm87, 1, 0
    %v152 = vsel %vm88, 1, 0
    %v153 = vsel %vm89, 1, 0
    %v154 = vsel %vm90, 1, 0
    %v155 = vsel %vm91, 1, 0
    %v156 = vsel %vm92, 1, 0
    %v157 = vsel %vm93, 1, 0
    %v158 = vsel %vm94, 1, 0
    %v159 = vsel %vm95, 1, 0
    %v160 = vsel %vm96, 1, 0
    %v161 = vsel %vm97, 1, 0
    %v162 = vsel %vm98, 1, 0
    %v163 = vsel %vm99, 1, 0
    %v164 = vsel %vm100, 1, 0
    %v165 = vsel %vm101, 1, 0
    %v166 = vsel %vm102, 1, 0
    %v167 = vsel %vm103, 1, 0
    %v168 = vsel %vm104, 1, 0
    %v169 = vsel %vm105, 1, 0
    %v170 = vsel %vm106, 1, 0
    %v171 = vsel %vm107, 1, 0
    %v172 = vsel %vm108, 1, 0
    %v173 = vsel %vm109, 1, 0
    %v174 = vsel %vm110, 1, 0
    %v175 = vsel %vm111, 1, 0
    %v176 = vsel %vm112, 1, 0
    %v177 = vsel %vm113, 1, 0
    %v178 = vsel %vm114, 1, 0
    %v179 = vsel %vm115, 1, 0
    %v180 = vsel %vm116, 1, 0
    %v181 = vsel %vm117, 1, 0
    %v182 = vsel %vm118, 1, 0
    %v183 = vsel %vm119, 1, 0
    %v184 = vsel %vm120, 1, 0
    %v185 = vsel %vm121, 1, 0
    %v186 = vsel %vm122, 1, 0
    %v187 = vsel %vm123, 1, 0
    %v188 = vsel %vm124, 1, 0
    %v189 = vsel %vm125, 1, 0
    %v190 = vsel %vm126, 1, 0
    %v191 = vsel %vm127, 1, 0
    %v192 = vsel %vm128, 1, 0
    %v193 = vsel %vm129, 1, 0
    %v194 = vsel %vm130, 1, 0
    %v195 = vsel %vm131, 1, 0
    %v196 = vsel %vm132, 1, 0
    %v197 = vsel %vm133, 1, 0
    %v198 = vsel %vm134, 1, 0
    %v199 = vsel %vm135, 1, 0
    %v200 = vsel %vm136, 1, 0
    %v201 = vsel %vm137, 1, 0
    %v202 = vsel %vm138, 1, 0
    %v203 = vsel %vm139, 1, 0
    %v204 = vsel %vm140, 1, 0
    %v205 = vcvt.s32.f32 %v141
    %v206 = vcvt.s32.f32 %v142
    %v207 = vcvt.s32.f32 %v143
    %v208 = vcvt.s32.f32 %v144
    %v209 = vcvt.s32.f32 %v145
    %v210 = vcvt.s32.f32 %v146
    %v211 = vcvt.s32.f32 %v147
    %v212 = vcvt.s32.f32 %v148
    %v213 = vcvt.s32.f32 %v149
    %v214 = vcvt.s32.f32 %v150
    %v215 = vcvt.s32.f32 %v151
    %v216 = vcvt.s32.f32 %v152
    %v217 = vcvt.s32.f32 %v153
    %v218 = vcvt.s32.f32 %v154
    %v219 = vcvt.s32.f32 %v155
    %v220 = vcvt.s32.f32 %v156
    %v221 = vcvt.s32.f32 %v157
    %v222 = vcvt.s32.f32 %v158
    %v223 = vcvt.s32.f32 %v159
    %v224 = vcvt.s32.f32 %v160
    %v225 = vcvt.s32.f32 %v161
    %v226 = vcvt.s32.f32 %v162
    %v227 = vcvt.s32.f32 %v163
    %v228 = vcvt.s32.f32 %v164
    %v229 = vcvt.s32.f32 %v165
    %v230 = vcvt.s32.f32 %v166
    %v231 = vcvt.s32.f32 %v167
    %v232 = vcvt.s32.f32 %v168
    %v233 = vcvt.s32.f32 %v169
    %v234 = vcvt.s32.f32 %v170
    %v235 = vcvt.s32.f32 %v171
    %v236 = vcvt.s32.f32 %v172
    %v237 = vcvt.s32.f32 %v173
    %v238 = vcvt.s32.f32 %v174
    %v239 = vcvt.s32.f32 %v175
    %v240 = vcvt.s32.f32 %v176
    %v241 = vcvt.s32.f32 %v177
    %v242 = vcvt.s32.f32 %v178
    %v243 = vcvt.s32.f32 %v179
    %v244 = vcvt.s32.f32 %v180
    %v245 = vcvt.s32.f32 %v181
    %v246 = vcvt.s32.f32 %v182
    %v247 = vcvt.s32.f32 %v183
    %v248 = vcvt.s32.f32 %v184
    %v249 = vcvt.s32.f32 %v185
    %v250 = vcvt.s32.f32 %v186
    %v251 = vcvt.s32.f32 %v187
    %v252 = vcvt.s32.f32 %v188
    %v253 = vcvt.s32.f32 %v189
    %v254 = vcvt.s32.f32 %v190
    %v255 = vcvt.s32.f32 %v191
    %v256 = vcvt.s32.f32 %v192
    %v257 = vcvt.s32.f32 %v193
    %v258 = vcvt.s32.f32 %v194
    %v259 = vcvt.s32.f32 %v195
    %v260 = vcvt.s32.f32 %v196
    %v261 = vcvt.s32.f32 %v197
    %v262 = vcvt.s32.f32 %v198
    %v263 = vcvt.s32.f32 %v199
    %v264 = vcvt.s32.f32 %v200
    %v265 = vcvt.s32.f32 %v201
    %v266 = vcvt.s32.f32 %v202
    %v267 = vcvt.s32.f32 %v203
    %v268 = vcvt.s32.f32 %v204
    %v269 = vadd.s32 %v73, 16
    %v270 = vadd.s32 %v74, 16
    %vm271 = vcmp.eq.s32.totalorder %v40, %v269
    %vm272 = vcmp.eq.s32.totalorder %v40, %v270
    %vm273 = vcmp.eq.s32.totalorder %v41, %v269
    %vm274 = vcmp.eq.s32.totalorder %v41, %v270
    %vm275 = vcmp.eq.s32.totalorder %v42, %v269
    %vm276 = vcmp.eq.s32.totalorder %v42, %v270
    %vm277 = vcmp.eq.s32.totalorder %v43, %v269
    %vm278 = vcmp.eq.s32.totalorder %v43, %v270
    %vm279 = vcmp.eq.s32.totalorder %v44, %v269
    %vm280 = vcmp.eq.s32.totalorder %v44, %v270
    %vm281 = vcmp.eq.s32.totalorder %v45, %v269
    %vm282 = vcmp.eq.s32.totalorder %v45, %v270
    %vm283 = vcmp.eq.s32.totalorder %v46, %v269
    %vm284 = vcmp.eq.s32.totalorder %v46, %v270
    %vm285 = vcmp.eq.s32.totalorder %v47, %v269
    %vm286 = vcmp.eq.s32.totalorder %v47, %v270
    %vm287 = vcmp.eq.s32.totalorder %v48, %v269
    %vm288 = vcmp.eq.s32.totalorder %v48, %v270
    %vm289 = vcmp.eq.s32.totalorder %v49, %v269
    %vm290 = vcmp.eq.s32.totalorder %v49, %v270
    %vm291 = vcmp.eq.s32.totalorder %v50, %v269
    %vm292 = vcmp.eq.s32.totalorder %v50, %v270
    %vm293 = vcmp.eq.s32.totalorder %v51, %v269
    %vm294 = vcmp.eq.s32.totalorder %v51, %v270
    %vm295 = vcmp.eq.s32.totalorder %v52, %v269
    %vm296 = vcmp.eq.s32.totalorder %v52, %v270
    %vm297 = vcmp.eq.s32.totalorder %v53, %v269
    %vm298 = vcmp.eq.s32.totalorder %v53, %v270
    %vm299 = vcmp.eq.s32.totalorder %v54, %v269
    %vm300 = vcmp.eq.s32.totalorder %v54, %v270
    %vm301 = vcmp.eq.s32.totalorder %v55, %v269
    %vm302 = vcmp.eq.s32.totalorder %v55, %v270
    %vm303 = vcmp.eq.s32.totalorder %v56, %v269
    %vm304 = vcmp.eq.s32.totalorder %v56, %v270
    %vm305 = vcmp.eq.s32.totalorder %v57, %v269
    %vm306 = vcmp.eq.s32.totalorder %v57, %v270
    %vm307 = vcmp.eq.s32.totalorder %v58, %v269
    %vm308 = vcmp.eq.s32.totalorder %v58, %v270
    %vm309 = vcmp.eq.s32.totalorder %v59, %v269
    %vm310 = vcmp.eq.s32.totalorder %v59, %v270
    %vm311 = vcmp.eq.s32.totalorder %v60, %v269
    %vm312 = vcmp.eq.s32.totalorder %v60, %v270
    %vm313 = vcmp.eq.s32.totalorder %v61, %v269
    %vm314 = vcmp.eq.s32.totalorder %v61, %v270
    %vm315 = vcmp.eq.s32.totalorder %v62, %v269
    %vm316 = vcmp.eq.s32.totalorder %v62, %v270
    %vm317 = vcmp.eq.s32.totalorder %v63, %v269
    %vm318 = vcmp.eq.s32.totalorder %v63, %v270
    %vm319 = vcmp.eq.s32.totalorder %v64, %v269
    %vm320 = vcmp.eq.s32.totalorder %v64, %v270
    %vm321 = vcmp.eq.s32.totalorder %v65, %v269
    %vm322 = vcmp.eq.s32.totalorder %v65, %v270
    %vm323 = vcmp.eq.s32.totalorder %v66, %v269
    %vm324 = vcmp.eq.s32.totalorder %v66, %v270
    %vm325 = vcmp.eq.s32.totalorder %v67, %v269
    %vm326 = vcmp.eq.s32.totalorder %v67, %v270
    %vm327 = vcmp.eq.s32.totalorder %v68, %v269
    %vm328 = vcmp.eq.s32.totalorder %v68, %v270
    %vm329 = vcmp.eq.s32.totalorder %v69, %v269
    %vm330 = vcmp.eq.s32.totalorder %v69, %v270
    %vm331 = vcmp.eq.s32.totalorder %v70, %v269
    %vm332 = vcmp.eq.s32.totalorder %v70, %v270
    %vm333 = vcmp.eq.s32.totalorder %v71, %v269
    %vm334 = vcmp.eq.s32.totalorder %v71, %v270
    %v335 = vsel %vm271, 1, 0
    %v336 = vsel %vm272, 1, 0
    %v337 = vsel %vm273, 1, 0
    %v338 = vsel %vm274, 1, 0
    %v339 = vsel %vm275, 1, 0
    %v340 = vsel %vm276, 1, 0
    %v341 = vsel %vm277, 1, 0
    %v342 = vsel %vm278, 1, 0
    %v343 = vsel %vm279, 1, 0
    %v344 = vsel %vm280, 1, 0
    %v345 = vsel %vm281, 1, 0
    %v346 = vsel %vm282, 1, 0
    %v347 = vsel %vm283, 1, 0
    %v348 = vsel %vm284, 1, 0
    %v349 = vsel %vm285, 1, 0
    %v350 = vsel %vm286, 1, 0
    %v351 = vsel %vm287, 1, 0
    %v352 = vsel %vm288, 1, 0
    %v353 = vsel %vm289, 1, 0
    %v354 = vsel %vm290, 1, 0
    %v355 = vsel %vm291, 1, 0
    %v356 = vsel %vm292, 1, 0
    %v357 = vsel %vm293, 1, 0
    %v358 = vsel %vm294, 1, 0
    %v359 = vsel %vm295, 1, 0
    %v360 = vsel %vm296, 1, 0
    %v361 = vsel %vm297, 1, 0
    %v362 = vsel %vm298, 1, 0
    %v363 = vsel %vm299, 1, 0
    %v364 = vsel %vm300, 1, 0
    %v365 = vsel %vm301, 1, 0
    %v366 = vsel %vm302, 1, 0
    %v367 = vsel %vm303, 1, 0
    %v368 = vsel %vm304, 1, 0
    %v369 = vsel %vm305, 1, 0
    %v370 = vsel %vm306, 1, 0
    %v371 = vsel %vm307, 1, 0
    %v372 = vsel %vm308, 1, 0
    %v373 = vsel %vm309, 1, 0
    %v374 = vsel %vm310, 1, 0
    %v375 = vsel %vm311, 1, 0
    %v376 = vsel %vm312, 1, 0
    %v377 = vsel %vm313, 1, 0
    %v378 = vsel %vm314, 1, 0
    %v379 = vsel %vm315, 1, 0
    %v380 = vsel %vm316, 1, 0
    %v381 = vsel %vm317, 1, 0
    %v382 = vsel %vm318, 1, 0
    %v383 = vsel %vm319, 1, 0
    %v384 = vsel %vm320, 1, 0
    %v385 = vsel %vm321, 1, 0
    %v386 = vsel %vm322, 1, 0
    %v387 = vsel %vm323, 1, 0
    %v388 = vsel %vm324, 1, 0
    %v389 = vsel %vm325, 1, 0
    %v390 = vsel %vm326, 1, 0
    %v391 = vsel %vm327, 1, 0
    %v392 = vsel %vm328, 1, 0
    %v393 = vsel %vm329, 1, 0
    %v394 = vsel %vm330, 1, 0
    %v395 = vsel %vm331, 1, 0
    %v396 = vsel %vm332, 1, 0
    %v397 = vsel %vm333, 1, 0
    %v398 = vsel %vm334, 1, 0
    %v399 = vcvt.s32.f32 %v335
    %v400 = vcvt.s32.f32 %v336
    %v401 = vcvt.s32.f32 %v337
    %v402 = vcvt.s32.f32 %v338
    %v403 = vcvt.s32.f32 %v339
    %v404 = vcvt.s32.f32 %v340
    %v405 = vcvt.s32.f32 %v341
    %v406 = vcvt.s32.f32 %v342
    %v407 = vcvt.s32.f32 %v343
    %v408 = vcvt.s32.f32 %v344
    %v409 = vcvt.s32.f32 %v345
    %v410 = vcvt.s32.f32 %v346
    %v411 = vcvt.s32.f32 %v347
    %v412 = vcvt.s32.f32 %v348
    %v413 = vcvt.s32.f32 %v349
    %v414 = vcvt.s32.f32 %v350
    %v415 = vcvt.s32.f32 %v351
    %v416 = vcvt.s32.f32 %v352
    %v417 = vcvt.s32.f32 %v353
    %v418 = vcvt.s32.f32 %v354
    %v419 = vcvt.s32.f32 %v355
    %v420 = vcvt.s32.f32 %v356
    %v421 = vcvt.s32.f32 %v357
    %v422 = vcvt.s32.f32 %v358
    %v423 = vcvt.s32.f32 %v359
    %v424 = vcvt.s32.f32 %v360
    %v425 = vcvt.s32.f32 %v361
    %v426 = vcvt.s32.f32 %v362
    %v427 = vcvt.s32.f32 %v363
    %v428 = vcvt.s32.f32 %v364
    %v429 = vcvt.s32.f32 %v365
    %v430 = vcvt.s32.f32 %v366
    %v431 = vcvt.s32.f32 %v367
    %v432 = vcvt.s32.f32 %v368
    %v433 = vcvt.s32.f32 %v369
    %v434 = vcvt.s32.f32 %v370
    %v435 = vcvt.s32.f32 %v371
    %v436 = vcvt.s32.f32 %v372
    %v437 = vcvt.s32.f32 %v373
    %v438 = vcvt.s32.f32 %v374
    %v439 = vcvt.s32.f32 %v375
    %v440 = vcvt.s32.f32 %v376
    %v441 = vcvt.s32.f32 %v377
    %v442 = vcvt.s32.f32 %v378
    %v443 = vcvt.s32.f32 %v379
    %v444 = vcvt.s32.f32 %v380
    %v445 = vcvt.s32.f32 %v381
    %v446 = vcvt.s32.f32 %v382
    %v447 = vcvt.s32.f32 %v383
    %v448 = vcvt.s32.f32 %v384
    %v449 = vcvt.s32.f32 %v385
    %v450 = vcvt.s32.f32 %v386
    %v451 = vcvt.s32.f32 %v387
    %v452 = vcvt.s32.f32 %v388
    %v453 = vcvt.s32.f32 %v389
    %v454 = vcvt.s32.f32 %v390
    %v455 = vcvt.s32.f32 %v391
    %v456 = vcvt.s32.f32 %v392
    %v457 = vcvt.s32.f32 %v393
    %v458 = vcvt.s32.f32 %v394
    %v459 = vcvt.s32.f32 %v395
    %v460 = vcvt.s32.f32 %v396
    %v461 = vcvt.s32.f32 %v397
    %v462 = vcvt.s32.f32 %v398
    %463 = vst [vmem:[#allocation2 + $0x80] sm:$0xff] 0.0
    %464 = vst [vmem:[#allocation2 + $0x88] sm:$0xff] 0.0
    %465 = vst [vmem:[#allocation2 + $0x90] sm:$0xff] 0.0
    %466 = vst [vmem:[#allocation2 + $0x98] sm:$0xff] 0.0
    %467 = vst [vmem:[#allocation3 + $0x80] sm:$0xff] 0.0
    %468 = vst [vmem:[#allocation3 + $0x88] sm:$0xff] 0.0
    %469 = vst [vmem:[#allocation3 + $0x90] sm:$0xff] 0.0
    %470 = vst [vmem:[#allocation3 + $0x98] sm:$0xff] 0.0
    %471 = vst [vmem:[#allocation4 + $0x80] sm:$0xff] 0.0
    %472 = vst [vmem:[#allocation4 + $0x88] sm:$0xff] 0.0
    %473 = vst [vmem:[#allocation4 + $0x90] sm:$0xff] 0.0
    %474 = vst [vmem:[#allocation4 + $0x98] sm:$0xff] 0.0
    %475 = vst [vmem:[#allocation5 + $0x80] sm:$0xff] 0.0
    %476 = vst [vmem:[#allocation5 + $0x88] sm:$0xff] 0.0
    %477 = vst [vmem:[#allocation5 + $0x90] sm:$0xff] 0.0
    %478 = vst [vmem:[#allocation5 + $0x98] sm:$0xff] 0.0
    %v479 = vld [vmem:[%s0] sm:$0xff]
    %v480 = vld [vmem:[%s0 + $0x8] sm:$0xff]
    %v481 = vld [vmem:[%s0 + $0x10] sm:$0xff]
    %v482 = vld [vmem:[%s0 + $0x18] sm:$0xff]
    %v483 = vld [vmem:[%s0 + $0x20] sm:$0xff]
    %v484 = vld [vmem:[%s0 + $0x28] sm:$0xff]
    %v485 = vld [vmem:[%s0 + $0x30] sm:$0xff]
    %v486 = vld [vmem:[%s0 + $0x38] sm:$0xff]
    %v487 = vld [vmem:[%s0 + $0x40] sm:$0xff]
    %v488 = vld [vmem:[%s0 + $0x48] sm:$0xff]
    %v489 = vld [vmem:[%s0 + $0x50] sm:$0xff]
    %v490 = vld [vmem:[%s0 + $0x58] sm:$0xff]
    %v491 = vld [vmem:[%s0 + $0x60] sm:$0xff]
    %v492 = vld [vmem:[%s0 + $0x68] sm:$0xff]
    %v493 = vld [vmem:[%s0 + $0x70] sm:$0xff]
    %v494 = vld [vmem:[%s0 + $0x78] sm:$0xff]
    %v495 = vld [vmem:[%s1] sm:$0xff]
    %v496 = vld [vmem:[%s1 + $0x8] sm:$0xff]
    %v497 = vld [vmem:[%s1 + $0x10] sm:$0xff]
    %v498 = vld [vmem:[%s1 + $0x18] sm:$0xff]
    %v499 = vld [vmem:[%s1 + $0x20] sm:$0xff]
    %v500 = vld [vmem:[%s1 + $0x28] sm:$0xff]
    %v501 = vld [vmem:[%s1 + $0x30] sm:$0xff]
    %v502 = vld [vmem:[%s1 + $0x38] sm:$0xff]
    %v503 = vld [vmem:[%s1 + $0x40] sm:$0xff]
    %v504 = vld [vmem:[%s1 + $0x48] sm:$0xff]
    %v505 = vld [vmem:[%s1 + $0x50] sm:$0xff]
    %v506 = vld [vmem:[%s1 + $0x58] sm:$0xff]
    %v507 = vld [vmem:[%s1 + $0x60] sm:$0xff]
    %v508 = vld [vmem:[%s1 + $0x68] sm:$0xff]
    %v509 = vld [vmem:[%s1 + $0x70] sm:$0xff]
    %v510 = vld [vmem:[%s1 + $0x78] sm:$0xff]
    %v511 = vld [vmem:[%s1 + $0x80] sm:$0xff]
    %v512 = vld [vmem:[%s1 + $0x88] sm:$0xff]
    %v513 = vld [vmem:[%s1 + $0x90] sm:$0xff]
    %v514 = vld [vmem:[%s1 + $0x98] sm:$0xff]
    %v515 = vld [vmem:[%s1 + $0xa0] sm:$0xff]
    %v516 = vld [vmem:[%s1 + $0xa8] sm:$0xff]
    %v517 = vld [vmem:[%s1 + $0xb0] sm:$0xff]
    %v518 = vld [vmem:[%s1 + $0xb8] sm:$0xff]
    %v519 = vld [vmem:[%s1 + $0xc0] sm:$0xff]
    %v520 = vld [vmem:[%s1 + $0xc8] sm:$0xff]
    %v521 = vld [vmem:[%s1 + $0xd0] sm:$0xff]
    %v522 = vld [vmem:[%s1 + $0xd8] sm:$0xff]
    %v523 = vld [vmem:[%s1 + $0xe0] sm:$0xff]
    %v524 = vld [vmem:[%s1 + $0xe8] sm:$0xff]
    %v525 = vld [vmem:[%s1 + $0xf0] sm:$0xff]
    %v526 = vld [vmem:[%s1 + $0xf8] sm:$0xff]
    %v527 = vld [vmem:[%s1 + $0x100] sm:$0xff]
    %v528 = vld [vmem:[%s1 + $0x108] sm:$0xff]
    %v529 = vld [vmem:[%s1 + $0x110] sm:$0xff]
    %v530 = vld [vmem:[%s1 + $0x118] sm:$0xff]
    %v531 = vld [vmem:[%s1 + $0x120] sm:$0xff]
    %v532 = vld [vmem:[%s1 + $0x128] sm:$0xff]
    %v533 = vld [vmem:[%s1 + $0x130] sm:$0xff]
    %v534 = vld [vmem:[%s1 + $0x138] sm:$0xff]
    %v535 = vld [vmem:[%s1 + $0x140] sm:$0xff]
    %v536 = vld [vmem:[%s1 + $0x148] sm:$0xff]
    %v537 = vld [vmem:[%s1 + $0x150] sm:$0xff]
    %v538 = vld [vmem:[%s1 + $0x158] sm:$0xff]
    %v539 = vld [vmem:[%s1 + $0x160] sm:$0xff]
    %v540 = vld [vmem:[%s1 + $0x168] sm:$0xff]
    %v541 = vld [vmem:[%s1 + $0x170] sm:$0xff]
    %v542 = vld [vmem:[%s1 + $0x178] sm:$0xff]
    %v543 = vld [vmem:[%s1 + $0x180] sm:$0xff]
    %v544 = vld [vmem:[%s1 + $0x188] sm:$0xff]
    %v545 = vld [vmem:[%s1 + $0x190] sm:$0xff]
    %v546 = vld [vmem:[%s1 + $0x198] sm:$0xff]
    %v547 = vld [vmem:[%s1 + $0x1a0] sm:$0xff]
    %v548 = vld [vmem:[%s1 + $0x1a8] sm:$0xff]
    %v549 = vld [vmem:[%s1 + $0x1b0] sm:$0xff]
    %v550 = vld [vmem:[%s1 + $0x1b8] sm:$0xff]
    %v551 = vld [vmem:[%s1 + $0x1c0] sm:$0xff]
    %v552 = vld [vmem:[%s1 + $0x1c8] sm:$0xff]
    %v553 = vld [vmem:[%s1 + $0x1d0] sm:$0xff]
    %v554 = vld [vmem:[%s1 + $0x1d8] sm:$0xff]
    %v555 = vld [vmem:[%s1 + $0x1e0] sm:$0xff]
    %v556 = vld [vmem:[%s1 + $0x1e8] sm:$0xff]
    %v557 = vld [vmem:[%s1 + $0x1f0] sm:$0xff]
    %v558 = vld [vmem:[%s1 + $0x1f8] sm:$0xff]
    %v559 = vld [vmem:[%s0] sm:$0xfc]
    %v560 = vld [vmem:[%s0 + $0x8] sm:$0xfc]
    %v561 = vld [vmem:[%s0 + $0x80] sm:$0x3]
    %v562 = vld [vmem:[%s0 + $0x88] sm:$0x3]
    %s563 = scalar_lea.vmem %s1, 512
    %v564 = vld [vmem:[%s563] sm:$0xff]
    %v565 = vld [vmem:[%s563 + $0x8] sm:$0xff]
    %v566 = vld [vmem:[%s563 + $0x10] sm:$0xff]
    %v567 = vld [vmem:[%s563 + $0x18] sm:$0xff]
    %v568 = vld [vmem:[%s563 + $0x20] sm:$0xff]
    %v569 = vld [vmem:[%s563 + $0x28] sm:$0xff]
    %v570 = vld [vmem:[%s563 + $0x30] sm:$0xff]
    %v571 = vld [vmem:[%s563 + $0x38] sm:$0xff]
    %v572 = vld [vmem:[%s563 + $0x40] sm:$0xff]
    %v573 = vld [vmem:[%s563 + $0x48] sm:$0xff]
    %v574 = vld [vmem:[%s563 + $0x50] sm:$0xff]
    %v575 = vld [vmem:[%s563 + $0x58] sm:$0xff]
    %v576 = vld [vmem:[%s563 + $0x60] sm:$0xff]
    %v577 = vld [vmem:[%s563 + $0x68] sm:$0xff]
    %v578 = vld [vmem:[%s563 + $0x70] sm:$0xff]
    %v579 = vld [vmem:[%s563 + $0x78] sm:$0xff]
    %v580 = vld [vmem:[%s563 + $0x80] sm:$0xff]
    %v581 = vld [vmem:[%s563 + $0x88] sm:$0xff]
    %v582 = vld [vmem:[%s563 + $0x90] sm:$0xff]
    %v583 = vld [vmem:[%s563 + $0x98] sm:$0xff]
    %v584 = vld [vmem:[%s563 + $0xa0] sm:$0xff]
    %v585 = vld [vmem:[%s563 + $0xa8] sm:$0xff]
    %v586 = vld [vmem:[%s563 + $0xb0] sm:$0xff]
    %v587 = vld [vmem:[%s563 + $0xb8] sm:$0xff]
    %v588 = vld [vmem:[%s563 + $0xc0] sm:$0xff]
    %v589 = vld [vmem:[%s563 + $0xc8] sm:$0xff]
    %v590 = vld [vmem:[%s563 + $0xd0] sm:$0xff]
    %v591 = vld [vmem:[%s563 + $0xd8] sm:$0xff]
    %v592 = vld [vmem:[%s563 + $0xe0] sm:$0xff]
    %v593 = vld [vmem:[%s563 + $0xe8] sm:$0xff]
    %v594 = vld [vmem:[%s563 + $0xf0] sm:$0xff]
    %v595 = vld [vmem:[%s563 + $0xf8] sm:$0xff]
    %v596 = vld [vmem:[%s563 + $0x100] sm:$0xff]
    %v597 = vld [vmem:[%s563 + $0x108] sm:$0xff]
    %v598 = vld [vmem:[%s563 + $0x110] sm:$0xff]
    %v599 = vld [vmem:[%s563 + $0x118] sm:$0xff]
    %v600 = vld [vmem:[%s563 + $0x120] sm:$0xff]
    %v601 = vld [vmem:[%s563 + $0x128] sm:$0xff]
    %v602 = vld [vmem:[%s563 + $0x130] sm:$0xff]
    %v603 = vld [vmem:[%s563 + $0x138] sm:$0xff]
    %v604 = vld [vmem:[%s563 + $0x140] sm:$0xff]
    %v605 = vld [vmem:[%s563 + $0x148] sm:$0xff]
    %v606 = vld [vmem:[%s563 + $0x150] sm:$0xff]
    %v607 = vld [vmem:[%s563 + $0x158] sm:$0xff]
    %v608 = vld [vmem:[%s563 + $0x160] sm:$0xff]
    %v609 = vld [vmem:[%s563 + $0x168] sm:$0xff]
    %v610 = vld [vmem:[%s563 + $0x170] sm:$0xff]
    %v611 = vld [vmem:[%s563 + $0x178] sm:$0xff]
    %v612 = vld [vmem:[%s563 + $0x180] sm:$0xff]
    %v613 = vld [vmem:[%s563 + $0x188] sm:$0xff]
    %v614 = vld [vmem:[%s563 + $0x190] sm:$0xff]
    %v615 = vld [vmem:[%s563 + $0x198] sm:$0xff]
    %v616 = vld [vmem:[%s563 + $0x1a0] sm:$0xff]
    %v617 = vld [vmem:[%s563 + $0x1a8] sm:$0xff]
    %v618 = vld [vmem:[%s563 + $0x1b0] sm:$0xff]
    %v619 = vld [vmem:[%s563 + $0x1b8] sm:$0xff]
    %v620 = vld [vmem:[%s563 + $0x1c0] sm:$0xff]
    %v621 = vld [vmem:[%s563 + $0x1c8] sm:$0xff]
    %v622 = vld [vmem:[%s563 + $0x1d0] sm:$0xff]
    %v623 = vld [vmem:[%s563 + $0x1d8] sm:$0xff]
    %v624 = vld [vmem:[%s563 + $0x1e0] sm:$0xff]
    %v625 = vld [vmem:[%s563 + $0x1e8] sm:$0xff]
    %v626 = vld [vmem:[%s563 + $0x1f0] sm:$0xff]
    %v627 = vld [vmem:[%s563 + $0x1f8] sm:$0xff]
    %vm646 = vcmask 1045504
    %v647 = vrot.slane %v559, 2
    %v648 = vrot.slane %v481, 2
    %v649 = vsel %vm646, %v647, %v648
    %v650 = vrot.slane %v560, 2
    %v651 = vrot.slane %v482, 2
    %v652 = vsel %vm646, %v650, %v651
    %v653 = vrot.slane %v483, 2
    %v654 = vsel %vm646, %v648, %v653
    %v655 = vrot.slane %v484, 2
    %v656 = vsel %vm646, %v651, %v655
    %v657 = vrot.slane %v485, 2
    %v658 = vsel %vm646, %v653, %v657
    %v659 = vrot.slane %v486, 2
    %v660 = vsel %vm646, %v655, %v659
    %v661 = vrot.slane %v487, 2
    %v662 = vsel %vm646, %v657, %v661
    %v663 = vrot.slane %v488, 2
    %v664 = vsel %vm646, %v659, %v663
    %v665 = vrot.slane %v489, 2
    %v666 = vsel %vm646, %v661, %v665
    %v667 = vrot.slane %v490, 2
    %v668 = vsel %vm646, %v663, %v667
    %v669 = vrot.slane %v491, 2
    %v670 = vsel %vm646, %v665, %v669
    %v671 = vrot.slane %v492, 2
    %v672 = vsel %vm646, %v667, %v671
    %v673 = vrot.slane %v493, 2
    %v674 = vsel %vm646, %v669, %v673
    %v675 = vrot.slane %v494, 2
    %v676 = vsel %vm646, %v671, %v675
    %v677 = vrot.slane %v561, 2
    %v678 = vsel %vm646, %v673, %v677
    %v679 = vrot.slane %v562, 2
    %v680 = vsel %vm646, %v675, %v679
    %697 = vmatprep.subr.mxu0 %v595
    %698 = vmatpush1.msra.mxu0 %v594
    %699 = vmatprep.subr.mxu0 %v593
    %700 = vmatpush1.msra.mxu0 %v592
    %701 = vmatprep.subr.mxu0 %v591
    %702 = vmatpush1.msra.mxu0 %v590
    %703 = vmatprep.subr.mxu0 %v589
    %704 = vmatpush1.msra.mxu0 %v588
    %705 = vmatprep.subr.mxu0 %v587
    %706 = vmatpush1.msra.mxu0 %v586
    %707 = vmatprep.subr.mxu0 %v585
    %708 = vmatpush1.msra.mxu0 %v584
    %709 = vmatprep.subr.mxu0 %v583
    %710 = vmatpush1.msra.mxu0 %v582
    %711 = vmatprep.subr.mxu0 %v581
    %712 = vmatpush1.msra.mxu0 %v580
    %713 = vmatprep.subr.mxu0 %v579
    %714 = vmatpush1.msra.mxu0 %v578
    %715 = vmatprep.subr.mxu0 %v577
    %716 = vmatpush1.msra.mxu0 %v576
    %717 = vmatprep.subr.mxu0 %v575
    %718 = vmatpush1.msra.mxu0 %v574
    %719 = vmatprep.subr.mxu0 %v573
    %720 = vmatpush1.msra.mxu0 %v572
    %721 = vmatprep.subr.mxu0 %v571
    %722 = vmatpush1.msra.mxu0 %v570
    %723 = vmatprep.subr.mxu0 %v569
    %724 = vmatpush1.msra.mxu0 %v568
    %725 = vmatprep.subr.mxu0 %v567
    %726 = vmatpush1.msra.mxu0 %v566
    %727 = vmatprep.subr.mxu0 %v565
    %728 = vmatpush1.msra.mxu0 %v564
    %729 = vmatprep.subr.mxu0 %v627
    %730 = vmatpush2.msra.mxu0 %v626
    %731 = vmatprep.subr.mxu0 %v625
    %732 = vmatpush2.msra.mxu0 %v624
    %733 = vmatprep.subr.mxu0 %v623
    %734 = vmatpush2.msra.mxu0 %v622
    %735 = vmatprep.subr.mxu0 %v621
    %736 = vmatpush2.msra.mxu0 %v620
    %737 = vmatprep.subr.mxu0 %v619
    %738 = vmatpush2.msra.mxu0 %v618
    %739 = vmatprep.subr.mxu0 %v617
    %740 = vmatpush2.msra.mxu0 %v616
    %741 = vmatprep.subr.mxu0 %v615
    %742 = vmatpush2.msra.mxu0 %v614
    %743 = vmatprep.subr.mxu0 %v613
    %744 = vmatpush2.msra.mxu0 %v612
    %745 = vmatprep.subr.mxu0 %v611
    %746 = vmatpush2.msra.mxu0 %v610
    %747 = vmatprep.subr.mxu0 %v609
    %748 = vmatpush2.msra.mxu0 %v608
    %749 = vmatprep.subr.mxu0 %v607
    %750 = vmatpush2.msra.mxu0 %v606
    %751 = vmatprep.subr.mxu0 %v605
    %752 = vmatpush2.msra.mxu0 %v604
    %753 = vmatprep.subr.mxu0 %v603
    %754 = vmatpush2.msra.mxu0 %v602
    %755 = vmatprep.subr.mxu0 %v601
    %756 = vmatpush2.msra.mxu0 %v600
    %757 = vmatprep.subr.mxu0 %v599
    %758 = vmatpush2.msra.mxu0 %v598
    %759 = vmatprep.subr.mxu0 %v597
    %760 = vmatpush2.msra.mxu0 %v596
    %761 = vmatprep.mubr.f32.mxu0 %v652
    %762 = vmatmul.mubr.f32.gmra.mxu0 %v649
    %v763 = vpop.f32.mrf.mxu0
    %v764 = vadd.f32 0.0, %v763
    %v765 = vpop.f32.mrf.mxu0
    %v766 = vadd.f32 0.0, %v765
    %767 = vmatprep.mubr.f32.mxu0 %v656
    %768 = vmatmul.mubr.f32.gmra.mxu0 %v654
    %v769 = vpop.f32.mrf.mxu0
    %v770 = vadd.f32 0.0, %v769
    %v771 = vpop.f32.mrf.mxu0
    %v772 = vadd.f32 0.0, %v771
    %773 = vmatprep.mubr.f32.mxu0 %v660
    %774 = vmatmul.mubr.f32.gmra.mxu0 %v658
    %v775 = vpop.f32.mrf.mxu0
    %v776 = vadd.f32 0.0, %v775
    %v777 = vpop.f32.mrf.mxu0
    %v778 = vadd.f32 0.0, %v777
    %779 = vmatprep.mubr.f32.mxu0 %v664
    %780 = vmatmul.mubr.f32.gmra.mxu0 %v662
    %v781 = vpop.f32.mrf.mxu0
    %v782 = vadd.f32 0.0, %v781
    %v783 = vpop.f32.mrf.mxu0
    %v784 = vadd.f32 0.0, %v783
    %785 = vmatprep.mubr.f32.mxu0 %v668
    %786 = vmatmul.mubr.f32.gmra.mxu0 %v666
    %v787 = vpop.f32.mrf.mxu0
    %v788 = vadd.f32 0.0, %v787
    %v789 = vpop.f32.mrf.mxu0
    %v790 = vadd.f32 0.0, %v789
    %791 = vmatprep.mubr.f32.mxu0 %v672
    %792 = vmatmul.mubr.f32.gmra.mxu0 %v670
    %v793 = vpop.f32.mrf.mxu0
    %v794 = vadd.f32 0.0, %v793
    %v795 = vpop.f32.mrf.mxu0
    %v796 = vadd.f32 0.0, %v795
    %797 = vmatprep.mubr.f32.mxu0 %v676
    %798 = vmatmul.mubr.f32.gmra.mxu0 %v674
    %v799 = vpop.f32.mrf.mxu0
    %v800 = vadd.f32 0.0, %v799
    %v801 = vpop.f32.mrf.mxu0
    %v802 = vadd.f32 0.0, %v801
    %803 = vmatprep.mubr.f32.mxu0 %v680
    %804 = vmatmul.mubr.f32.gmra.mxu0 %v678
    %v805 = vpop.f32.mrf.mxu0
    %v806 = vadd.f32 0.0, %v805
    %v807 = vpop.f32.mrf.mxu0
    %v808 = vadd.f32 0.0, %v807
    %809 = vdwg.mxu0
    %810 = vmatprep.subr.mxu0 %v526
    %811 = vmatpush1.msra.mxu0 %v525
    %812 = vmatprep.subr.mxu0 %v524
    %813 = vmatpush1.msra.mxu0 %v523
    %814 = vmatprep.subr.mxu0 %v522
    %815 = vmatpush1.msra.mxu0 %v521
    %816 = vmatprep.subr.mxu0 %v520
    %817 = vmatpush1.msra.mxu0 %v519
    %818 = vmatprep.subr.mxu0 %v518
    %819 = vmatpush1.msra.mxu0 %v517
    %820 = vmatprep.subr.mxu0 %v516
    %821 = vmatpush1.msra.mxu0 %v515
    %822 = vmatprep.subr.mxu0 %v514
    %823 = vmatpush1.msra.mxu0 %v513
    %824 = vmatprep.subr.mxu0 %v512
    %825 = vmatpush1.msra.mxu0 %v511
    %826 = vmatprep.subr.mxu0 %v510
    %827 = vmatpush1.msra.mxu0 %v509
    %828 = vmatprep.subr.mxu0 %v508
    %829 = vmatpush1.msra.mxu0 %v507
    %830 = vmatprep.subr.mxu0 %v506
    %831 = vmatpush1.msra.mxu0 %v505
    %832 = vmatprep.subr.mxu0 %v504
    %833 = vmatpush1.msra.mxu0 %v503
    %834 = vmatprep.subr.mxu0 %v502
    %835 = vmatpush1.msra.mxu0 %v501
    %836 = vmatprep.subr.mxu0 %v500
    %837 = vmatpush1.msra.mxu0 %v499
    %838 = vmatprep.subr.mxu0 %v498
    %839 = vmatpush1.msra.mxu0 %v497
    %840 = vmatprep.subr.mxu0 %v496
    %841 = vmatpush1.msra.mxu0 %v495
    %842 = vmatprep.subr.mxu0 %v558
    %843 = vmatpush2.msra.mxu0 %v557
    %844 = vmatprep.subr.mxu0 %v556
    %845 = vmatpush2.msra.mxu0 %v555
    %846 = vmatprep.subr.mxu0 %v554
    %847 = vmatpush2.msra.mxu0 %v553
    %848 = vmatprep.subr.mxu0 %v552
    %849 = vmatpush2.msra.mxu0 %v551
    %850 = vmatprep.subr.mxu0 %v550
    %851 = vmatpush2.msra.mxu0 %v549
    %852 = vmatprep.subr.mxu0 %v548
    %853 = vmatpush2.msra.mxu0 %v547
    %854 = vmatprep.subr.mxu0 %v546
    %855 = vmatpush2.msra.mxu0 %v545
    %856 = vmatprep.subr.mxu0 %v544
    %857 = vmatpush2.msra.mxu0 %v543
    %858 = vmatprep.subr.mxu0 %v542
    %859 = vmatpush2.msra.mxu0 %v541
    %860 = vmatprep.subr.mxu0 %v540
    %861 = vmatpush2.msra.mxu0 %v539
    %862 = vmatprep.subr.mxu0 %v538
    %863 = vmatpush2.msra.mxu0 %v537
    %864 = vmatprep.subr.mxu0 %v536
    %865 = vmatpush2.msra.mxu0 %v535
    %866 = vmatprep.subr.mxu0 %v534
    %867 = vmatpush2.msra.mxu0 %v533
    %868 = vmatprep.subr.mxu0 %v532
    %869 = vmatpush2.msra.mxu0 %v531
    %870 = vmatprep.subr.mxu0 %v530
    %871 = vmatpush2.msra.mxu0 %v529
    %872 = vmatprep.subr.mxu0 %v528
    %873 = vmatpush2.msra.mxu0 %v527
    %874 = vmatprep.mubr.f32.mxu0 %v480
    %875 = vmatmul.mubr.f32.gmra.mxu0 %v479
    %v876 = vpop.f32.mrf.mxu0
    %v877 = vadd.f32 %v764, %v876
    %v878 = vpop.f32.mrf.mxu0
    %v879 = vadd.f32 %v766, %v878
    %880 = vmatprep.mubr.f32.mxu0 %v482
    %881 = vmatmul.mubr.f32.gmra.mxu0 %v481
    %v882 = vpop.f32.mrf.mxu0
    %v883 = vadd.f32 %v770, %v882
    %v884 = vpop.f32.mrf.mxu0
    %v885 = vadd.f32 %v772, %v884
    %886 = vmatprep.mubr.f32.mxu0 %v484
    %887 = vmatmul.mubr.f32.gmra.mxu0 %v483
    %v888 = vpop.f32.mrf.mxu0
    %v889 = vadd.f32 %v776, %v888
    %v890 = vpop.f32.mrf.mxu0
    %v891 = vadd.f32 %v778, %v890
    %892 = vmatprep.mubr.f32.mxu0 %v486
    %893 = vmatmul.mubr.f32.gmra.mxu0 %v485
    %v894 = vpop.f32.mrf.mxu0
    %v895 = vadd.f32 %v782, %v894
    %v896 = vpop.f32.mrf.mxu0
    %v897 = vadd.f32 %v784, %v896
    %898 = vmatprep.mubr.f32.mxu0 %v488
    %899 = vmatmul.mubr.f32.gmra.mxu0 %v487
    %v900 = vpop.f32.mrf.mxu0
    %v901 = vadd.f32 %v788, %v900
    %v902 = vpop.f32.mrf.mxu0
    %v903 = vadd.f32 %v790, %v902
    %904 = vmatprep.mubr.f32.mxu0 %v490
    %905 = vmatmul.mubr.f32.gmra.mxu0 %v489
    %v906 = vpop.f32.mrf.mxu0
    %v907 = vadd.f32 %v794, %v906
    %v908 = vpop.f32.mrf.mxu0
    %v909 = vadd.f32 %v796, %v908
    %910 = vmatprep.mubr.f32.mxu0 %v492
    %911 = vmatmul.mubr.f32.gmra.mxu0 %v491
    %v912 = vpop.f32.mrf.mxu0
    %v913 = vadd.f32 %v800, %v912
    %v914 = vpop.f32.mrf.mxu0
    %v915 = vadd.f32 %v802, %v914
    %916 = vmatprep.mubr.f32.mxu0 %v494
    %917 = vmatmul.mubr.f32.gmra.mxu0 %v493
    %v918 = vpop.f32.mrf.mxu0
    %v919 = vadd.f32 %v806, %v918
    %v920 = vpop.f32.mrf.mxu0
    %v921 = vadd.f32 %v808, %v920
    %922 = vdwg.mxu0
    %v923 = vld [vmem:[%s0] sm:$0xf0]
    %v924 = vld [vmem:[%s0 + $0x8] sm:$0xf0]
    %v925 = vld [vmem:[%s0 + $0x80] sm:$0xf]
    %v926 = vld [vmem:[%s0 + $0x88] sm:$0xf]
    %s927 = scalar_lea.vmem %s1, 1024
    %v928 = vld [vmem:[%s927] sm:$0xff]
    %v929 = vld [vmem:[%s927 + $0x8] sm:$0xff]
    %v930 = vld [vmem:[%s927 + $0x10] sm:$0xff]
    %v931 = vld [vmem:[%s927 + $0x18] sm:$0xff]
    %v932 = vld [vmem:[%s927 + $0x20] sm:$0xff]
    %v933 = vld [vmem:[%s927 + $0x28] sm:$0xff]
    %v934 = vld [vmem:[%s927 + $0x30] sm:$0xff]
    %v935 = vld [vmem:[%s927 + $0x38] sm:$0xff]
    %v936 = vld [vmem:[%s927 + $0x40] sm:$0xff]
    %v937 = vld [vmem:[%s927 + $0x48] sm:$0xff]
    %v938 = vld [vmem:[%s927 + $0x50] sm:$0xff]
    %v939 = vld [vmem:[%s927 + $0x58] sm:$0xff]
    %v940 = vld [vmem:[%s927 + $0x60] sm:$0xff]
    %v941 = vld [vmem:[%s927 + $0x68] sm:$0xff]
    %v942 = vld [vmem:[%s927 + $0x70] sm:$0xff]
    %v943 = vld [vmem:[%s927 + $0x78] sm:$0xff]
    %v944 = vld [vmem:[%s927 + $0x80] sm:$0xff]
    %v945 = vld [vmem:[%s927 + $0x88] sm:$0xff]
    %v946 = vld [vmem:[%s927 + $0x90] sm:$0xff]
    %v947 = vld [vmem:[%s927 + $0x98] sm:$0xff]
    %v948 = vld [vmem:[%s927 + $0xa0] sm:$0xff]
    %v949 = vld [vmem:[%s927 + $0xa8] sm:$0xff]
    %v950 = vld [vmem:[%s927 + $0xb0] sm:$0xff]
    %v951 = vld [vmem:[%s927 + $0xb8] sm:$0xff]
    %v952 = vld [vmem:[%s927 + $0xc0] sm:$0xff]
    %v953 = vld [vmem:[%s927 + $0xc8] sm:$0xff]
    %v954 = vld [vmem:[%s927 + $0xd0] sm:$0xff]
    %v955 = vld [vmem:[%s927 + $0xd8] sm:$0xff]
    %v956 = vld [vmem:[%s927 + $0xe0] sm:$0xff]
    %v957 = vld [vmem:[%s927 + $0xe8] sm:$0xff]
    %v958 = vld [vmem:[%s927 + $0xf0] sm:$0xff]
    %v959 = vld [vmem:[%s927 + $0xf8] sm:$0xff]
    %v960 = vld [vmem:[%s927 + $0x100] sm:$0xff]
    %v961 = vld [vmem:[%s927 + $0x108] sm:$0xff]
    %v962 = vld [vmem:[%s927 + $0x110] sm:$0xff]
    %v963 = vld [vmem:[%s927 + $0x118] sm:$0xff]
    %v964 = vld [vmem:[%s927 + $0x120] sm:$0xff]
    %v965 = vld [vmem:[%s927 + $0x128] sm:$0xff]
    %v966 = vld [vmem:[%s927 + $0x130] sm:$0xff]
    %v967 = vld [vmem:[%s927 + $0x138] sm:$0xff]
    %v968 = vld [vmem:[%s927 + $0x140] sm:$0xff]
    %v969 = vld [vmem:[%s927 + $0x148] sm:$0xff]
    %v970 = vld [vmem:[%s927 + $0x150] sm:$0xff]
    %v971 = vld [vmem:[%s927 + $0x158] sm:$0xff]
    %v972 = vld [vmem:[%s927 + $0x160] sm:$0xff]
    %v973 = vld [vmem:[%s927 + $0x168] sm:$0xff]
    %v974 = vld [vmem:[%s927 + $0x170] sm:$0xff]
    %v975 = vld [vmem:[%s927 + $0x178] sm:$0xff]
    %v976 = vld [vmem:[%s927 + $0x180] sm:$0xff]
    %v977 = vld [vmem:[%s927 + $0x188] sm:$0xff]
    %v978 = vld [vmem:[%s927 + $0x190] sm:$0xff]
    %v979 = vld [vmem:[%s927 + $0x198] sm:$0xff]
    %v980 = vld [vmem:[%s927 + $0x1a0] sm:$0xff]
    %v981 = vld [vmem:[%s927 + $0x1a8] sm:$0xff]
    %v982 = vld [vmem:[%s927 + $0x1b0] sm:$0xff]
    %v983 = vld [vmem:[%s927 + $0x1b8] sm:$0xff]
    %v984 = vld [vmem:[%s927 + $0x1c0] sm:$0xff]
    %v985 = vld [vmem:[%s927 + $0x1c8] sm:$0xff]
    %v986 = vld [vmem:[%s927 + $0x1d0] sm:$0xff]
    %v987 = vld [vmem:[%s927 + $0x1d8] sm:$0xff]
    %v988 = vld [vmem:[%s927 + $0x1e0] sm:$0xff]
    %v989 = vld [vmem:[%s927 + $0x1e8] sm:$0xff]
    %v990 = vld [vmem:[%s927 + $0x1f0] sm:$0xff]
    %v991 = vld [vmem:[%s927 + $0x1f8] sm:$0xff]
    %vm996 = vcmask 1043456
    %v997 = vrot.slane %v923, 4
    %v998 = vrot.slane %v481, 4
    %v999 = vsel %vm996, %v997, %v998
    %v1000 = vrot.slane %v924, 4
    %v1001 = vrot.slane %v482, 4
    %v1002 = vsel %vm996, %v1000, %v1001
    %v1003 = vrot.slane %v483, 4
    %v1004 = vsel %vm996, %v998, %v1003
    %v1005 = vrot.slane %v484, 4
    %v1006 = vsel %vm996, %v1001, %v1005
    %v1007 = vrot.slane %v485, 4
    %v1008 = vsel %vm996, %v1003, %v1007
    %v1009 = vrot.slane %v486, 4
    %v1010 = vsel %vm996, %v1005, %v1009
    %v1011 = vrot.slane %v487, 4
    %v1012 = vsel %vm996, %v1007, %v1011
    %v1013 = vrot.slane %v488, 4
    %v1014 = vsel %vm996, %v1009, %v1013
    %v1015 = vrot.slane %v489, 4
    %v1016 = vsel %vm996, %v1011, %v1015
    %v1017 = vrot.slane %v490, 4
    %v1018 = vsel %vm996, %v1013, %v1017
    %v1019 = vrot.slane %v491, 4
    %v1020 = vsel %vm996, %v1015, %v1019
    %v1021 = vrot.slane %v492, 4
    %v1022 = vsel %vm996, %v1017, %v1021
    %v1023 = vrot.slane %v493, 4
    %v1024 = vsel %vm996, %v1019, %v1023
    %v1025 = vrot.slane %v494, 4
    %v1026 = vsel %vm996, %v1021, %v1025
    %v1027 = vrot.slane %v925, 4
    %v1028 = vsel %vm996, %v1023, %v1027
    %v1029 = vrot.slane %v926, 4
    %v1030 = vsel %vm996, %v1025, %v1029
    %1047 = vmatprep.subr.mxu0 %v959
    %1048 = vmatpush1.msra.mxu0 %v958
    %1049 = vmatprep.subr.mxu0 %v957
    %1050 = vmatpush1.msra.mxu0 %v956
    %1051 = vmatprep.subr.mxu0 %v955
    %1052 = vmatpush1.msra.mxu0 %v954
    %1053 = vmatprep.subr.mxu0 %v953
    %1054 = vmatpush1.msra.mxu0 %v952
    %1055 = vmatprep.subr.mxu0 %v951
    %1056 = vmatpush1.msra.mxu0 %v950
    %1057 = vmatprep.subr.mxu0 %v949
    %1058 = vmatpush1.msra.mxu0 %v948
    %1059 = vmatprep.subr.mxu0 %v947
    %1060 = vmatpush1.msra.mxu0 %v946
    %1061 = vmatprep.subr.mxu0 %v945
    %1062 = vmatpush1.msra.mxu0 %v944
    %1063 = vmatprep.subr.mxu0 %v943
    %1064 = vmatpush1.msra.mxu0 %v942
    %1065 = vmatprep.subr.mxu0 %v941
    %1066 = vmatpush1.msra.mxu0 %v940
    %1067 = vmatprep.subr.mxu0 %v939
    %1068 = vmatpush1.msra.mxu0 %v938
    %1069 = vmatprep.subr.mxu0 %v937
    %1070 = vmatpush1.msra.mxu0 %v936
    %1071 = vmatprep.subr.mxu0 %v935
    %1072 = vmatpush1.msra.mxu0 %v934
    %1073 = vmatprep.subr.mxu0 %v933
    %1074 = vmatpush1.msra.mxu0 %v932
    %1075 = vmatprep.subr.mxu0 %v931
    %1076 = vmatpush1.msra.mxu0 %v930
    %1077 = vmatprep.subr.mxu0 %v929
    %1078 = vmatpush1.msra.mxu0 %v928
    %1079 = vmatprep.subr.mxu0 %v991
    %1080 = vmatpush2.msra.mxu0 %v990
    %1081 = vmatprep.subr.mxu0 %v989
    %1082 = vmatpush2.msra.mxu0 %v988
    %1083 = vmatprep.subr.mxu0 %v987
    %1084 = vmatpush2.msra.mxu0 %v986
    %1085 = vmatprep.subr.mxu0 %v985
    %1086 = vmatpush2.msra.mxu0 %v984
    %1087 = vmatprep.subr.mxu0 %v983
    %1088 = vmatpush2.msra.mxu0 %v982
    %1089 = vmatprep.subr.mxu0 %v981
    %1090 = vmatpush2.msra.mxu0 %v980
    %1091 = vmatprep.subr.mxu0 %v979
    %1092 = vmatpush2.msra.mxu0 %v978
    %1093 = vmatprep.subr.mxu0 %v977
    %1094 = vmatpush2.msra.mxu0 %v976
    %1095 = vmatprep.subr.mxu0 %v975
    %1096 = vmatpush2.msra.mxu0 %v974
    %1097 = vmatprep.subr.mxu0 %v973
    %1098 = vmatpush2.msra.mxu0 %v972
    %1099 = vmatprep.subr.mxu0 %v971
    %1100 = vmatpush2.msra.mxu0 %v970
    %1101 = vmatprep.subr.mxu0 %v969
    %1102 = vmatpush2.msra.mxu0 %v968
    %1103 = vmatprep.subr.mxu0 %v967
    %1104 = vmatpush2.msra.mxu0 %v966
    %1105 = vmatprep.subr.mxu0 %v965
    %1106 = vmatpush2.msra.mxu0 %v964
    %1107 = vmatprep.subr.mxu0 %v963
    %1108 = vmatpush2.msra.mxu0 %v962
    %1109 = vmatprep.subr.mxu0 %v961
    %1110 = vmatpush2.msra.mxu0 %v960
    %1111 = vmatprep.mubr.f32.mxu0 %v1002
    %1112 = vmatmul.mubr.f32.gmra.mxu0 %v999
    %v1113 = vpop.f32.mrf.mxu0
    %v1114 = vadd.f32 0.0, %v1113
    %v1115 = vpop.f32.mrf.mxu0
    %v1116 = vadd.f32 0.0, %v1115
    %1117 = vmatprep.mubr.f32.mxu0 %v1006
    %1118 = vmatmul.mubr.f32.gmra.mxu0 %v1004
    %v1119 = vpop.f32.mrf.mxu0
    %v1120 = vadd.f32 0.0, %v1119
    %v1121 = vpop.f32.mrf.mxu0
    %v1122 = vadd.f32 0.0, %v1121
    %1123 = vmatprep.mubr.f32.mxu0 %v1010
    %1124 = vmatmul.mubr.f32.gmra.mxu0 %v1008
    %v1125 = vpop.f32.mrf.mxu0
    %v1126 = vadd.f32 0.0, %v1125
    %v1127 = vpop.f32.mrf.mxu0
    %v1128 = vadd.f32 0.0, %v1127
    %1129 = vmatprep.mubr.f32.mxu0 %v1014
    %1130 = vmatmul.mubr.f32.gmra.mxu0 %v1012
    %v1131 = vpop.f32.mrf.mxu0
    %v1132 = vadd.f32 0.0, %v1131
    %v1133 = vpop.f32.mrf.mxu0
    %v1134 = vadd.f32 0.0, %v1133
    %1135 = vmatprep.mubr.f32.mxu0 %v1018
    %1136 = vmatmul.mubr.f32.gmra.mxu0 %v1016
    %v1137 = vpop.f32.mrf.mxu0
    %v1138 = vadd.f32 0.0, %v1137
    %v1139 = vpop.f32.mrf.mxu0
    %v1140 = vadd.f32 0.0, %v1139
    %1141 = vmatprep.mubr.f32.mxu0 %v1022
    %1142 = vmatmul.mubr.f32.gmra.mxu0 %v1020
    %v1143 = vpop.f32.mrf.mxu0
    %v1144 = vadd.f32 0.0, %v1143
    %v1145 = vpop.f32.mrf.mxu0
    %v1146 = vadd.f32 0.0, %v1145
    %1147 = vmatprep.mubr.f32.mxu0 %v1026
    %1148 = vmatmul.mubr.f32.gmra.mxu0 %v1024
    %v1149 = vpop.f32.mrf.mxu0
    %v1150 = vadd.f32 0.0, %v1149
    %v1151 = vpop.f32.mrf.mxu0
    %v1152 = vadd.f32 0.0, %v1151
    %1153 = vmatprep.mubr.f32.mxu0 %v1030
    %1154 = vmatmul.mubr.f32.gmra.mxu0 %v1028
    %v1155 = vpop.f32.mrf.mxu0
    %v1156 = vadd.f32 0.0, %v1155
    %v1157 = vpop.f32.mrf.mxu0
    %v1158 = vadd.f32 0.0, %v1157
    %1159 = vdwg.mxu0
    %v1160 = vadd.f32 %v877, %v1114
    %v1161 = vadd.f32 %v879, %v1116
    %v1162 = vadd.f32 %v883, %v1120
    %v1163 = vadd.f32 %v885, %v1122
    %v1164 = vadd.f32 %v889, %v1126
    %v1165 = vadd.f32 %v891, %v1128
    %v1166 = vadd.f32 %v895, %v1132
    %v1167 = vadd.f32 %v897, %v1134
    %v1168 = vadd.f32 %v901, %v1138
    %v1169 = vadd.f32 %v903, %v1140
    %v1170 = vadd.f32 %v907, %v1144
    %v1171 = vadd.f32 %v909, %v1146
    %v1172 = vadd.f32 %v913, %v1150
    %v1173 = vadd.f32 %v915, %v1152
    %v1174 = vadd.f32 %v919, %v1156
    %v1175 = vadd.f32 %v921, %v1158
    %v1176 = vld [vmem:[%s0] sm:$0xc0]
    %v1177 = vld [vmem:[%s0 + $0x8] sm:$0xc0]
    %v1178 = vld [vmem:[%s0 + $0x80] sm:$0x3f]
    %v1179 = vld [vmem:[%s0 + $0x88] sm:$0x3f]
    %s1180 = scalar_lea.vmem %s1, 1536
    %v1181 = vld [vmem:[%s1180] sm:$0xff]
    %v1182 = vld [vmem:[%s1180 + $0x8] sm:$0xff]
    %v1183 = vld [vmem:[%s1180 + $0x10] sm:$0xff]
    %v1184 = vld [vmem:[%s1180 + $0x18] sm:$0xff]
    %v1185 = vld [vmem:[%s1180 + $0x20] sm:$0xff]
    %v1186 = vld [vmem:[%s1180 + $0x28] sm:$0xff]
    %v1187 = vld [vmem:[%s1180 + $0x30] sm:$0xff]
    %v1188 = vld [vmem:[%s1180 + $0x38] sm:$0xff]
    %v1189 = vld [vmem:[%s1180 + $0x40] sm:$0xff]
    %v1190 = vld [vmem:[%s1180 + $0x48] sm:$0xff]
    %v1191 = vld [vmem:[%s1180 + $0x50] sm:$0xff]
    %v1192 = vld [vmem:[%s1180 + $0x58] sm:$0xff]
    %v1193 = vld [vmem:[%s1180 + $0x60] sm:$0xff]
    %v1194 = vld [vmem:[%s1180 + $0x68] sm:$0xff]
    %v1195 = vld [vmem:[%s1180 + $0x70] sm:$0xff]
    %v1196 = vld [vmem:[%s1180 + $0x78] sm:$0xff]
    %v1197 = vld [vmem:[%s1180 + $0x80] sm:$0xff]
    %v1198 = vld [vmem:[%s1180 + $0x88] sm:$0xff]
    %v1199 = vld [vmem:[%s1180 + $0x90] sm:$0xff]
    %v1200 = vld [vmem:[%s1180 + $0x98] sm:$0xff]
    %v1201 = vld [vmem:[%s1180 + $0xa0] sm:$0xff]
    %v1202 = vld [vmem:[%s1180 + $0xa8] sm:$0xff]
    %v1203 = vld [vmem:[%s1180 + $0xb0] sm:$0xff]
    %v1204 = vld [vmem:[%s1180 + $0xb8] sm:$0xff]
    %v1205 = vld [vmem:[%s1180 + $0xc0] sm:$0xff]
    %v1206 = vld [vmem:[%s1180 + $0xc8] sm:$0xff]
    %v1207 = vld [vmem:[%s1180 + $0xd0] sm:$0xff]
    %v1208 = vld [vmem:[%s1180 + $0xd8] sm:$0xff]
    %v1209 = vld [vmem:[%s1180 + $0xe0] sm:$0xff]
    %v1210 = vld [vmem:[%s1180 + $0xe8] sm:$0xff]
    %v1211 = vld [vmem:[%s1180 + $0xf0] sm:$0xff]
    %v1212 = vld [vmem:[%s1180 + $0xf8] sm:$0xff]
    %v1213 = vld [vmem:[%s1180 + $0x100] sm:$0xff]
    %v1214 = vld [vmem:[%s1180 + $0x108] sm:$0xff]
    %v1215 = vld [vmem:[%s1180 + $0x110] sm:$0xff]
    %v1216 = vld [vmem:[%s1180 + $0x118] sm:$0xff]
    %v1217 = vld [vmem:[%s1180 + $0x120] sm:$0xff]
    %v1218 = vld [vmem:[%s1180 + $0x128] sm:$0xff]
    %v1219 = vld [vmem:[%s1180 + $0x130] sm:$0xff]
    %v1220 = vld [vmem:[%s1180 + $0x138] sm:$0xff]
    %v1221 = vld [vmem:[%s1180 + $0x140] sm:$0xff]
    %v1222 = vld [vmem:[%s1180 + $0x148] sm:$0xff]
    %v1223 = vld [vmem:[%s1180 + $0x150] sm:$0xff]
    %v1224 = vld [vmem:[%s1180 + $0x158] sm:$0xff]
    %v1225 = vld [vmem:[%s1180 + $0x160] sm:$0xff]
    %v1226 = vld [vmem:[%s1180 + $0x168] sm:$0xff]
    %v1227 = vld [vmem:[%s1180 + $0x170] sm:$0xff]
    %v1228 = vld [vmem:[%s1180 + $0x178] sm:$0xff]
    %v1229 = vld [vmem:[%s1180 + $0x180] sm:$0xff]
    %v1230 = vld [vmem:[%s1180 + $0x188] sm:$0xff]
    %v1231 = vld [vmem:[%s1180 + $0x190] sm:$0xff]
    %v1232 = vld [vmem:[%s1180 + $0x198] sm:$0xff]
    %v1233 = vld [vmem:[%s1180 + $0x1a0] sm:$0xff]
    %v1234 = vld [vmem:[%s1180 + $0x1a8] sm:$0xff]
    %v1235 = vld [vmem:[%s1180 + $0x1b0] sm:$0xff]
    %v1236 = vld [vmem:[%s1180 + $0x1b8] sm:$0xff]
    %v1237 = vld [vmem:[%s1180 + $0x1c0] sm:$0xff]
    %v1238 = vld [vmem:[%s1180 + $0x1c8] sm:$0xff]
    %v1239 = vld [vmem:[%s1180 + $0x1d0] sm:$0xff]
    %v1240 = vld [vmem:[%s1180 + $0x1d8] sm:$0xff]
    %v1241 = vld [vmem:[%s1180 + $0x1e0] sm:$0xff]
    %v1242 = vld [vmem:[%s1180 + $0x1e8] sm:$0xff]
    %v1243 = vld [vmem:[%s1180 + $0x1f0] sm:$0xff]
    %v1244 = vld [vmem:[%s1180 + $0x1f8] sm:$0xff]
    %vm1249 = vcmask 1041408
    %v1250 = vrot.slane %v1176, 6
    %v1251 = vrot.slane %v481, 6
    %v1252 = vsel %vm1249, %v1250, %v1251
    %v1253 = vrot.slane %v1177, 6
    %v1254 = vrot.slane %v482, 6
    %v1255 = vsel %vm1249, %v1253, %v1254
    %v1256 = vrot.slane %v483, 6
    %v1257 = vsel %vm1249, %v1251, %v1256
    %v1258 = vrot.slane %v484, 6
    %v1259 = vsel %vm1249, %v1254, %v1258
    %v1260 = vrot.slane %v485, 6
    %v1261 = vsel %vm1249, %v1256, %v1260
    %v1262 = vrot.slane %v486, 6
    %v1263 = vsel %vm1249, %v1258, %v1262
    %v1264 = vrot.slane %v487, 6
    %v1265 = vsel %vm1249, %v1260, %v1264
    %v1266 = vrot.slane %v488, 6
    %v1267 = vsel %vm1249, %v1262, %v1266
    %v1268 = vrot.slane %v489, 6
    %v1269 = vsel %vm1249, %v1264, %v1268
    %v1270 = vrot.slane %v490, 6
    %v1271 = vsel %vm1249, %v1266, %v1270
    %v1272 = vrot.slane %v491, 6
    %v1273 = vsel %vm1249, %v1268, %v1272
    %v1274 = vrot.slane %v492, 6
    %v1275 = vsel %vm1249, %v1270, %v1274
    %v1276 = vrot.slane %v493, 6
    %v1277 = vsel %vm1249, %v1272, %v1276
    %v1278 = vrot.slane %v494, 6
    %v1279 = vsel %vm1249, %v1274, %v1278
    %v1280 = vrot.slane %v1178, 6
    %v1281 = vsel %vm1249, %v1276, %v1280
    %v1282 = vrot.slane %v1179, 6
    %v1283 = vsel %vm1249, %v1278, %v1282
    %1300 = vmatprep.subr.mxu0 %v1212
    %1301 = vmatpush1.msra.mxu0 %v1211
    %1302 = vmatprep.subr.mxu0 %v1210
    %1303 = vmatpush1.msra.mxu0 %v1209
    %1304 = vmatprep.subr.mxu0 %v1208
    %1305 = vmatpush1.msra.mxu0 %v1207
    %1306 = vmatprep.subr.mxu0 %v1206
    %1307 = vmatpush1.msra.mxu0 %v1205
    %1308 = vmatprep.subr.mxu0 %v1204
    %1309 = vmatpush1.msra.mxu0 %v1203
    %1310 = vmatprep.subr.mxu0 %v1202
    %1311 = vmatpush1.msra.mxu0 %v1201
    %1312 = vmatprep.subr.mxu0 %v1200
    %1313 = vmatpush1.msra.mxu0 %v1199
    %1314 = vmatprep.subr.mxu0 %v1198
    %1315 = vmatpush1.msra.mxu0 %v1197
    %1316 = vmatprep.subr.mxu0 %v1196
    %1317 = vmatpush1.msra.mxu0 %v1195
    %1318 = vmatprep.subr.mxu0 %v1194
    %1319 = vmatpush1.msra.mxu0 %v1193
    %1320 = vmatprep.subr.mxu0 %v1192
    %1321 = vmatpush1.msra.mxu0 %v1191
    %1322 = vmatprep.subr.mxu0 %v1190
    %1323 = vmatpush1.msra.mxu0 %v1189
    %1324 = vmatprep.subr.mxu0 %v1188
    %1325 = vmatpush1.msra.mxu0 %v1187
    %1326 = vmatprep.subr.mxu0 %v1186
    %1327 = vmatpush1.msra.mxu0 %v1185
    %1328 = vmatprep.subr.mxu0 %v1184
    %1329 = vmatpush1.msra.mxu0 %v1183
    %1330 = vmatprep.subr.mxu0 %v1182
    %1331 = vmatpush1.msra.mxu0 %v1181
    %1332 = vmatprep.subr.mxu0 %v1244
    %1333 = vmatpush2.msra.mxu0 %v1243
    %1334 = vmatprep.subr.mxu0 %v1242
    %1335 = vmatpush2.msra.mxu0 %v1241
    %1336 = vmatprep.subr.mxu0 %v1240
    %1337 = vmatpush2.msra.mxu0 %v1239
    %1338 = vmatprep.subr.mxu0 %v1238
    %1339 = vmatpush2.msra.mxu0 %v1237
    %1340 = vmatprep.subr.mxu0 %v1236
    %1341 = vmatpush2.msra.mxu0 %v1235
    %1342 = vmatprep.subr.mxu0 %v1234
    %1343 = vmatpush2.msra.mxu0 %v1233
    %1344 = vmatprep.subr.mxu0 %v1232
    %1345 = vmatpush2.msra.mxu0 %v1231
    %1346 = vmatprep.subr.mxu0 %v1230
    %1347 = vmatpush2.msra.mxu0 %v1229
    %1348 = vmatprep.subr.mxu0 %v1228
    %1349 = vmatpush2.msra.mxu0 %v1227
    %1350 = vmatprep.subr.mxu0 %v1226
    %1351 = vmatpush2.msra.mxu0 %v1225
    %1352 = vmatprep.subr.mxu0 %v1224
    %1353 = vmatpush2.msra.mxu0 %v1223
    %1354 = vmatprep.subr.mxu0 %v1222
    %1355 = vmatpush2.msra.mxu0 %v1221
    %1356 = vmatprep.subr.mxu0 %v1220
    %1357 = vmatpush2.msra.mxu0 %v1219
    %1358 = vmatprep.subr.mxu0 %v1218
    %1359 = vmatpush2.msra.mxu0 %v1217
    %1360 = vmatprep.subr.mxu0 %v1216
    %1361 = vmatpush2.msra.mxu0 %v1215
    %1362 = vmatprep.subr.mxu0 %v1214
    %1363 = vmatpush2.msra.mxu0 %v1213
    %1364 = vmatprep.mubr.f32.mxu0 %v1255
    %1365 = vmatmul.mubr.f32.gmra.mxu0 %v1252
    %v1366 = vpop.f32.mrf.mxu0
    %v1367 = vadd.f32 0.0, %v1366
    %v1368 = vpop.f32.mrf.mxu0
    %v1369 = vadd.f32 0.0, %v1368
    %1370 = vmatprep.mubr.f32.mxu0 %v1259
    %1371 = vmatmul.mubr.f32.gmra.mxu0 %v1257
    %v1372 = vpop.f32.mrf.mxu0
    %v1373 = vadd.f32 0.0, %v1372
    %v1374 = vpop.f32.mrf.mxu0
    %v1375 = vadd.f32 0.0, %v1374
    %1376 = vmatprep.mubr.f32.mxu0 %v1263
    %1377 = vmatmul.mubr.f32.gmra.mxu0 %v1261
    %v1378 = vpop.f32.mrf.mxu0
    %v1379 = vadd.f32 0.0, %v1378
    %v1380 = vpop.f32.mrf.mxu0
    %v1381 = vadd.f32 0.0, %v1380
    %1382 = vmatprep.mubr.f32.mxu0 %v1267
    %1383 = vmatmul.mubr.f32.gmra.mxu0 %v1265
    %v1384 = vpop.f32.mrf.mxu0
    %v1385 = vadd.f32 0.0, %v1384
    %v1386 = vpop.f32.mrf.mxu0
    %v1387 = vadd.f32 0.0, %v1386
    %1388 = vmatprep.mubr.f32.mxu0 %v1271
    %1389 = vmatmul.mubr.f32.gmra.mxu0 %v1269
    %v1390 = vpop.f32.mrf.mxu0
    %v1391 = vadd.f32 0.0, %v1390
    %v1392 = vpop.f32.mrf.mxu0
    %v1393 = vadd.f32 0.0, %v1392
    %1394 = vmatprep.mubr.f32.mxu0 %v1275
    %1395 = vmatmul.mubr.f32.gmra.mxu0 %v1273
    %v1396 = vpop.f32.mrf.mxu0
    %v1397 = vadd.f32 0.0, %v1396
    %v1398 = vpop.f32.mrf.mxu0
    %v1399 = vadd.f32 0.0, %v1398
    %1400 = vmatprep.mubr.f32.mxu0 %v1279
    %1401 = vmatmul.mubr.f32.gmra.mxu0 %v1277
    %v1402 = vpop.f32.mrf.mxu0
    %v1403 = vadd.f32 0.0, %v1402
    %v1404 = vpop.f32.mrf.mxu0
    %v1405 = vadd.f32 0.0, %v1404
    %1406 = vmatprep.mubr.f32.mxu0 %v1283
    %1407 = vmatmul.mubr.f32.gmra.mxu0 %v1281
    %v1408 = vpop.f32.mrf.mxu0
    %v1409 = vadd.f32 0.0, %v1408
    %v1410 = vpop.f32.mrf.mxu0
    %v1411 = vadd.f32 0.0, %v1410
    %1412 = vdwg.mxu0
    %v1413 = vadd.f32 %v1160, %v1367
    %v1414 = vadd.f32 %v1161, %v1369
    %v1415 = vadd.f32 %v1162, %v1373
    %v1416 = vadd.f32 %v1163, %v1375
    %v1417 = vadd.f32 %v1164, %v1379
    %v1418 = vadd.f32 %v1165, %v1381
    %v1419 = vadd.f32 %v1166, %v1385
    %v1420 = vadd.f32 %v1167, %v1387
    %v1421 = vadd.f32 %v1168, %v1391
    %v1422 = vadd.f32 %v1169, %v1393
    %v1423 = vadd.f32 %v1170, %v1397
    %v1424 = vadd.f32 %v1171, %v1399
    %v1425 = vadd.f32 %v1172, %v1403
    %v1426 = vadd.f32 %v1173, %v1405
    %v1427 = vadd.f32 %v1174, %v1409
    %v1428 = vadd.f32 %v1175, %v1411
    %v1429 = vld [vmem:[%s0 + $0x80] sm:$0xff]
    %v1430 = vld [vmem:[%s0 + $0x88] sm:$0xff]
    %s1431 = scalar_lea.vmem %s1, 2048
    %v1432 = vld [vmem:[%s1431] sm:$0xff]
    %v1433 = vld [vmem:[%s1431 + $0x8] sm:$0xff]
    %v1434 = vld [vmem:[%s1431 + $0x10] sm:$0xff]
    %v1435 = vld [vmem:[%s1431 + $0x18] sm:$0xff]
    %v1436 = vld [vmem:[%s1431 + $0x20] sm:$0xff]
    %v1437 = vld [vmem:[%s1431 + $0x28] sm:$0xff]
    %v1438 = vld [vmem:[%s1431 + $0x30] sm:$0xff]
    %v1439 = vld [vmem:[%s1431 + $0x38] sm:$0xff]
    %v1440 = vld [vmem:[%s1431 + $0x40] sm:$0xff]
    %v1441 = vld [vmem:[%s1431 + $0x48] sm:$0xff]
    %v1442 = vld [vmem:[%s1431 + $0x50] sm:$0xff]
    %v1443 = vld [vmem:[%s1431 + $0x58] sm:$0xff]
    %v1444 = vld [vmem:[%s1431 + $0x60] sm:$0xff]
    %v1445 = vld [vmem:[%s1431 + $0x68] sm:$0xff]
    %v1446 = vld [vmem:[%s1431 + $0x70] sm:$0xff]
    %v1447 = vld [vmem:[%s1431 + $0x78] sm:$0xff]
    %v1448 = vld [vmem:[%s1431 + $0x80] sm:$0xff]
    %v1449 = vld [vmem:[%s1431 + $0x88] sm:$0xff]
    %v1450 = vld [vmem:[%s1431 + $0x90] sm:$0xff]
    %v1451 = vld [vmem:[%s1431 + $0x98] sm:$0xff]
    %v1452 = vld [vmem:[%s1431 + $0xa0] sm:$0xff]
    %v1453 = vld [vmem:[%s1431 + $0xa8] sm:$0xff]
    %v1454 = vld [vmem:[%s1431 + $0xb0] sm:$0xff]
    %v1455 = vld [vmem:[%s1431 + $0xb8] sm:$0xff]
    %v1456 = vld [vmem:[%s1431 + $0xc0] sm:$0xff]
    %v1457 = vld [vmem:[%s1431 + $0xc8] sm:$0xff]
    %v1458 = vld [vmem:[%s1431 + $0xd0] sm:$0xff]
    %v1459 = vld [vmem:[%s1431 + $0xd8] sm:$0xff]
    %v1460 = vld [vmem:[%s1431 + $0xe0] sm:$0xff]
    %v1461 = vld [vmem:[%s1431 + $0xe8] sm:$0xff]
    %v1462 = vld [vmem:[%s1431 + $0xf0] sm:$0xff]
    %v1463 = vld [vmem:[%s1431 + $0xf8] sm:$0xff]
    %v1464 = vld [vmem:[%s1431 + $0x100] sm:$0xff]
    %v1465 = vld [vmem:[%s1431 + $0x108] sm:$0xff]
    %v1466 = vld [vmem:[%s1431 + $0x110] sm:$0xff]
    %v1467 = vld [vmem:[%s1431 + $0x118] sm:$0xff]
    %v1468 = vld [vmem:[%s1431 + $0x120] sm:$0xff]
    %v1469 = vld [vmem:[%s1431 + $0x128] sm:$0xff]
    %v1470 = vld [vmem:[%s1431 + $0x130] sm:$0xff]
    %v1471 = vld [vmem:[%s1431 + $0x138] sm:$0xff]
    %v1472 = vld [vmem:[%s1431 + $0x140] sm:$0xff]
    %v1473 = vld [vmem:[%s1431 + $0x148] sm:$0xff]
    %v1474 = vld [vmem:[%s1431 + $0x150] sm:$0xff]
    %v1475 = vld [vmem:[%s1431 + $0x158] sm:$0xff]
    %v1476 = vld [vmem:[%s1431 + $0x160] sm:$0xff]
    %v1477 = vld [vmem:[%s1431 + $0x168] sm:$0xff]
    %v1478 = vld [vmem:[%s1431 + $0x170] sm:$0xff]
    %v1479 = vld [vmem:[%s1431 + $0x178] sm:$0xff]
    %v1480 = vld [vmem:[%s1431 + $0x180] sm:$0xff]
    %v1481 = vld [vmem:[%s1431 + $0x188] sm:$0xff]
    %v1482 = vld [vmem:[%s1431 + $0x190] sm:$0xff]
    %v1483 = vld [vmem:[%s1431 + $0x198] sm:$0xff]
    %v1484 = vld [vmem:[%s1431 + $0x1a0] sm:$0xff]
    %v1485 = vld [vmem:[%s1431 + $0x1a8] sm:$0xff]
    %v1486 = vld [vmem:[%s1431 + $0x1b0] sm:$0xff]
    %v1487 = vld [vmem:[%s1431 + $0x1b8] sm:$0xff]
    %v1488 = vld [vmem:[%s1431 + $0x1c0] sm:$0xff]
    %v1489 = vld [vmem:[%s1431 + $0x1c8] sm:$0xff]
    %v1490 = vld [vmem:[%s1431 + $0x1d0] sm:$0xff]
    %v1491 = vld [vmem:[%s1431 + $0x1d8] sm:$0xff]
    %v1492 = vld [vmem:[%s1431 + $0x1e0] sm:$0xff]
    %v1493 = vld [vmem:[%s1431 + $0x1e8] sm:$0xff]
    %v1494 = vld [vmem:[%s1431 + $0x1f0] sm:$0xff]
    %v1495 = vld [vmem:[%s1431 + $0x1f8] sm:$0xff]
    %1496 = vmatprep.subr.mxu0 %v1463
    %1497 = vmatpush1.msra.mxu0 %v1462
    %1498 = vmatprep.subr.mxu0 %v1461
    %1499 = vmatpush1.msra.mxu0 %v1460
    %1500 = vmatprep.subr.mxu0 %v1459
    %1501 = vmatpush1.msra.mxu0 %v1458
    %1502 = vmatprep.subr.mxu0 %v1457
    %1503 = vmatpush1.msra.mxu0 %v1456
    %1504 = vmatprep.subr.mxu0 %v1455
    %1505 = vmatpush1.msra.mxu0 %v1454
    %1506 = vmatprep.subr.mxu0 %v1453
    %1507 = vmatpush1.msra.mxu0 %v1452
    %1508 = vmatprep.subr.mxu0 %v1451
    %1509 = vmatpush1.msra.mxu0 %v1450
    %1510 = vmatprep.subr.mxu0 %v1449
    %1511 = vmatpush1.msra.mxu0 %v1448
    %1512 = vmatprep.subr.mxu0 %v1447
    %1513 = vmatpush1.msra.mxu0 %v1446
    %1514 = vmatprep.subr.mxu0 %v1445
    %1515 = vmatpush1.msra.mxu0 %v1444
    %1516 = vmatprep.subr.mxu0 %v1443
    %1517 = vmatpush1.msra.mxu0 %v1442
    %1518 = vmatprep.subr.mxu0 %v1441
    %1519 = vmatpush1.msra.mxu0 %v1440
    %1520 = vmatprep.subr.mxu0 %v1439
    %1521 = vmatpush1.msra.mxu0 %v1438
    %1522 = vmatprep.subr.mxu0 %v1437
    %1523 = vmatpush1.msra.mxu0 %v1436
    %1524 = vmatprep.subr.mxu0 %v1435
    %1525 = vmatpush1.msra.mxu0 %v1434
    %1526 = vmatprep.subr.mxu0 %v1433
    %1527 = vmatpush1.msra.mxu0 %v1432
    %1528 = vmatprep.subr.mxu0 %v1495
    %1529 = vmatpush2.msra.mxu0 %v1494
    %1530 = vmatprep.subr.mxu0 %v1493
    %1531 = vmatpush2.msra.mxu0 %v1492
    %1532 = vmatprep.subr.mxu0 %v1491
    %1533 = vmatpush2.msra.mxu0 %v1490
    %1534 = vmatprep.subr.mxu0 %v1489
    %1535 = vmatpush2.msra.mxu0 %v1488
    %1536 = vmatprep.subr.mxu0 %v1487
    %1537 = vmatpush2.msra.mxu0 %v1486
    %1538 = vmatprep.subr.mxu0 %v1485
    %1539 = vmatpush2.msra.mxu0 %v1484
    %1540 = vmatprep.subr.mxu0 %v1483
    %1541 = vmatpush2.msra.mxu0 %v1482
    %1542 = vmatprep.subr.mxu0 %v1481
    %1543 = vmatpush2.msra.mxu0 %v1480
    %1544 = vmatprep.subr.mxu0 %v1479
    %1545 = vmatpush2.msra.mxu0 %v1478
    %1546 = vmatprep.subr.mxu0 %v1477
    %1547 = vmatpush2.msra.mxu0 %v1476
    %1548 = vmatprep.subr.mxu0 %v1475
    %1549 = vmatpush2.msra.mxu0 %v1474
    %1550 = vmatprep.subr.mxu0 %v1473
    %1551 = vmatpush2.msra.mxu0 %v1472
    %1552 = vmatprep.subr.mxu0 %v1471
    %1553 = vmatpush2.msra.mxu0 %v1470
    %1554 = vmatprep.subr.mxu0 %v1469
    %1555 = vmatpush2.msra.mxu0 %v1468
    %1556 = vmatprep.subr.mxu0 %v1467
    %1557 = vmatpush2.msra.mxu0 %v1466
    %1558 = vmatprep.subr.mxu0 %v1465
    %1559 = vmatpush2.msra.mxu0 %v1464
    %1560 = vmatprep.mubr.f32.mxu0 %v482
    %1561 = vmatmul.mubr.f32.gmra.mxu0 %v481
    %v1562 = vpop.f32.mrf.mxu0
    %v1563 = vadd.f32 0.0, %v1562
    %v1564 = vpop.f32.mrf.mxu0
    %v1565 = vadd.f32 0.0, %v1564
    %1566 = vmatprep.mubr.f32.mxu0 %v484
    %1567 = vmatmul.mubr.f32.gmra.mxu0 %v483
    %v1568 = vpop.f32.mrf.mxu0
    %v1569 = vadd.f32 0.0, %v1568
    %v1570 = vpop.f32.mrf.mxu0
    %v1571 = vadd.f32 0.0, %v1570
    %1572 = vmatprep.mubr.f32.mxu0 %v486
    %1573 = vmatmul.mubr.f32.gmra.mxu0 %v485
    %v1574 = vpop.f32.mrf.mxu0
    %v1575 = vadd.f32 0.0, %v1574
    %v1576 = vpop.f32.mrf.mxu0
    %v1577 = vadd.f32 0.0, %v1576
    %1578 = vmatprep.mubr.f32.mxu0 %v488
    %1579 = vmatmul.mubr.f32.gmra.mxu0 %v487
    %v1580 = vpop.f32.mrf.mxu0
    %v1581 = vadd.f32 0.0, %v1580
    %v1582 = vpop.f32.mrf.mxu0
    %v1583 = vadd.f32 0.0, %v1582
    %1584 = vmatprep.mubr.f32.mxu0 %v490
    %1585 = vmatmul.mubr.f32.gmra.mxu0 %v489
    %v1586 = vpop.f32.mrf.mxu0
    %v1587 = vadd.f32 0.0, %v1586
    %v1588 = vpop.f32.mrf.mxu0
    %v1589 = vadd.f32 0.0, %v1588
    %1590 = vmatprep.mubr.f32.mxu0 %v492
    %1591 = vmatmul.mubr.f32.gmra.mxu0 %v491
    %v1592 = vpop.f32.mrf.mxu0
    %v1593 = vadd.f32 0.0, %v1592
    %v1594 = vpop.f32.mrf.mxu0
    %v1595 = vadd.f32 0.0, %v1594
    %1596 = vmatprep.mubr.f32.mxu0 %v494
    %1597 = vmatmul.mubr.f32.gmra.mxu0 %v493
    %v1598 = vpop.f32.mrf.mxu0
    %v1599 = vadd.f32 0.0, %v1598
    %v1600 = vpop.f32.mrf.mxu0
    %v1601 = vadd.f32 0.0, %v1600
    %1602 = vmatprep.mubr.f32.mxu0 %v1430
    %1603 = vmatmul.mubr.f32.gmra.mxu0 %v1429
    %v1604 = vpop.f32.mrf.mxu0
    %v1605 = vadd.f32 0.0, %v1604
    %v1606 = vpop.f32.mrf.mxu0
    %v1607 = vadd.f32 0.0, %v1606
    %1608 = vdwg.mxu0
    %v1609 = vadd.f32 %v1413, %v1563
    %v1610 = vadd.f32 %v1414, %v1565
    %v1611 = vadd.f32 %v1415, %v1569
    %v1612 = vadd.f32 %v1416, %v1571
    %v1613 = vadd.f32 %v1417, %v1575
    %v1614 = vadd.f32 %v1418, %v1577
    %v1615 = vadd.f32 %v1419, %v1581
    %v1616 = vadd.f32 %v1420, %v1583
    %v1617 = vadd.f32 %v1421, %v1587
    %v1618 = vadd.f32 %v1422, %v1589
    %v1619 = vadd.f32 %v1423, %v1593
    %v1620 = vadd.f32 %v1424, %v1595
    %v1621 = vadd.f32 %v1425, %v1599
    %v1622 = vadd.f32 %v1426, %v1601
    %v1623 = vadd.f32 %v1427, %v1605
    %v1624 = vadd.f32 %v1428, %v1607
    %v1625 = vld [vmem:[%s2] sm:$0x3]
    %v1627 = vlaneseq
    %v1628 = vshrl.u32 %v1627, 7
    %v1629 = vsub.s32 0, %v1628
    %v1630 = vrot.slane %v1625, %v1629
    %v1631 = vlaneseq
    %v1632 = vshrl.u32 %v1631, 7
    %v1633 = vsub.s32 1, %v1632
    %v1634 = vrot.slane %v1625, %v1633
    %v1637 = vadd.f32 %v1609, %v1630
    %v1638 = vadd.f32 %v1610, %v1634
    %v1639 = vadd.f32 %v1611, %v1630
    %v1640 = vadd.f32 %v1612, %v1634
    %v1641 = vadd.f32 %v1613, %v1630
    %v1642 = vadd.f32 %v1614, %v1634
    %v1643 = vadd.f32 %v1615, %v1630
    %v1644 = vadd.f32 %v1616, %v1634
    %v1645 = vadd.f32 %v1617, %v1630
    %v1646 = vadd.f32 %v1618, %v1634
    %v1647 = vadd.f32 %v1619, %v1630
    %v1648 = vadd.f32 %v1620, %v1634
    %v1649 = vadd.f32 %v1621, %v1630
    %v1650 = vadd.f32 %v1622, %v1634
    %v1651 = vadd.f32 %v1623, %v1630
    %v1652 = vadd.f32 %v1624, %v1634
    %v1653 = vmax.f32 %v1637, 0.0
    %v1654 = vmax.f32 %v1638, 0.0
    %v1655 = vmax.f32 %v1639, 0.0
    %v1656 = vmax.f32 %v1640, 0.0
    %v1657 = vmax.f32 %v1641, 0.0
    %v1658 = vmax.f32 %v1642, 0.0
    %v1659 = vmax.f32 %v1643, 0.0
    %v1660 = vmax.f32 %v1644, 0.0
    %v1661 = vmax.f32 %v1645, 0.0
    %v1662 = vmax.f32 %v1646, 0.0
    %v1663 = vmax.f32 %v1647, 0.0
    %v1664 = vmax.f32 %v1648, 0.0
    %v1665 = vmax.f32 %v1649, 0.0
    %v1666 = vmax.f32 %v1650, 0.0
    %v1667 = vmax.f32 %v1651, 0.0
    %v1668 = vmax.f32 %v1652, 0.0
    %1669 = vst [vmem:[#allocation2] sm:$0xff] %v1653
    %1670 = vst [vmem:[#allocation2 + $0x8] sm:$0xff] %v1654
    %1671 = vst [vmem:[#allocation2 + $0x10] sm:$0xff] %v1655
    %1672 = vst [vmem:[#allocation2 + $0x18] sm:$0xff] %v1656
    %1673 = vst [vmem:[#allocation2 + $0x20] sm:$0xff] %v1657
    %1674 = vst [vmem:[#allocation2 + $0x28] sm:$0xff] %v1658
    %1675 = vst [vmem:[#allocation2 + $0x30] sm:$0xff] %v1659
    %1676 = vst [vmem:[#allocation2 + $0x38] sm:$0xff] %v1660
    %1677 = vst [vmem:[#allocation2 + $0x40] sm:$0xff] %v1661
    %1678 = vst [vmem:[#allocation2 + $0x48] sm:$0xff] %v1662
    %1679 = vst [vmem:[#allocation2 + $0x50] sm:$0xff] %v1663
    %1680 = vst [vmem:[#allocation2 + $0x58] sm:$0xff] %v1664
    %1681 = vst [vmem:[#allocation2 + $0x60] sm:$0xff] %v1665
    %1682 = vst [vmem:[#allocation2 + $0x68] sm:$0xff] %v1666
    %1683 = vst [vmem:[#allocation2 + $0x70] sm:$0xff] %v1667
    %1684 = vst [vmem:[#allocation2 + $0x78] sm:$0xff] %v1668
    %v1685 = vld [vmem:[#allocation2] sm:$0xff]
    %v1686 = vld [vmem:[#allocation2 + $0x8] sm:$0xff]
    %v1687 = vld [vmem:[#allocation2 + $0x10] sm:$0xff]
    %v1688 = vld [vmem:[#allocation2 + $0x18] sm:$0xff]
    %v1689 = vld [vmem:[#allocation2 + $0x20] sm:$0xff]
    %v1690 = vld [vmem:[#allocation2 + $0x28] sm:$0xff]
    %v1691 = vld [vmem:[#allocation2 + $0x30] sm:$0xff]
    %v1692 = vld [vmem:[#allocation2 + $0x38] sm:$0xff]
    %v1693 = vld [vmem:[#allocation2 + $0x40] sm:$0xff]
    %v1694 = vld [vmem:[#allocation2 + $0x48] sm:$0xff]
    %v1695 = vld [vmem:[#allocation2 + $0x50] sm:$0xff]
    %v1696 = vld [vmem:[#allocation2 + $0x58] sm:$0xff]
    %v1697 = vld [vmem:[#allocation2 + $0x60] sm:$0xff]
    %v1698 = vld [vmem:[#allocation2 + $0x68] sm:$0xff]
    %v1699 = vld [vmem:[#allocation2 + $0x70] sm:$0xff]
    %v1700 = vld [vmem:[#allocation2 + $0x78] sm:$0xff]
    %v1701 = vld [vmem:[#allocation2] sm:$0xfc]
    %v1702 = vld [vmem:[#allocation2 + $0x8] sm:$0xfc]
    %v1703 = vld [vmem:[#allocation2 + $0x80] sm:$0x3]
    %v1704 = vld [vmem:[#allocation2 + $0x88] sm:$0x3]
    %v1723 = vrot.slane %v1701, 2
    %v1724 = vrot.slane %v1687, 2
    %v1725 = vsel %vm646, %v1723, %v1724
    %v1726 = vrot.slane %v1702, 2
    %v1727 = vrot.slane %v1688, 2
    %v1728 = vsel %vm646, %v1726, %v1727
    %v1729 = vrot.slane %v1689, 2
    %v1730 = vsel %vm646, %v1724, %v1729
    %v1731 = vrot.slane %v1690, 2
    %v1732 = vsel %vm646, %v1727, %v1731
    %v1733 = vrot.slane %v1691, 2
    %v1734 = vsel %vm646, %v1729, %v1733
    %v1735 = vrot.slane %v1692, 2
    %v1736 = vsel %vm646, %v1731, %v1735
    %v1737 = vrot.slane %v1693, 2
    %v1738 = vsel %vm646, %v1733, %v1737
    %v1739 = vrot.slane %v1694, 2
    %v1740 = vsel %vm646, %v1735, %v1739
    %v1741 = vrot.slane %v1695, 2
    %v1742 = vsel %vm646, %v1737, %v1741
    %v1743 = vrot.slane %v1696, 2
    %v1744 = vsel %vm646, %v1739, %v1743
    %v1745 = vrot.slane %v1697, 2
    %v1746 = vsel %vm646, %v1741, %v1745
    %v1747 = vrot.slane %v1698, 2
    %v1748 = vsel %vm646, %v1743, %v1747
    %v1749 = vrot.slane %v1699, 2
    %v1750 = vsel %vm646, %v1745, %v1749
    %v1751 = vrot.slane %v1700, 2
    %v1752 = vsel %vm646, %v1747, %v1751
    %v1753 = vrot.slane %v1703, 2
    %v1754 = vsel %vm646, %v1749, %v1753
    %v1755 = vrot.slane %v1704, 2
    %v1756 = vsel %vm646, %v1751, %v1755
    %v1773 = vmax.f32 %v1685, %v1725
    %v1774 = vmax.f32 %v1686, %v1728
    %v1775 = vmax.f32 %v1687, %v1730
    %v1776 = vmax.f32 %v1688, %v1732
    %v1777 = vmax.f32 %v1689, %v1734
    %v1778 = vmax.f32 %v1690, %v1736
    %v1779 = vmax.f32 %v1691, %v1738
    %v1780 = vmax.f32 %v1692, %v1740
    %v1781 = vmax.f32 %v1693, %v1742
    %v1782 = vmax.f32 %v1694, %v1744
    %v1783 = vmax.f32 %v1695, %v1746
    %v1784 = vmax.f32 %v1696, %v1748
    %v1785 = vmax.f32 %v1697, %v1750
    %v1786 = vmax.f32 %v1698, %v1752
    %v1787 = vmax.f32 %v1699, %v1754
    %v1788 = vmax.f32 %v1700, %v1756
    %1789 = vmatprep.subr.mxu0 %v236
    %1790 = vmatpush1.msra.mxu0 %v235
    %1791 = vmatprep.subr.mxu0 %v234
    %1792 = vmatpush1.msra.mxu0 %v233
    %1793 = vmatprep.subr.mxu0 %v232
    %1794 = vmatpush1.msra.mxu0 %v231
    %1795 = vmatprep.subr.mxu0 %v230
    %1796 = vmatpush1.msra.mxu0 %v229
    %1797 = vmatprep.subr.mxu0 %v228
    %1798 = vmatpush1.msra.mxu0 %v227
    %1799 = vmatprep.subr.mxu0 %v226
    %1800 = vmatpush1.msra.mxu0 %v225
    %1801 = vmatprep.subr.mxu0 %v224
    %1802 = vmatpush1.msra.mxu0 %v223
    %1803 = vmatprep.subr.mxu0 %v222
    %1804 = vmatpush1.msra.mxu0 %v221
    %1805 = vmatprep.subr.mxu0 %v220
    %1806 = vmatpush1.msra.mxu0 %v219
    %1807 = vmatprep.subr.mxu0 %v218
    %1808 = vmatpush1.msra.mxu0 %v217
    %1809 = vmatprep.subr.mxu0 %v216
    %1810 = vmatpush1.msra.mxu0 %v215
    %1811 = vmatprep.subr.mxu0 %v214
    %1812 = vmatpush1.msra.mxu0 %v213
    %1813 = vmatprep.subr.mxu0 %v212
    %1814 = vmatpush1.msra.mxu0 %v211
    %1815 = vmatprep.subr.mxu0 %v210
    %1816 = vmatpush1.msra.mxu0 %v209
    %1817 = vmatprep.subr.mxu0 %v208
    %1818 = vmatpush1.msra.mxu0 %v207
    %1819 = vmatprep.subr.mxu0 %v206
    %1820 = vmatpush1.msra.mxu0 %v205
    %1821 = vmatprep.subr.mxu0 %v268
    %1822 = vmatpush2.msra.mxu0 %v267
    %1823 = vmatprep.subr.mxu0 %v266
    %1824 = vmatpush2.msra.mxu0 %v265
    %1825 = vmatprep.subr.mxu0 %v264
    %1826 = vmatpush2.msra.mxu0 %v263
    %1827 = vmatprep.subr.mxu0 %v262
    %1828 = vmatpush2.msra.mxu0 %v261
    %1829 = vmatprep.subr.mxu0 %v260
    %1830 = vmatpush2.msra.mxu0 %v259
    %1831 = vmatprep.subr.mxu0 %v258
    %1832 = vmatpush2.msra.mxu0 %v257
    %1833 = vmatprep.subr.mxu0 %v256
    %1834 = vmatpush2.msra.mxu0 %v255
    %1835 = vmatprep.subr.mxu0 %v254
    %1836 = vmatpush2.msra.mxu0 %v253
    %1837 = vmatprep.subr.mxu0 %v252
    %1838 = vmatpush2.msra.mxu0 %v251
    %1839 = vmatprep.subr.mxu0 %v250
    %1840 = vmatpush2.msra.mxu0 %v249
    %1841 = vmatprep.subr.mxu0 %v248
    %1842 = vmatpush2.msra.mxu0 %v247
    %1843 = vmatprep.subr.mxu0 %v246
    %1844 = vmatpush2.msra.mxu0 %v245
    %1845 = vmatprep.subr.mxu0 %v244
    %1846 = vmatpush2.msra.mxu0 %v243
    %1847 = vmatprep.subr.mxu0 %v242
    %1848 = vmatpush2.msra.mxu0 %v241
    %1849 = vmatprep.subr.mxu0 %v240
    %1850 = vmatpush2.msra.mxu0 %v239
    %1851 = vmatprep.subr.mxu0 %v238
    %1852 = vmatpush2.msra.mxu0 %v237
    %1853 = vmatprep.mubr.f32.mxu0 %v1774
    %1854 = vmatmul.mubr.f32.gmra.mxu0 %v1773
    %v1855 = vpop.f32.mrf.mxu0
    %v1856 = vadd.f32 0.0, %v1855
    %v1857 = vpop.f32.mrf.mxu0
    %v1858 = vadd.f32 0.0, %v1857
    %1859 = vmatprep.mubr.f32.mxu0 %v1776
    %1860 = vmatmul.mubr.f32.gmra.mxu0 %v1775
    %v1861 = vpop.f32.mrf.mxu0
    %v1862 = vadd.f32 0.0, %v1861
    %v1863 = vpop.f32.mrf.mxu0
    %v1864 = vadd.f32 0.0, %v1863
    %1865 = vmatprep.mubr.f32.mxu0 %v1778
    %1866 = vmatmul.mubr.f32.gmra.mxu0 %v1777
    %v1867 = vpop.f32.mrf.mxu0
    %v1868 = vadd.f32 0.0, %v1867
    %v1869 = vpop.f32.mrf.mxu0
    %v1870 = vadd.f32 0.0, %v1869
    %1871 = vmatprep.mubr.f32.mxu0 %v1780
    %1872 = vmatmul.mubr.f32.gmra.mxu0 %v1779
    %v1873 = vpop.f32.mrf.mxu0
    %v1874 = vadd.f32 0.0, %v1873
    %v1875 = vpop.f32.mrf.mxu0
    %v1876 = vadd.f32 0.0, %v1875
    %1877 = vmatprep.mubr.f32.mxu0 %v1782
    %1878 = vmatmul.mubr.f32.gmra.mxu0 %v1781
    %v1879 = vpop.f32.mrf.mxu0
    %v1880 = vadd.f32 0.0, %v1879
    %v1881 = vpop.f32.mrf.mxu0
    %v1882 = vadd.f32 0.0, %v1881
    %1883 = vmatprep.mubr.f32.mxu0 %v1784
    %1884 = vmatmul.mubr.f32.gmra.mxu0 %v1783
    %v1885 = vpop.f32.mrf.mxu0
    %v1886 = vadd.f32 0.0, %v1885
    %v1887 = vpop.f32.mrf.mxu0
    %v1888 = vadd.f32 0.0, %v1887
    %1889 = vmatprep.mubr.f32.mxu0 %v1786
    %1890 = vmatmul.mubr.f32.gmra.mxu0 %v1785
    %v1891 = vpop.f32.mrf.mxu0
    %v1892 = vadd.f32 0.0, %v1891
    %v1893 = vpop.f32.mrf.mxu0
    %v1894 = vadd.f32 0.0, %v1893
    %1895 = vmatprep.mubr.f32.mxu0 %v1788
    %1896 = vmatmul.mubr.f32.gmra.mxu0 %v1787
    %v1897 = vpop.f32.mrf.mxu0
    %v1898 = vadd.f32 0.0, %v1897
    %v1899 = vpop.f32.mrf.mxu0
    %v1900 = vadd.f32 0.0, %v1899
    %1901 = vdwg.mxu0
    %v1902 = vmax.f32 %v1773, %v1856
    %v1903 = vmax.f32 %v1774, %v1858
    %v1904 = vmax.f32 %v1775, %v1862
    %v1905 = vmax.f32 %v1776, %v1864
    %v1906 = vmax.f32 %v1777, %v1868
    %v1907 = vmax.f32 %v1778, %v1870
    %v1908 = vmax.f32 %v1779, %v1874
    %v1909 = vmax.f32 %v1780, %v1876
    %v1910 = vmax.f32 %v1781, %v1880
    %v1911 = vmax.f32 %v1782, %v1882
    %v1912 = vmax.f32 %v1783, %v1886
    %v1913 = vmax.f32 %v1784, %v1888
    %v1914 = vmax.f32 %v1785, %v1892
    %v1915 = vmax.f32 %v1786, %v1894
    %v1916 = vmax.f32 %v1787, %v1898
    %v1917 = vmax.f32 %v1788, %v1900
    %1918 = vst [vmem:[#allocation3] sm:$0xff] %v1902
    %1919 = vst [vmem:[#allocation3 + $0x8] sm:$0xff] %v1903
    %1920 = vst [vmem:[#allocation3 + $0x10] sm:$0xff] %v1904
    %1921 = vst [vmem:[#allocation3 + $0x18] sm:$0xff] %v1905
    %1922 = vst [vmem:[#allocation3 + $0x20] sm:$0xff] %v1906
    %1923 = vst [vmem:[#allocation3 + $0x28] sm:$0xff] %v1907
    %1924 = vst [vmem:[#allocation3 + $0x30] sm:$0xff] %v1908
    %1925 = vst [vmem:[#allocation3 + $0x38] sm:$0xff] %v1909
    %1926 = vst [vmem:[#allocation3 + $0x40] sm:$0xff] %v1910
    %1927 = vst [vmem:[#allocation3 + $0x48] sm:$0xff] %v1911
    %1928 = vst [vmem:[#allocation3 + $0x50] sm:$0xff] %v1912
    %1929 = vst [vmem:[#allocation3 + $0x58] sm:$0xff] %v1913
    %1930 = vst [vmem:[#allocation3 + $0x60] sm:$0xff] %v1914
    %1931 = vst [vmem:[#allocation3 + $0x68] sm:$0xff] %v1915
    %1932 = vst [vmem:[#allocation3 + $0x70] sm:$0xff] %v1916
    %1933 = vst [vmem:[#allocation3 + $0x78] sm:$0xff] %v1917
    %v1934 = vld [vmem:[#allocation3] sm:$0xff]
    %v1935 = vld [vmem:[#allocation3 + $0x8] sm:$0xff]
    %v1936 = vld [vmem:[#allocation3 + $0x10] sm:$0xff]
    %v1937 = vld [vmem:[#allocation3 + $0x18] sm:$0xff]
    %v1938 = vld [vmem:[#allocation3 + $0x20] sm:$0xff]
    %v1939 = vld [vmem:[#allocation3 + $0x28] sm:$0xff]
    %v1940 = vld [vmem:[#allocation3 + $0x30] sm:$0xff]
    %v1941 = vld [vmem:[#allocation3 + $0x38] sm:$0xff]
    %v1942 = vld [vmem:[#allocation3 + $0x40] sm:$0xff]
    %v1943 = vld [vmem:[#allocation3 + $0x48] sm:$0xff]
    %v1944 = vld [vmem:[#allocation3 + $0x50] sm:$0xff]
    %v1945 = vld [vmem:[#allocation3 + $0x58] sm:$0xff]
    %v1946 = vld [vmem:[#allocation3 + $0x60] sm:$0xff]
    %v1947 = vld [vmem:[#allocation3 + $0x68] sm:$0xff]
    %v1948 = vld [vmem:[#allocation3 + $0x70] sm:$0xff]
    %v1949 = vld [vmem:[#allocation3 + $0x78] sm:$0xff]
    %v1950 = vld [vmem:[%s3] sm:$0xff]
    %v1951 = vld [vmem:[%s3 + $0x8] sm:$0xff]
    %v1952 = vld [vmem:[%s3 + $0x10] sm:$0xff]
    %v1953 = vld [vmem:[%s3 + $0x18] sm:$0xff]
    %v1954 = vld [vmem:[%s3 + $0x20] sm:$0xff]
    %v1955 = vld [vmem:[%s3 + $0x28] sm:$0xff]
    %v1956 = vld [vmem:[%s3 + $0x30] sm:$0xff]
    %v1957 = vld [vmem:[%s3 + $0x38] sm:$0xff]
    %v1958 = vld [vmem:[%s3 + $0x40] sm:$0xff]
    %v1959 = vld [vmem:[%s3 + $0x48] sm:$0xff]
    %v1960 = vld [vmem:[%s3 + $0x50] sm:$0xff]
    %v1961 = vld [vmem:[%s3 + $0x58] sm:$0xff]
    %v1962 = vld [vmem:[%s3 + $0x60] sm:$0xff]
    %v1963 = vld [vmem:[%s3 + $0x68] sm:$0xff]
    %v1964 = vld [vmem:[%s3 + $0x70] sm:$0xff]
    %v1965 = vld [vmem:[%s3 + $0x78] sm:$0xff]
    %v1966 = vld [vmem:[%s3 + $0x80] sm:$0xff]
    %v1967 = vld [vmem:[%s3 + $0x88] sm:$0xff]
    %v1968 = vld [vmem:[%s3 + $0x90] sm:$0xff]
    %v1969 = vld [vmem:[%s3 + $0x98] sm:$0xff]
    %v1970 = vld [vmem:[%s3 + $0xa0] sm:$0xff]
    %v1971 = vld [vmem:[%s3 + $0xa8] sm:$0xff]
    %v1972 = vld [vmem:[%s3 + $0xb0] sm:$0xff]
    %v1973 = vld [vmem:[%s3 + $0xb8] sm:$0xff]
    %v1974 = vld [vmem:[%s3 + $0xc0] sm:$0xff]
    %v1975 = vld [vmem:[%s3 + $0xc8] sm:$0xff]
    %v1976 = vld [vmem:[%s3 + $0xd0] sm:$0xff]
    %v1977 = vld [vmem:[%s3 + $0xd8] sm:$0xff]
    %v1978 = vld [vmem:[%s3 + $0xe0] sm:$0xff]
    %v1979 = vld [vmem:[%s3 + $0xe8] sm:$0xff]
    %v1980 = vld [vmem:[%s3 + $0xf0] sm:$0xff]
    %v1981 = vld [vmem:[%s3 + $0xf8] sm:$0xff]
    %v1982 = vld [vmem:[%s3 + $0x100] sm:$0xff]
    %v1983 = vld [vmem:[%s3 + $0x108] sm:$0xff]
    %v1984 = vld [vmem:[%s3 + $0x110] sm:$0xff]
    %v1985 = vld [vmem:[%s3 + $0x118] sm:$0xff]
    %v1986 = vld [vmem:[%s3 + $0x120] sm:$0xff]
    %v1987 = vld [vmem:[%s3 + $0x128] sm:$0xff]
    %v1988 = vld [vmem:[%s3 + $0x130] sm:$0xff]
    %v1989 = vld [vmem:[%s3 + $0x138] sm:$0xff]
    %v1990 = vld [vmem:[%s3 + $0x140] sm:$0xff]
    %v1991 = vld [vmem:[%s3 + $0x148] sm:$0xff]
    %v1992 = vld [vmem:[%s3 + $0x150] sm:$0xff]
    %v1993 = vld [vmem:[%s3 + $0x158] sm:$0xff]
    %v1994 = vld [vmem:[%s3 + $0x160] sm:$0xff]
    %v1995 = vld [vmem:[%s3 + $0x168] sm:$0xff]
    %v1996 = vld [vmem:[%s3 + $0x170] sm:$0xff]
    %v1997 = vld [vmem:[%s3 + $0x178] sm:$0xff]
    %v1998 = vld [vmem:[%s3 + $0x180] sm:$0xff]
    %v1999 = vld [vmem:[%s3 + $0x188] sm:$0xff]
    %v2000 = vld [vmem:[%s3 + $0x190] sm:$0xff]
    %v2001 = vld [vmem:[%s3 + $0x198] sm:$0xff]
    %v2002 = vld [vmem:[%s3 + $0x1a0] sm:$0xff]
    %v2003 = vld [vmem:[%s3 + $0x1a8] sm:$0xff]
    %v2004 = vld [vmem:[%s3 + $0x1b0] sm:$0xff]
    %v2005 = vld [vmem:[%s3 + $0x1b8] sm:$0xff]
    %v2006 = vld [vmem:[%s3 + $0x1c0] sm:$0xff]
    %v2007 = vld [vmem:[%s3 + $0x1c8] sm:$0xff]
    %v2008 = vld [vmem:[%s3 + $0x1d0] sm:$0xff]
    %v2009 = vld [vmem:[%s3 + $0x1d8] sm:$0xff]
    %v2010 = vld [vmem:[%s3 + $0x1e0] sm:$0xff]
    %v2011 = vld [vmem:[%s3 + $0x1e8] sm:$0xff]
    %v2012 = vld [vmem:[%s3 + $0x1f0] sm:$0xff]
    %v2013 = vld [vmem:[%s3 + $0x1f8] sm:$0xff]
    %v2014 = vld [vmem:[#allocation3] sm:$0xf0]
    %v2015 = vld [vmem:[#allocation3 + $0x8] sm:$0xf0]
    %v2016 = vld [vmem:[#allocation3 + $0x80] sm:$0xf]
    %v2017 = vld [vmem:[#allocation3 + $0x88] sm:$0xf]
    %s2018 = scalar_lea.vmem %s3, 512
    %v2019 = vld [vmem:[%s2018] sm:$0xff]
    %v2020 = vld [vmem:[%s2018 + $0x8] sm:$0xff]
    %v2021 = vld [vmem:[%s2018 + $0x10] sm:$0xff]
    %v2022 = vld [vmem:[%s2018 + $0x18] sm:$0xff]
    %v2023 = vld [vmem:[%s2018 + $0x20] sm:$0xff]
    %v2024 = vld [vmem:[%s2018 + $0x28] sm:$0xff]
    %v2025 = vld [vmem:[%s2018 + $0x30] sm:$0xff]
    %v2026 = vld [vmem:[%s2018 + $0x38] sm:$0xff]
    %v2027 = vld [vmem:[%s2018 + $0x40] sm:$0xff]
    %v2028 = vld [vmem:[%s2018 + $0x48] sm:$0xff]
    %v2029 = vld [vmem:[%s2018 + $0x50] sm:$0xff]
    %v2030 = vld [vmem:[%s2018 + $0x58] sm:$0xff]
    %v2031 = vld [vmem:[%s2018 + $0x60] sm:$0xff]
    %v2032 = vld [vmem:[%s2018 + $0x68] sm:$0xff]
    %v2033 = vld [vmem:[%s2018 + $0x70] sm:$0xff]
    %v2034 = vld [vmem:[%s2018 + $0x78] sm:$0xff]
    %v2035 = vld [vmem:[%s2018 + $0x80] sm:$0xff]
    %v2036 = vld [vmem:[%s2018 + $0x88] sm:$0xff]
    %v2037 = vld [vmem:[%s2018 + $0x90] sm:$0xff]
    %v2038 = vld [vmem:[%s2018 + $0x98] sm:$0xff]
    %v2039 = vld [vmem:[%s2018 + $0xa0] sm:$0xff]
    %v2040 = vld [vmem:[%s2018 + $0xa8] sm:$0xff]
    %v2041 = vld [vmem:[%s2018 + $0xb0] sm:$0xff]
    %v2042 = vld [vmem:[%s2018 + $0xb8] sm:$0xff]
    %v2043 = vld [vmem:[%s2018 + $0xc0] sm:$0xff]
    %v2044 = vld [vmem:[%s2018 + $0xc8] sm:$0xff]
    %v2045 = vld [vmem:[%s2018 + $0xd0] sm:$0xff]
    %v2046 = vld [vmem:[%s2018 + $0xd8] sm:$0xff]
    %v2047 = vld [vmem:[%s2018 + $0xe0] sm:$0xff]
    %v2048 = vld [vmem:[%s2018 + $0xe8] sm:$0xff]
    %v2049 = vld [vmem:[%s2018 + $0xf0] sm:$0xff]
    %v2050 = vld [vmem:[%s2018 + $0xf8] sm:$0xff]
    %v2051 = vld [vmem:[%s2018 + $0x100] sm:$0xff]
    %v2052 = vld [vmem:[%s2018 + $0x108] sm:$0xff]
    %v2053 = vld [vmem:[%s2018 + $0x110] sm:$0xff]
    %v2054 = vld [vmem:[%s2018 + $0x118] sm:$0xff]
    %v2055 = vld [vmem:[%s2018 + $0x120] sm:$0xff]
    %v2056 = vld [vmem:[%s2018 + $0x128] sm:$0xff]
    %v2057 = vld [vmem:[%s2018 + $0x130] sm:$0xff]
    %v2058 = vld [vmem:[%s2018 + $0x138] sm:$0xff]
    %v2059 = vld [vmem:[%s2018 + $0x140] sm:$0xff]
    %v2060 = vld [vmem:[%s2018 + $0x148] sm:$0xff]
    %v2061 = vld [vmem:[%s2018 + $0x150] sm:$0xff]
    %v2062 = vld [vmem:[%s2018 + $0x158] sm:$0xff]
    %v2063 = vld [vmem:[%s2018 + $0x160] sm:$0xff]
    %v2064 = vld [vmem:[%s2018 + $0x168] sm:$0xff]
    %v2065 = vld [vmem:[%s2018 + $0x170] sm:$0xff]
    %v2066 = vld [vmem:[%s2018 + $0x178] sm:$0xff]
    %v2067 = vld [vmem:[%s2018 + $0x180] sm:$0xff]
    %v2068 = vld [vmem:[%s2018 + $0x188] sm:$0xff]
    %v2069 = vld [vmem:[%s2018 + $0x190] sm:$0xff]
    %v2070 = vld [vmem:[%s2018 + $0x198] sm:$0xff]
    %v2071 = vld [vmem:[%s2018 + $0x1a0] sm:$0xff]
    %v2072 = vld [vmem:[%s2018 + $0x1a8] sm:$0xff]
    %v2073 = vld [vmem:[%s2018 + $0x1b0] sm:$0xff]
    %v2074 = vld [vmem:[%s2018 + $0x1b8] sm:$0xff]
    %v2075 = vld [vmem:[%s2018 + $0x1c0] sm:$0xff]
    %v2076 = vld [vmem:[%s2018 + $0x1c8] sm:$0xff]
    %v2077 = vld [vmem:[%s2018 + $0x1d0] sm:$0xff]
    %v2078 = vld [vmem:[%s2018 + $0x1d8] sm:$0xff]
    %v2079 = vld [vmem:[%s2018 + $0x1e0] sm:$0xff]
    %v2080 = vld [vmem:[%s2018 + $0x1e8] sm:$0xff]
    %v2081 = vld [vmem:[%s2018 + $0x1f0] sm:$0xff]
    %v2082 = vld [vmem:[%s2018 + $0x1f8] sm:$0xff]
    %v2101 = vrot.slane %v2014, 4
    %v2102 = vrot.slane %v1936, 4
    %v2103 = vsel %vm996, %v2101, %v2102
    %v2104 = vrot.slane %v2015, 4
    %v2105 = vrot.slane %v1937, 4
    %v2106 = vsel %vm996, %v2104, %v2105
    %v2107 = vrot.slane %v1938, 4
    %v2108 = vsel %vm996, %v2102, %v2107
    %v2109 = vrot.slane %v1939, 4
    %v2110 = vsel %vm996, %v2105, %v2109
    %v2111 = vrot.slane %v1940, 4
    %v2112 = vsel %vm996, %v2107, %v2111
    %v2113 = vrot.slane %v1941, 4
    %v2114 = vsel %vm996, %v2109, %v2113
    %v2115 = vrot.slane %v1942, 4
    %v2116 = vsel %vm996, %v2111, %v2115
    %v2117 = vrot.slane %v1943, 4
    %v2118 = vsel %vm996, %v2113, %v2117
    %v2119 = vrot.slane %v1944, 4
    %v2120 = vsel %vm996, %v2115, %v2119
    %v2121 = vrot.slane %v1945, 4
    %v2122 = vsel %vm996, %v2117, %v2121
    %v2123 = vrot.slane %v1946, 4
    %v2124 = vsel %vm996, %v2119, %v2123
    %v2125 = vrot.slane %v1947, 4
    %v2126 = vsel %vm996, %v2121, %v2125
    %v2127 = vrot.slane %v1948, 4
    %v2128 = vsel %vm996, %v2123, %v2127
    %v2129 = vrot.slane %v1949, 4
    %v2130 = vsel %vm996, %v2125, %v2129
    %v2131 = vrot.slane %v2016, 4
    %v2132 = vsel %vm996, %v2127, %v2131
    %v2133 = vrot.slane %v2017, 4
    %v2134 = vsel %vm996, %v2129, %v2133
    %2151 = vmatprep.subr.mxu0 %v2050
    %2152 = vmatpush1.msra.mxu0 %v2049
    %2153 = vmatprep.subr.mxu0 %v2048
    %2154 = vmatpush1.msra.mxu0 %v2047
    %2155 = vmatprep.subr.mxu0 %v2046
    %2156 = vmatpush1.msra.mxu0 %v2045
    %2157 = vmatprep.subr.mxu0 %v2044
    %2158 = vmatpush1.msra.mxu0 %v2043
    %2159 = vmatprep.subr.mxu0 %v2042
    %2160 = vmatpush1.msra.mxu0 %v2041
    %2161 = vmatprep.subr.mxu0 %v2040
    %2162 = vmatpush1.msra.mxu0 %v2039
    %2163 = vmatprep.subr.mxu0 %v2038
    %2164 = vmatpush1.msra.mxu0 %v2037
    %2165 = vmatprep.subr.mxu0 %v2036
    %2166 = vmatpush1.msra.mxu0 %v2035
    %2167 = vmatprep.subr.mxu0 %v2034
    %2168 = vmatpush1.msra.mxu0 %v2033
    %2169 = vmatprep.subr.mxu0 %v2032
    %2170 = vmatpush1.msra.mxu0 %v2031
    %2171 = vmatprep.subr.mxu0 %v2030
    %2172 = vmatpush1.msra.mxu0 %v2029
    %2173 = vmatprep.subr.mxu0 %v2028
    %2174 = vmatpush1.msra.mxu0 %v2027
    %2175 = vmatprep.subr.mxu0 %v2026
    %2176 = vmatpush1.msra.mxu0 %v2025
    %2177 = vmatprep.subr.mxu0 %v2024
    %2178 = vmatpush1.msra.mxu0 %v2023
    %2179 = vmatprep.subr.mxu0 %v2022
    %2180 = vmatpush1.msra.mxu0 %v2021
    %2181 = vmatprep.subr.mxu0 %v2020
    %2182 = vmatpush1.msra.mxu0 %v2019
    %2183 = vmatprep.subr.mxu0 %v2082
    %2184 = vmatpush2.msra.mxu0 %v2081
    %2185 = vmatprep.subr.mxu0 %v2080
    %2186 = vmatpush2.msra.mxu0 %v2079
    %2187 = vmatprep.subr.mxu0 %v2078
    %2188 = vmatpush2.msra.mxu0 %v2077
    %2189 = vmatprep.subr.mxu0 %v2076
    %2190 = vmatpush2.msra.mxu0 %v2075
    %2191 = vmatprep.subr.mxu0 %v2074
    %2192 = vmatpush2.msra.mxu0 %v2073
    %2193 = vmatprep.subr.mxu0 %v2072
    %2194 = vmatpush2.msra.mxu0 %v2071
    %2195 = vmatprep.subr.mxu0 %v2070
    %2196 = vmatpush2.msra.mxu0 %v2069
    %2197 = vmatprep.subr.mxu0 %v2068
    %2198 = vmatpush2.msra.mxu0 %v2067
    %2199 = vmatprep.subr.mxu0 %v2066
    %2200 = vmatpush2.msra.mxu0 %v2065
    %2201 = vmatprep.subr.mxu0 %v2064
    %2202 = vmatpush2.msra.mxu0 %v2063
    %2203 = vmatprep.subr.mxu0 %v2062
    %2204 = vmatpush2.msra.mxu0 %v2061
    %2205 = vmatprep.subr.mxu0 %v2060
    %2206 = vmatpush2.msra.mxu0 %v2059
    %2207 = vmatprep.subr.mxu0 %v2058
    %2208 = vmatpush2.msra.mxu0 %v2057
    %2209 = vmatprep.subr.mxu0 %v2056
    %2210 = vmatpush2.msra.mxu0 %v2055
    %2211 = vmatprep.subr.mxu0 %v2054
    %2212 = vmatpush2.msra.mxu0 %v2053
    %2213 = vmatprep.subr.mxu0 %v2052
    %2214 = vmatpush2.msra.mxu0 %v2051
    %2215 = vmatprep.mubr.f32.mxu0 %v2106
    %2216 = vmatmul.mubr.f32.gmra.mxu0 %v2103
    %v2217 = vpop.f32.mrf.mxu0
    %v2218 = vadd.f32 0.0, %v2217
    %v2219 = vpop.f32.mrf.mxu0
    %v2220 = vadd.f32 0.0, %v2219
    %2221 = vmatprep.mubr.f32.mxu0 %v2110
    %2222 = vmatmul.mubr.f32.gmra.mxu0 %v2108
    %v2223 = vpop.f32.mrf.mxu0
    %v2224 = vadd.f32 0.0, %v2223
    %v2225 = vpop.f32.mrf.mxu0
    %v2226 = vadd.f32 0.0, %v2225
    %2227 = vmatprep.mubr.f32.mxu0 %v2114
    %2228 = vmatmul.mubr.f32.gmra.mxu0 %v2112
    %v2229 = vpop.f32.mrf.mxu0
    %v2230 = vadd.f32 0.0, %v2229
    %v2231 = vpop.f32.mrf.mxu0
    %v2232 = vadd.f32 0.0, %v2231
    %2233 = vmatprep.mubr.f32.mxu0 %v2118
    %2234 = vmatmul.mubr.f32.gmra.mxu0 %v2116
    %v2235 = vpop.f32.mrf.mxu0
    %v2236 = vadd.f32 0.0, %v2235
    %v2237 = vpop.f32.mrf.mxu0
    %v2238 = vadd.f32 0.0, %v2237
    %2239 = vmatprep.mubr.f32.mxu0 %v2122
    %2240 = vmatmul.mubr.f32.gmra.mxu0 %v2120
    %v2241 = vpop.f32.mrf.mxu0
    %v2242 = vadd.f32 0.0, %v2241
    %v2243 = vpop.f32.mrf.mxu0
    %v2244 = vadd.f32 0.0, %v2243
    %2245 = vmatprep.mubr.f32.mxu0 %v2126
    %2246 = vmatmul.mubr.f32.gmra.mxu0 %v2124
    %v2247 = vpop.f32.mrf.mxu0
    %v2248 = vadd.f32 0.0, %v2247
    %v2249 = vpop.f32.mrf.mxu0
    %v2250 = vadd.f32 0.0, %v2249
    %2251 = vmatprep.mubr.f32.mxu0 %v2130
    %2252 = vmatmul.mubr.f32.gmra.mxu0 %v2128
    %v2253 = vpop.f32.mrf.mxu0
    %v2254 = vadd.f32 0.0, %v2253
    %v2255 = vpop.f32.mrf.mxu0
    %v2256 = vadd.f32 0.0, %v2255
    %2257 = vmatprep.mubr.f32.mxu0 %v2134
    %2258 = vmatmul.mubr.f32.gmra.mxu0 %v2132
    %v2259 = vpop.f32.mrf.mxu0
    %v2260 = vadd.f32 0.0, %v2259
    %v2261 = vpop.f32.mrf.mxu0
    %v2262 = vadd.f32 0.0, %v2261
    %2263 = vdwg.mxu0
    %2264 = vmatprep.subr.mxu0 %v1981
    %2265 = vmatpush1.msra.mxu0 %v1980
    %2266 = vmatprep.subr.mxu0 %v1979
    %2267 = vmatpush1.msra.mxu0 %v1978
    %2268 = vmatprep.subr.mxu0 %v1977
    %2269 = vmatpush1.msra.mxu0 %v1976
    %2270 = vmatprep.subr.mxu0 %v1975
    %2271 = vmatpush1.msra.mxu0 %v1974
    %2272 = vmatprep.subr.mxu0 %v1973
    %2273 = vmatpush1.msra.mxu0 %v1972
    %2274 = vmatprep.subr.mxu0 %v1971
    %2275 = vmatpush1.msra.mxu0 %v1970
    %2276 = vmatprep.subr.mxu0 %v1969
    %2277 = vmatpush1.msra.mxu0 %v1968
    %2278 = vmatprep.subr.mxu0 %v1967
    %2279 = vmatpush1.msra.mxu0 %v1966
    %2280 = vmatprep.subr.mxu0 %v1965
    %2281 = vmatpush1.msra.mxu0 %v1964
    %2282 = vmatprep.subr.mxu0 %v1963
    %2283 = vmatpush1.msra.mxu0 %v1962
    %2284 = vmatprep.subr.mxu0 %v1961
    %2285 = vmatpush1.msra.mxu0 %v1960
    %2286 = vmatprep.subr.mxu0 %v1959
    %2287 = vmatpush1.msra.mxu0 %v1958
    %2288 = vmatprep.subr.mxu0 %v1957
    %2289 = vmatpush1.msra.mxu0 %v1956
    %2290 = vmatprep.subr.mxu0 %v1955
    %2291 = vmatpush1.msra.mxu0 %v1954
    %2292 = vmatprep.subr.mxu0 %v1953
    %2293 = vmatpush1.msra.mxu0 %v1952
    %2294 = vmatprep.subr.mxu0 %v1951
    %2295 = vmatpush1.msra.mxu0 %v1950
    %2296 = vmatprep.subr.mxu0 %v2013
    %2297 = vmatpush2.msra.mxu0 %v2012
    %2298 = vmatprep.subr.mxu0 %v2011
    %2299 = vmatpush2.msra.mxu0 %v2010
    %2300 = vmatprep.subr.mxu0 %v2009
    %2301 = vmatpush2.msra.mxu0 %v2008
    %2302 = vmatprep.subr.mxu0 %v2007
    %2303 = vmatpush2.msra.mxu0 %v2006
    %2304 = vmatprep.subr.mxu0 %v2005
    %2305 = vmatpush2.msra.mxu0 %v2004
    %2306 = vmatprep.subr.mxu0 %v2003
    %2307 = vmatpush2.msra.mxu0 %v2002
    %2308 = vmatprep.subr.mxu0 %v2001
    %2309 = vmatpush2.msra.mxu0 %v2000
    %2310 = vmatprep.subr.mxu0 %v1999
    %2311 = vmatpush2.msra.mxu0 %v1998
    %2312 = vmatprep.subr.mxu0 %v1997
    %2313 = vmatpush2.msra.mxu0 %v1996
    %2314 = vmatprep.subr.mxu0 %v1995
    %2315 = vmatpush2.msra.mxu0 %v1994
    %2316 = vmatprep.subr.mxu0 %v1993
    %2317 = vmatpush2.msra.mxu0 %v1992
    %2318 = vmatprep.subr.mxu0 %v1991
    %2319 = vmatpush2.msra.mxu0 %v1990
    %2320 = vmatprep.subr.mxu0 %v1989
    %2321 = vmatpush2.msra.mxu0 %v1988
    %2322 = vmatprep.subr.mxu0 %v1987
    %2323 = vmatpush2.msra.mxu0 %v1986
    %2324 = vmatprep.subr.mxu0 %v1985
    %2325 = vmatpush2.msra.mxu0 %v1984
    %2326 = vmatprep.subr.mxu0 %v1983
    %2327 = vmatpush2.msra.mxu0 %v1982
    %2328 = vmatprep.mubr.f32.mxu0 %v1935
    %2329 = vmatmul.mubr.f32.gmra.mxu0 %v1934
    %v2330 = vpop.f32.mrf.mxu0
    %v2331 = vadd.f32 %v2218, %v2330
    %v2332 = vpop.f32.mrf.mxu0
    %v2333 = vadd.f32 %v2220, %v2332
    %2334 = vmatprep.mubr.f32.mxu0 %v1937
    %2335 = vmatmul.mubr.f32.gmra.mxu0 %v1936
    %v2336 = vpop.f32.mrf.mxu0
    %v2337 = vadd.f32 %v2224, %v2336
    %v2338 = vpop.f32.mrf.mxu0
    %v2339 = vadd.f32 %v2226, %v2338
    %2340 = vmatprep.mubr.f32.mxu0 %v1939
    %2341 = vmatmul.mubr.f32.gmra.mxu0 %v1938
    %v2342 = vpop.f32.mrf.mxu0
    %v2343 = vadd.f32 %v2230, %v2342
    %v2344 = vpop.f32.mrf.mxu0
    %v2345 = vadd.f32 %v2232, %v2344
    %2346 = vmatprep.mubr.f32.mxu0 %v1941
    %2347 = vmatmul.mubr.f32.gmra.mxu0 %v1940
    %v2348 = vpop.f32.mrf.mxu0
    %v2349 = vadd.f32 %v2236, %v2348
    %v2350 = vpop.f32.mrf.mxu0
    %v2351 = vadd.f32 %v2238, %v2350
    %2352 = vmatprep.mubr.f32.mxu0 %v1943
    %2353 = vmatmul.mubr.f32.gmra.mxu0 %v1942
    %v2354 = vpop.f32.mrf.mxu0
    %v2355 = vadd.f32 %v2242, %v2354
    %v2356 = vpop.f32.mrf.mxu0
    %v2357 = vadd.f32 %v2244, %v2356
    %2358 = vmatprep.mubr.f32.mxu0 %v1945
    %2359 = vmatmul.mubr.f32.gmra.mxu0 %v1944
    %v2360 = vpop.f32.mrf.mxu0
    %v2361 = vadd.f32 %v2248, %v2360
    %v2362 = vpop.f32.mrf.mxu0
    %v2363 = vadd.f32 %v2250, %v2362
    %2364 = vmatprep.mubr.f32.mxu0 %v1947
    %2365 = vmatmul.mubr.f32.gmra.mxu0 %v1946
    %v2366 = vpop.f32.mrf.mxu0
    %v2367 = vadd.f32 %v2254, %v2366
    %v2368 = vpop.f32.mrf.mxu0
    %v2369 = vadd.f32 %v2256, %v2368
    %2370 = vmatprep.mubr.f32.mxu0 %v1949
    %2371 = vmatmul.mubr.f32.gmra.mxu0 %v1948
    %v2372 = vpop.f32.mrf.mxu0
    %v2373 = vadd.f32 %v2260, %v2372
    %v2374 = vpop.f32.mrf.mxu0
    %v2375 = vadd.f32 %v2262, %v2374
    %2376 = vdwg.mxu0
    %v2377 = vld [vmem:[#allocation3 + $0x80] sm:$0xff]
    %v2378 = vld [vmem:[#allocation3 + $0x88] sm:$0xff]
    %s2379 = scalar_lea.vmem %s3, 1024
    %v2380 = vld [vmem:[%s2379] sm:$0xff]
    %v2381 = vld [vmem:[%s2379 + $0x8] sm:$0xff]
    %v2382 = vld [vmem:[%s2379 + $0x10] sm:$0xff]
    %v2383 = vld [vmem:[%s2379 + $0x18] sm:$0xff]
    %v2384 = vld [vmem:[%s2379 + $0x20] sm:$0xff]
    %v2385 = vld [vmem:[%s2379 + $0x28] sm:$0xff]
    %v2386 = vld [vmem:[%s2379 + $0x30] sm:$0xff]
    %v2387 = vld [vmem:[%s2379 + $0x38] sm:$0xff]
    %v2388 = vld [vmem:[%s2379 + $0x40] sm:$0xff]
    %v2389 = vld [vmem:[%s2379 + $0x48] sm:$0xff]
    %v2390 = vld [vmem:[%s2379 + $0x50] sm:$0xff]
    %v2391 = vld [vmem:[%s2379 + $0x58] sm:$0xff]
    %v2392 = vld [vmem:[%s2379 + $0x60] sm:$0xff]
    %v2393 = vld [vmem:[%s2379 + $0x68] sm:$0xff]
    %v2394 = vld [vmem:[%s2379 + $0x70] sm:$0xff]
    %v2395 = vld [vmem:[%s2379 + $0x78] sm:$0xff]
    %v2396 = vld [vmem:[%s2379 + $0x80] sm:$0xff]
    %v2397 = vld [vmem:[%s2379 + $0x88] sm:$0xff]
    %v2398 = vld [vmem:[%s2379 + $0x90] sm:$0xff]
    %v2399 = vld [vmem:[%s2379 + $0x98] sm:$0xff]
    %v2400 = vld [vmem:[%s2379 + $0xa0] sm:$0xff]
    %v2401 = vld [vmem:[%s2379 + $0xa8] sm:$0xff]
    %v2402 = vld [vmem:[%s2379 + $0xb0] sm:$0xff]
    %v2403 = vld [vmem:[%s2379 + $0xb8] sm:$0xff]
    %v2404 = vld [vmem:[%s2379 + $0xc0] sm:$0xff]
    %v2405 = vld [vmem:[%s2379 + $0xc8] sm:$0xff]
    %v2406 = vld [vmem:[%s2379 + $0xd0] sm:$0xff]
    %v2407 = vld [vmem:[%s2379 + $0xd8] sm:$0xff]
    %v2408 = vld [vmem:[%s2379 + $0xe0] sm:$0xff]
    %v2409 = vld [vmem:[%s2379 + $0xe8] sm:$0xff]
    %v2410 = vld [vmem:[%s2379 + $0xf0] sm:$0xff]
    %v2411 = vld [vmem:[%s2379 + $0xf8] sm:$0xff]
    %v2412 = vld [vmem:[%s2379 + $0x100] sm:$0xff]
    %v2413 = vld [vmem:[%s2379 + $0x108] sm:$0xff]
    %v2414 = vld [vmem:[%s2379 + $0x110] sm:$0xff]
    %v2415 = vld [vmem:[%s2379 + $0x118] sm:$0xff]
    %v2416 = vld [vmem:[%s2379 + $0x120] sm:$0xff]
    %v2417 = vld [vmem:[%s2379 + $0x128] sm:$0xff]
    %v2418 = vld [vmem:[%s2379 + $0x130] sm:$0xff]
    %v2419 = vld [vmem:[%s2379 + $0x138] sm:$0xff]
    %v2420 = vld [vmem:[%s2379 + $0x140] sm:$0xff]
    %v2421 = vld [vmem:[%s2379 + $0x148] sm:$0xff]
    %v2422 = vld [vmem:[%s2379 + $0x150] sm:$0xff]
    %v2423 = vld [vmem:[%s2379 + $0x158] sm:$0xff]
    %v2424 = vld [vmem:[%s2379 + $0x160] sm:$0xff]
    %v2425 = vld [vmem:[%s2379 + $0x168] sm:$0xff]
    %v2426 = vld [vmem:[%s2379 + $0x170] sm:$0xff]
    %v2427 = vld [vmem:[%s2379 + $0x178] sm:$0xff]
    %v2428 = vld [vmem:[%s2379 + $0x180] sm:$0xff]
    %v2429 = vld [vmem:[%s2379 + $0x188] sm:$0xff]
    %v2430 = vld [vmem:[%s2379 + $0x190] sm:$0xff]
    %v2431 = vld [vmem:[%s2379 + $0x198] sm:$0xff]
    %v2432 = vld [vmem:[%s2379 + $0x1a0] sm:$0xff]
    %v2433 = vld [vmem:[%s2379 + $0x1a8] sm:$0xff]
    %v2434 = vld [vmem:[%s2379 + $0x1b0] sm:$0xff]
    %v2435 = vld [vmem:[%s2379 + $0x1b8] sm:$0xff]
    %v2436 = vld [vmem:[%s2379 + $0x1c0] sm:$0xff]
    %v2437 = vld [vmem:[%s2379 + $0x1c8] sm:$0xff]
    %v2438 = vld [vmem:[%s2379 + $0x1d0] sm:$0xff]
    %v2439 = vld [vmem:[%s2379 + $0x1d8] sm:$0xff]
    %v2440 = vld [vmem:[%s2379 + $0x1e0] sm:$0xff]
    %v2441 = vld [vmem:[%s2379 + $0x1e8] sm:$0xff]
    %v2442 = vld [vmem:[%s2379 + $0x1f0] sm:$0xff]
    %v2443 = vld [vmem:[%s2379 + $0x1f8] sm:$0xff]
    %2444 = vmatprep.subr.mxu0 %v2411
    %2445 = vmatpush1.msra.mxu0 %v2410
    %2446 = vmatprep.subr.mxu0 %v2409
    %2447 = vmatpush1.msra.mxu0 %v2408
    %2448 = vmatprep.subr.mxu0 %v2407
    %2449 = vmatpush1.msra.mxu0 %v2406
    %2450 = vmatprep.subr.mxu0 %v2405
    %2451 = vmatpush1.msra.mxu0 %v2404
    %2452 = vmatprep.subr.mxu0 %v2403
    %2453 = vmatpush1.msra.mxu0 %v2402
    %2454 = vmatprep.subr.mxu0 %v2401
    %2455 = vmatpush1.msra.mxu0 %v2400
    %2456 = vmatprep.subr.mxu0 %v2399
    %2457 = vmatpush1.msra.mxu0 %v2398
    %2458 = vmatprep.subr.mxu0 %v2397
    %2459 = vmatpush1.msra.mxu0 %v2396
    %2460 = vmatprep.subr.mxu0 %v2395
    %2461 = vmatpush1.msra.mxu0 %v2394
    %2462 = vmatprep.subr.mxu0 %v2393
    %2463 = vmatpush1.msra.mxu0 %v2392
    %2464 = vmatprep.subr.mxu0 %v2391
    %2465 = vmatpush1.msra.mxu0 %v2390
    %2466 = vmatprep.subr.mxu0 %v2389
    %2467 = vmatpush1.msra.mxu0 %v2388
    %2468 = vmatprep.subr.mxu0 %v2387
    %2469 = vmatpush1.msra.mxu0 %v2386
    %2470 = vmatprep.subr.mxu0 %v2385
    %2471 = vmatpush1.msra.mxu0 %v2384
    %2472 = vmatprep.subr.mxu0 %v2383
    %2473 = vmatpush1.msra.mxu0 %v2382
    %2474 = vmatprep.subr.mxu0 %v2381
    %2475 = vmatpush1.msra.mxu0 %v2380
    %2476 = vmatprep.subr.mxu0 %v2443
    %2477 = vmatpush2.msra.mxu0 %v2442
    %2478 = vmatprep.subr.mxu0 %v2441
    %2479 = vmatpush2.msra.mxu0 %v2440
    %2480 = vmatprep.subr.mxu0 %v2439
    %2481 = vmatpush2.msra.mxu0 %v2438
    %2482 = vmatprep.subr.mxu0 %v2437
    %2483 = vmatpush2.msra.mxu0 %v2436
    %2484 = vmatprep.subr.mxu0 %v2435
    %2485 = vmatpush2.msra.mxu0 %v2434
    %2486 = vmatprep.subr.mxu0 %v2433
    %2487 = vmatpush2.msra.mxu0 %v2432
    %2488 = vmatprep.subr.mxu0 %v2431
    %2489 = vmatpush2.msra.mxu0 %v2430
    %2490 = vmatprep.subr.mxu0 %v2429
    %2491 = vmatpush2.msra.mxu0 %v2428
    %2492 = vmatprep.subr.mxu0 %v2427
    %2493 = vmatpush2.msra.mxu0 %v2426
    %2494 = vmatprep.subr.mxu0 %v2425
    %2495 = vmatpush2.msra.mxu0 %v2424
    %2496 = vmatprep.subr.mxu0 %v2423
    %2497 = vmatpush2.msra.mxu0 %v2422
    %2498 = vmatprep.subr.mxu0 %v2421
    %2499 = vmatpush2.msra.mxu0 %v2420
    %2500 = vmatprep.subr.mxu0 %v2419
    %2501 = vmatpush2.msra.mxu0 %v2418
    %2502 = vmatprep.subr.mxu0 %v2417
    %2503 = vmatpush2.msra.mxu0 %v2416
    %2504 = vmatprep.subr.mxu0 %v2415
    %2505 = vmatpush2.msra.mxu0 %v2414
    %2506 = vmatprep.subr.mxu0 %v2413
    %2507 = vmatpush2.msra.mxu0 %v2412
    %2508 = vmatprep.mubr.f32.mxu0 %v1937
    %2509 = vmatmul.mubr.f32.gmra.mxu0 %v1936
    %v2510 = vpop.f32.mrf.mxu0
    %v2511 = vadd.f32 0.0, %v2510
    %v2512 = vpop.f32.mrf.mxu0
    %v2513 = vadd.f32 0.0, %v2512
    %2514 = vmatprep.mubr.f32.mxu0 %v1939
    %2515 = vmatmul.mubr.f32.gmra.mxu0 %v1938
    %v2516 = vpop.f32.mrf.mxu0
    %v2517 = vadd.f32 0.0, %v2516
    %v2518 = vpop.f32.mrf.mxu0
    %v2519 = vadd.f32 0.0, %v2518
    %2520 = vmatprep.mubr.f32.mxu0 %v1941
    %2521 = vmatmul.mubr.f32.gmra.mxu0 %v1940
    %v2522 = vpop.f32.mrf.mxu0
    %v2523 = vadd.f32 0.0, %v2522
    %v2524 = vpop.f32.mrf.mxu0
    %v2525 = vadd.f32 0.0, %v2524
    %2526 = vmatprep.mubr.f32.mxu0 %v1943
    %2527 = vmatmul.mubr.f32.gmra.mxu0 %v1942
    %v2528 = vpop.f32.mrf.mxu0
    %v2529 = vadd.f32 0.0, %v2528
    %v2530 = vpop.f32.mrf.mxu0
    %v2531 = vadd.f32 0.0, %v2530
    %2532 = vmatprep.mubr.f32.mxu0 %v1945
    %2533 = vmatmul.mubr.f32.gmra.mxu0 %v1944
    %v2534 = vpop.f32.mrf.mxu0
    %v2535 = vadd.f32 0.0, %v2534
    %v2536 = vpop.f32.mrf.mxu0
    %v2537 = vadd.f32 0.0, %v2536
    %2538 = vmatprep.mubr.f32.mxu0 %v1947
    %2539 = vmatmul.mubr.f32.gmra.mxu0 %v1946
    %v2540 = vpop.f32.mrf.mxu0
    %v2541 = vadd.f32 0.0, %v2540
    %v2542 = vpop.f32.mrf.mxu0
    %v2543 = vadd.f32 0.0, %v2542
    %2544 = vmatprep.mubr.f32.mxu0 %v1949
    %2545 = vmatmul.mubr.f32.gmra.mxu0 %v1948
    %v2546 = vpop.f32.mrf.mxu0
    %v2547 = vadd.f32 0.0, %v2546
    %v2548 = vpop.f32.mrf.mxu0
    %v2549 = vadd.f32 0.0, %v2548
    %2550 = vmatprep.mubr.f32.mxu0 %v2378
    %2551 = vmatmul.mubr.f32.gmra.mxu0 %v2377
    %v2552 = vpop.f32.mrf.mxu0
    %v2553 = vadd.f32 0.0, %v2552
    %v2554 = vpop.f32.mrf.mxu0
    %v2555 = vadd.f32 0.0, %v2554
    %2556 = vdwg.mxu0
    %v2557 = vadd.f32 %v2331, %v2511
    %v2558 = vadd.f32 %v2333, %v2513
    %v2559 = vadd.f32 %v2337, %v2517
    %v2560 = vadd.f32 %v2339, %v2519
    %v2561 = vadd.f32 %v2343, %v2523
    %v2562 = vadd.f32 %v2345, %v2525
    %v2563 = vadd.f32 %v2349, %v2529
    %v2564 = vadd.f32 %v2351, %v2531
    %v2565 = vadd.f32 %v2355, %v2535
    %v2566 = vadd.f32 %v2357, %v2537
    %v2567 = vadd.f32 %v2361, %v2541
    %v2568 = vadd.f32 %v2363, %v2543
    %v2569 = vadd.f32 %v2367, %v2547
    %v2570 = vadd.f32 %v2369, %v2549
    %v2571 = vadd.f32 %v2373, %v2553
    %v2572 = vadd.f32 %v2375, %v2555
    %v2573 = vld [vmem:[#allocation3 + $0x10] sm:$0xf0]
    %v2574 = vld [vmem:[#allocation3 + $0x18] sm:$0xf0]
    %v2575 = vld [vmem:[#allocation3 + $0x20] sm:$0xff]
    %v2576 = vld [vmem:[#allocation3 + $0x28] sm:$0xff]
    %v2577 = vld [vmem:[#allocation3 + $0x30] sm:$0xff]
    %v2578 = vld [vmem:[#allocation3 + $0x38] sm:$0xff]
    %v2579 = vld [vmem:[#allocation3 + $0x40] sm:$0xff]
    %v2580 = vld [vmem:[#allocation3 + $0x48] sm:$0xff]
    %v2581 = vld [vmem:[#allocation3 + $0x50] sm:$0xff]
    %v2582 = vld [vmem:[#allocation3 + $0x58] sm:$0xff]
    %v2583 = vld [vmem:[#allocation3 + $0x60] sm:$0xff]
    %v2584 = vld [vmem:[#allocation3 + $0x68] sm:$0xff]
    %v2585 = vld [vmem:[#allocation3 + $0x70] sm:$0xff]
    %v2586 = vld [vmem:[#allocation3 + $0x78] sm:$0xff]
    %v2587 = vld [vmem:[#allocation3 + $0x80] sm:$0xff]
    %v2588 = vld [vmem:[#allocation3 + $0x88] sm:$0xff]
    %v2589 = vld [vmem:[#allocation3 + $0x90] sm:$0xf]
    %v2590 = vld [vmem:[#allocation3 + $0x98] sm:$0xf]
    %s2591 = scalar_lea.vmem %s3, 1536
    %v2592 = vld [vmem:[%s2591] sm:$0xff]
    %v2593 = vld [vmem:[%s2591 + $0x8] sm:$0xff]
    %v2594 = vld [vmem:[%s2591 + $0x10] sm:$0xff]
    %v2595 = vld [vmem:[%s2591 + $0x18] sm:$0xff]
    %v2596 = vld [vmem:[%s2591 + $0x20] sm:$0xff]
    %v2597 = vld [vmem:[%s2591 + $0x28] sm:$0xff]
    %v2598 = vld [vmem:[%s2591 + $0x30] sm:$0xff]
    %v2599 = vld [vmem:[%s2591 + $0x38] sm:$0xff]
    %v2600 = vld [vmem:[%s2591 + $0x40] sm:$0xff]
    %v2601 = vld [vmem:[%s2591 + $0x48] sm:$0xff]
    %v2602 = vld [vmem:[%s2591 + $0x50] sm:$0xff]
    %v2603 = vld [vmem:[%s2591 + $0x58] sm:$0xff]
    %v2604 = vld [vmem:[%s2591 + $0x60] sm:$0xff]
    %v2605 = vld [vmem:[%s2591 + $0x68] sm:$0xff]
    %v2606 = vld [vmem:[%s2591 + $0x70] sm:$0xff]
    %v2607 = vld [vmem:[%s2591 + $0x78] sm:$0xff]
    %v2608 = vld [vmem:[%s2591 + $0x80] sm:$0xff]
    %v2609 = vld [vmem:[%s2591 + $0x88] sm:$0xff]
    %v2610 = vld [vmem:[%s2591 + $0x90] sm:$0xff]
    %v2611 = vld [vmem:[%s2591 + $0x98] sm:$0xff]
    %v2612 = vld [vmem:[%s2591 + $0xa0] sm:$0xff]
    %v2613 = vld [vmem:[%s2591 + $0xa8] sm:$0xff]
    %v2614 = vld [vmem:[%s2591 + $0xb0] sm:$0xff]
    %v2615 = vld [vmem:[%s2591 + $0xb8] sm:$0xff]
    %v2616 = vld [vmem:[%s2591 + $0xc0] sm:$0xff]
    %v2617 = vld [vmem:[%s2591 + $0xc8] sm:$0xff]
    %v2618 = vld [vmem:[%s2591 + $0xd0] sm:$0xff]
    %v2619 = vld [vmem:[%s2591 + $0xd8] sm:$0xff]
    %v2620 = vld [vmem:[%s2591 + $0xe0] sm:$0xff]
    %v2621 = vld [vmem:[%s2591 + $0xe8] sm:$0xff]
    %v2622 = vld [vmem:[%s2591 + $0xf0] sm:$0xff]
    %v2623 = vld [vmem:[%s2591 + $0xf8] sm:$0xff]
    %v2624 = vld [vmem:[%s2591 + $0x100] sm:$0xff]
    %v2625 = vld [vmem:[%s2591 + $0x108] sm:$0xff]
    %v2626 = vld [vmem:[%s2591 + $0x110] sm:$0xff]
    %v2627 = vld [vmem:[%s2591 + $0x118] sm:$0xff]
    %v2628 = vld [vmem:[%s2591 + $0x120] sm:$0xff]
    %v2629 = vld [vmem:[%s2591 + $0x128] sm:$0xff]
    %v2630 = vld [vmem:[%s2591 + $0x130] sm:$0xff]
    %v2631 = vld [vmem:[%s2591 + $0x138] sm:$0xff]
    %v2632 = vld [vmem:[%s2591 + $0x140] sm:$0xff]
    %v2633 = vld [vmem:[%s2591 + $0x148] sm:$0xff]
    %v2634 = vld [vmem:[%s2591 + $0x150] sm:$0xff]
    %v2635 = vld [vmem:[%s2591 + $0x158] sm:$0xff]
    %v2636 = vld [vmem:[%s2591 + $0x160] sm:$0xff]
    %v2637 = vld [vmem:[%s2591 + $0x168] sm:$0xff]
    %v2638 = vld [vmem:[%s2591 + $0x170] sm:$0xff]
    %v2639 = vld [vmem:[%s2591 + $0x178] sm:$0xff]
    %v2640 = vld [vmem:[%s2591 + $0x180] sm:$0xff]
    %v2641 = vld [vmem:[%s2591 + $0x188] sm:$0xff]
    %v2642 = vld [vmem:[%s2591 + $0x190] sm:$0xff]
    %v2643 = vld [vmem:[%s2591 + $0x198] sm:$0xff]
    %v2644 = vld [vmem:[%s2591 + $0x1a0] sm:$0xff]
    %v2645 = vld [vmem:[%s2591 + $0x1a8] sm:$0xff]
    %v2646 = vld [vmem:[%s2591 + $0x1b0] sm:$0xff]
    %v2647 = vld [vmem:[%s2591 + $0x1b8] sm:$0xff]
    %v2648 = vld [vmem:[%s2591 + $0x1c0] sm:$0xff]
    %v2649 = vld [vmem:[%s2591 + $0x1c8] sm:$0xff]
    %v2650 = vld [vmem:[%s2591 + $0x1d0] sm:$0xff]
    %v2651 = vld [vmem:[%s2591 + $0x1d8] sm:$0xff]
    %v2652 = vld [vmem:[%s2591 + $0x1e0] sm:$0xff]
    %v2653 = vld [vmem:[%s2591 + $0x1e8] sm:$0xff]
    %v2654 = vld [vmem:[%s2591 + $0x1f0] sm:$0xff]
    %v2655 = vld [vmem:[%s2591 + $0x1f8] sm:$0xff]
    %v2674 = vrot.slane %v2573, 4
    %v2675 = vrot.slane %v2575, 4
    %v2676 = vsel %vm996, %v2674, %v2675
    %v2677 = vrot.slane %v2574, 4
    %v2678 = vrot.slane %v2576, 4
    %v2679 = vsel %vm996, %v2677, %v2678
    %v2680 = vrot.slane %v2577, 4
    %v2681 = vsel %vm996, %v2675, %v2680
    %v2682 = vrot.slane %v2578, 4
    %v2683 = vsel %vm996, %v2678, %v2682
    %v2684 = vrot.slane %v2579, 4
    %v2685 = vsel %vm996, %v2680, %v2684
    %v2686 = vrot.slane %v2580, 4
    %v2687 = vsel %vm996, %v2682, %v2686
    %v2688 = vrot.slane %v2581, 4
    %v2689 = vsel %vm996, %v2684, %v2688
    %v2690 = vrot.slane %v2582, 4
    %v2691 = vsel %vm996, %v2686, %v2690
    %v2692 = vrot.slane %v2583, 4
    %v2693 = vsel %vm996, %v2688, %v2692
    %v2694 = vrot.slane %v2584, 4
    %v2695 = vsel %vm996, %v2690, %v2694
    %v2696 = vrot.slane %v2585, 4
    %v2697 = vsel %vm996, %v2692, %v2696
    %v2698 = vrot.slane %v2586, 4
    %v2699 = vsel %vm996, %v2694, %v2698
    %v2700 = vrot.slane %v2587, 4
    %v2701 = vsel %vm996, %v2696, %v2700
    %v2702 = vrot.slane %v2588, 4
    %v2703 = vsel %vm996, %v2698, %v2702
    %v2704 = vrot.slane %v2589, 4
    %v2705 = vsel %vm996, %v2700, %v2704
    %v2706 = vrot.slane %v2590, 4
    %v2707 = vsel %vm996, %v2702, %v2706
    %2724 = vmatprep.subr.mxu0 %v2623
    %2725 = vmatpush1.msra.mxu0 %v2622
    %2726 = vmatprep.subr.mxu0 %v2621
    %2727 = vmatpush1.msra.mxu0 %v2620
    %2728 = vmatprep.subr.mxu0 %v2619
    %2729 = vmatpush1.msra.mxu0 %v2618
    %2730 = vmatprep.subr.mxu0 %v2617
    %2731 = vmatpush1.msra.mxu0 %v2616
    %2732 = vmatprep.subr.mxu0 %v2615
    %2733 = vmatpush1.msra.mxu0 %v2614
    %2734 = vmatprep.subr.mxu0 %v2613
    %2735 = vmatpush1.msra.mxu0 %v2612
    %2736 = vmatprep.subr.mxu0 %v2611
    %2737 = vmatpush1.msra.mxu0 %v2610
    %2738 = vmatprep.subr.mxu0 %v2609
    %2739 = vmatpush1.msra.mxu0 %v2608
    %2740 = vmatprep.subr.mxu0 %v2607
    %2741 = vmatpush1.msra.mxu0 %v2606
    %2742 = vmatprep.subr.mxu0 %v2605
    %2743 = vmatpush1.msra.mxu0 %v2604
    %2744 = vmatprep.subr.mxu0 %v2603
    %2745 = vmatpush1.msra.mxu0 %v2602
    %2746 = vmatprep.subr.mxu0 %v2601
    %2747 = vmatpush1.msra.mxu0 %v2600
    %2748 = vmatprep.subr.mxu0 %v2599
    %2749 = vmatpush1.msra.mxu0 %v2598
    %2750 = vmatprep.subr.mxu0 %v2597
    %2751 = vmatpush1.msra.mxu0 %v2596
    %2752 = vmatprep.subr.mxu0 %v2595
    %2753 = vmatpush1.msra.mxu0 %v2594
    %2754 = vmatprep.subr.mxu0 %v2593
    %2755 = vmatpush1.msra.mxu0 %v2592
    %2756 = vmatprep.subr.mxu0 %v2655
    %2757 = vmatpush2.msra.mxu0 %v2654
    %2758 = vmatprep.subr.mxu0 %v2653
    %2759 = vmatpush2.msra.mxu0 %v2652
    %2760 = vmatprep.subr.mxu0 %v2651
    %2761 = vmatpush2.msra.mxu0 %v2650
    %2762 = vmatprep.subr.mxu0 %v2649
    %2763 = vmatpush2.msra.mxu0 %v2648
    %2764 = vmatprep.subr.mxu0 %v2647
    %2765 = vmatpush2.msra.mxu0 %v2646
    %2766 = vmatprep.subr.mxu0 %v2645
    %2767 = vmatpush2.msra.mxu0 %v2644
    %2768 = vmatprep.subr.mxu0 %v2643
    %2769 = vmatpush2.msra.mxu0 %v2642
    %2770 = vmatprep.subr.mxu0 %v2641
    %2771 = vmatpush2.msra.mxu0 %v2640
    %2772 = vmatprep.subr.mxu0 %v2639
    %2773 = vmatpush2.msra.mxu0 %v2638
    %2774 = vmatprep.subr.mxu0 %v2637
    %2775 = vmatpush2.msra.mxu0 %v2636
    %2776 = vmatprep.subr.mxu0 %v2635
    %2777 = vmatpush2.msra.mxu0 %v2634
    %2778 = vmatprep.subr.mxu0 %v2633
    %2779 = vmatpush2.msra.mxu0 %v2632
    %2780 = vmatprep.subr.mxu0 %v2631
    %2781 = vmatpush2.msra.mxu0 %v2630
    %2782 = vmatprep.subr.mxu0 %v2629
    %2783 = vmatpush2.msra.mxu0 %v2628
    %2784 = vmatprep.subr.mxu0 %v2627
    %2785 = vmatpush2.msra.mxu0 %v2626
    %2786 = vmatprep.subr.mxu0 %v2625
    %2787 = vmatpush2.msra.mxu0 %v2624
    %2788 = vmatprep.mubr.f32.mxu0 %v2679
    %2789 = vmatmul.mubr.f32.gmra.mxu0 %v2676
    %v2790 = vpop.f32.mrf.mxu0
    %v2791 = vadd.f32 0.0, %v2790
    %v2792 = vpop.f32.mrf.mxu0
    %v2793 = vadd.f32 0.0, %v2792
    %2794 = vmatprep.mubr.f32.mxu0 %v2683
    %2795 = vmatmul.mubr.f32.gmra.mxu0 %v2681
    %v2796 = vpop.f32.mrf.mxu0
    %v2797 = vadd.f32 0.0, %v2796
    %v2798 = vpop.f32.mrf.mxu0
    %v2799 = vadd.f32 0.0, %v2798
    %2800 = vmatprep.mubr.f32.mxu0 %v2687
    %2801 = vmatmul.mubr.f32.gmra.mxu0 %v2685
    %v2802 = vpop.f32.mrf.mxu0
    %v2803 = vadd.f32 0.0, %v2802
    %v2804 = vpop.f32.mrf.mxu0
    %v2805 = vadd.f32 0.0, %v2804
    %2806 = vmatprep.mubr.f32.mxu0 %v2691
    %2807 = vmatmul.mubr.f32.gmra.mxu0 %v2689
    %v2808 = vpop.f32.mrf.mxu0
    %v2809 = vadd.f32 0.0, %v2808
    %v2810 = vpop.f32.mrf.mxu0
    %v2811 = vadd.f32 0.0, %v2810
    %2812 = vmatprep.mubr.f32.mxu0 %v2695
    %2813 = vmatmul.mubr.f32.gmra.mxu0 %v2693
    %v2814 = vpop.f32.mrf.mxu0
    %v2815 = vadd.f32 0.0, %v2814
    %v2816 = vpop.f32.mrf.mxu0
    %v2817 = vadd.f32 0.0, %v2816
    %2818 = vmatprep.mubr.f32.mxu0 %v2699
    %2819 = vmatmul.mubr.f32.gmra.mxu0 %v2697
    %v2820 = vpop.f32.mrf.mxu0
    %v2821 = vadd.f32 0.0, %v2820
    %v2822 = vpop.f32.mrf.mxu0
    %v2823 = vadd.f32 0.0, %v2822
    %2824 = vmatprep.mubr.f32.mxu0 %v2703
    %2825 = vmatmul.mubr.f32.gmra.mxu0 %v2701
    %v2826 = vpop.f32.mrf.mxu0
    %v2827 = vadd.f32 0.0, %v2826
    %v2828 = vpop.f32.mrf.mxu0
    %v2829 = vadd.f32 0.0, %v2828
    %2830 = vmatprep.mubr.f32.mxu0 %v2707
    %2831 = vmatmul.mubr.f32.gmra.mxu0 %v2705
    %v2832 = vpop.f32.mrf.mxu0
    %v2833 = vadd.f32 0.0, %v2832
    %v2834 = vpop.f32.mrf.mxu0
    %v2835 = vadd.f32 0.0, %v2834
    %2836 = vdwg.mxu0
    %v2837 = vadd.f32 %v2557, %v2791
    %v2838 = vadd.f32 %v2558, %v2793
    %v2839 = vadd.f32 %v2559, %v2797
    %v2840 = vadd.f32 %v2560, %v2799
    %v2841 = vadd.f32 %v2561, %v2803
    %v2842 = vadd.f32 %v2562, %v2805
    %v2843 = vadd.f32 %v2563, %v2809
    %v2844 = vadd.f32 %v2564, %v2811
    %v2845 = vadd.f32 %v2565, %v2815
    %v2846 = vadd.f32 %v2566, %v2817
    %v2847 = vadd.f32 %v2567, %v2821
    %v2848 = vadd.f32 %v2568, %v2823
    %v2849 = vadd.f32 %v2569, %v2827
    %v2850 = vadd.f32 %v2570, %v2829
    %v2851 = vadd.f32 %v2571, %v2833
    %v2852 = vadd.f32 %v2572, %v2835
    %v2853 = vld [vmem:[#allocation3 + $0x90] sm:$0xff]
    %v2854 = vld [vmem:[#allocation3 + $0x98] sm:$0xff]
    %s2855 = scalar_lea.vmem %s3, 2048
    %v2856 = vld [vmem:[%s2855] sm:$0xff]
    %v2857 = vld [vmem:[%s2855 + $0x8] sm:$0xff]
    %v2858 = vld [vmem:[%s2855 + $0x10] sm:$0xff]
    %v2859 = vld [vmem:[%s2855 + $0x18] sm:$0xff]
    %v2860 = vld [vmem:[%s2855 + $0x20] sm:$0xff]
    %v2861 = vld [vmem:[%s2855 + $0x28] sm:$0xff]
    %v2862 = vld [vmem:[%s2855 + $0x30] sm:$0xff]
    %v2863 = vld [vmem:[%s2855 + $0x38] sm:$0xff]
    %v2864 = vld [vmem:[%s2855 + $0x40] sm:$0xff]
    %v2865 = vld [vmem:[%s2855 + $0x48] sm:$0xff]
    %v2866 = vld [vmem:[%s2855 + $0x50] sm:$0xff]
    %v2867 = vld [vmem:[%s2855 + $0x58] sm:$0xff]
    %v2868 = vld [vmem:[%s2855 + $0x60] sm:$0xff]
    %v2869 = vld [vmem:[%s2855 + $0x68] sm:$0xff]
    %v2870 = vld [vmem:[%s2855 + $0x70] sm:$0xff]
    %v2871 = vld [vmem:[%s2855 + $0x78] sm:$0xff]
    %v2872 = vld [vmem:[%s2855 + $0x80] sm:$0xff]
    %v2873 = vld [vmem:[%s2855 + $0x88] sm:$0xff]
    %v2874 = vld [vmem:[%s2855 + $0x90] sm:$0xff]
    %v2875 = vld [vmem:[%s2855 + $0x98] sm:$0xff]
    %v2876 = vld [vmem:[%s2855 + $0xa0] sm:$0xff]
    %v2877 = vld [vmem:[%s2855 + $0xa8] sm:$0xff]
    %v2878 = vld [vmem:[%s2855 + $0xb0] sm:$0xff]
    %v2879 = vld [vmem:[%s2855 + $0xb8] sm:$0xff]
    %v2880 = vld [vmem:[%s2855 + $0xc0] sm:$0xff]
    %v2881 = vld [vmem:[%s2855 + $0xc8] sm:$0xff]
    %v2882 = vld [vmem:[%s2855 + $0xd0] sm:$0xff]
    %v2883 = vld [vmem:[%s2855 + $0xd8] sm:$0xff]
    %v2884 = vld [vmem:[%s2855 + $0xe0] sm:$0xff]
    %v2885 = vld [vmem:[%s2855 + $0xe8] sm:$0xff]
    %v2886 = vld [vmem:[%s2855 + $0xf0] sm:$0xff]
    %v2887 = vld [vmem:[%s2855 + $0xf8] sm:$0xff]
    %v2888 = vld [vmem:[%s2855 + $0x100] sm:$0xff]
    %v2889 = vld [vmem:[%s2855 + $0x108] sm:$0xff]
    %v2890 = vld [vmem:[%s2855 + $0x110] sm:$0xff]
    %v2891 = vld [vmem:[%s2855 + $0x118] sm:$0xff]
    %v2892 = vld [vmem:[%s2855 + $0x120] sm:$0xff]
    %v2893 = vld [vmem:[%s2855 + $0x128] sm:$0xff]
    %v2894 = vld [vmem:[%s2855 + $0x130] sm:$0xff]
    %v2895 = vld [vmem:[%s2855 + $0x138] sm:$0xff]
    %v2896 = vld [vmem:[%s2855 + $0x140] sm:$0xff]
    %v2897 = vld [vmem:[%s2855 + $0x148] sm:$0xff]
    %v2898 = vld [vmem:[%s2855 + $0x150] sm:$0xff]
    %v2899 = vld [vmem:[%s2855 + $0x158] sm:$0xff]
    %v2900 = vld [vmem:[%s2855 + $0x160] sm:$0xff]
    %v2901 = vld [vmem:[%s2855 + $0x168] sm:$0xff]
    %v2902 = vld [vmem:[%s2855 + $0x170] sm:$0xff]
    %v2903 = vld [vmem:[%s2855 + $0x178] sm:$0xff]
    %v2904 = vld [vmem:[%s2855 + $0x180] sm:$0xff]
    %v2905 = vld [vmem:[%s2855 + $0x188] sm:$0xff]
    %v2906 = vld [vmem:[%s2855 + $0x190] sm:$0xff]
    %v2907 = vld [vmem:[%s2855 + $0x198] sm:$0xff]
    %v2908 = vld [vmem:[%s2855 + $0x1a0] sm:$0xff]
    %v2909 = vld [vmem:[%s2855 + $0x1a8] sm:$0xff]
    %v2910 = vld [vmem:[%s2855 + $0x1b0] sm:$0xff]
    %v2911 = vld [vmem:[%s2855 + $0x1b8] sm:$0xff]
    %v2912 = vld [vmem:[%s2855 + $0x1c0] sm:$0xff]
    %v2913 = vld [vmem:[%s2855 + $0x1c8] sm:$0xff]
    %v2914 = vld [vmem:[%s2855 + $0x1d0] sm:$0xff]
    %v2915 = vld [vmem:[%s2855 + $0x1d8] sm:$0xff]
    %v2916 = vld [vmem:[%s2855 + $0x1e0] sm:$0xff]
    %v2917 = vld [vmem:[%s2855 + $0x1e8] sm:$0xff]
    %v2918 = vld [vmem:[%s2855 + $0x1f0] sm:$0xff]
    %v2919 = vld [vmem:[%s2855 + $0x1f8] sm:$0xff]
    %2920 = vmatprep.subr.mxu0 %v2887
    %2921 = vmatpush1.msra.mxu0 %v2886
    %2922 = vmatprep.subr.mxu0 %v2885
    %2923 = vmatpush1.msra.mxu0 %v2884
    %2924 = vmatprep.subr.mxu0 %v2883
    %2925 = vmatpush1.msra.mxu0 %v2882
    %2926 = vmatprep.subr.mxu0 %v2881
    %2927 = vmatpush1.msra.mxu0 %v2880
    %2928 = vmatprep.subr.mxu0 %v2879
    %2929 = vmatpush1.msra.mxu0 %v2878
    %2930 = vmatprep.subr.mxu0 %v2877
    %2931 = vmatpush1.msra.mxu0 %v2876
    %2932 = vmatprep.subr.mxu0 %v2875
    %2933 = vmatpush1.msra.mxu0 %v2874
    %2934 = vmatprep.subr.mxu0 %v2873
    %2935 = vmatpush1.msra.mxu0 %v2872
    %2936 = vmatprep.subr.mxu0 %v2871
    %2937 = vmatpush1.msra.mxu0 %v2870
    %2938 = vmatprep.subr.mxu0 %v2869
    %2939 = vmatpush1.msra.mxu0 %v2868
    %2940 = vmatprep.subr.mxu0 %v2867
    %2941 = vmatpush1.msra.mxu0 %v2866
    %2942 = vmatprep.subr.mxu0 %v2865
    %2943 = vmatpush1.msra.mxu0 %v2864
    %2944 = vmatprep.subr.mxu0 %v2863
    %2945 = vmatpush1.msra.mxu0 %v2862
    %2946 = vmatprep.subr.mxu0 %v2861
    %2947 = vmatpush1.msra.mxu0 %v2860
    %2948 = vmatprep.subr.mxu0 %v2859
    %2949 = vmatpush1.msra.mxu0 %v2858
    %2950 = vmatprep.subr.mxu0 %v2857
    %2951 = vmatpush1.msra.mxu0 %v2856
    %2952 = vmatprep.subr.mxu0 %v2919
    %2953 = vmatpush2.msra.mxu0 %v2918
    %2954 = vmatprep.subr.mxu0 %v2917
    %2955 = vmatpush2.msra.mxu0 %v2916
    %2956 = vmatprep.subr.mxu0 %v2915
    %2957 = vmatpush2.msra.mxu0 %v2914
    %2958 = vmatprep.subr.mxu0 %v2913
    %2959 = vmatpush2.msra.mxu0 %v2912
    %2960 = vmatprep.subr.mxu0 %v2911
    %2961 = vmatpush2.msra.mxu0 %v2910
    %2962 = vmatprep.subr.mxu0 %v2909
    %2963 = vmatpush2.msra.mxu0 %v2908
    %2964 = vmatprep.subr.mxu0 %v2907
    %2965 = vmatpush2.msra.mxu0 %v2906
    %2966 = vmatprep.subr.mxu0 %v2905
    %2967 = vmatpush2.msra.mxu0 %v2904
    %2968 = vmatprep.subr.mxu0 %v2903
    %2969 = vmatpush2.msra.mxu0 %v2902
    %2970 = vmatprep.subr.mxu0 %v2901
    %2971 = vmatpush2.msra.mxu0 %v2900
    %2972 = vmatprep.subr.mxu0 %v2899
    %2973 = vmatpush2.msra.mxu0 %v2898
    %2974 = vmatprep.subr.mxu0 %v2897
    %2975 = vmatpush2.msra.mxu0 %v2896
    %2976 = vmatprep.subr.mxu0 %v2895
    %2977 = vmatpush2.msra.mxu0 %v2894
    %2978 = vmatprep.subr.mxu0 %v2893
    %2979 = vmatpush2.msra.mxu0 %v2892
    %2980 = vmatprep.subr.mxu0 %v2891
    %2981 = vmatpush2.msra.mxu0 %v2890
    %2982 = vmatprep.subr.mxu0 %v2889
    %2983 = vmatpush2.msra.mxu0 %v2888
    %2984 = vmatprep.mubr.f32.mxu0 %v2576
    %2985 = vmatmul.mubr.f32.gmra.mxu0 %v2575
    %v2986 = vpop.f32.mrf.mxu0
    %v2987 = vadd.f32 0.0, %v2986
    %v2988 = vpop.f32.mrf.mxu0
    %v2989 = vadd.f32 0.0, %v2988
    %2990 = vmatprep.mubr.f32.mxu0 %v2578
    %2991 = vmatmul.mubr.f32.gmra.mxu0 %v2577
    %v2992 = vpop.f32.mrf.mxu0
    %v2993 = vadd.f32 0.0, %v2992
    %v2994 = vpop.f32.mrf.mxu0
    %v2995 = vadd.f32 0.0, %v2994
    %2996 = vmatprep.mubr.f32.mxu0 %v2580
    %2997 = vmatmul.mubr.f32.gmra.mxu0 %v2579
    %v2998 = vpop.f32.mrf.mxu0
    %v2999 = vadd.f32 0.0, %v2998
    %v3000 = vpop.f32.mrf.mxu0
    %v3001 = vadd.f32 0.0, %v3000
    %3002 = vmatprep.mubr.f32.mxu0 %v2582
    %3003 = vmatmul.mubr.f32.gmra.mxu0 %v2581
    %v3004 = vpop.f32.mrf.mxu0
    %v3005 = vadd.f32 0.0, %v3004
    %v3006 = vpop.f32.mrf.mxu0
    %v3007 = vadd.f32 0.0, %v3006
    %3008 = vmatprep.mubr.f32.mxu0 %v2584
    %3009 = vmatmul.mubr.f32.gmra.mxu0 %v2583
    %v3010 = vpop.f32.mrf.mxu0
    %v3011 = vadd.f32 0.0, %v3010
    %v3012 = vpop.f32.mrf.mxu0
    %v3013 = vadd.f32 0.0, %v3012
    %3014 = vmatprep.mubr.f32.mxu0 %v2586
    %3015 = vmatmul.mubr.f32.gmra.mxu0 %v2585
    %v3016 = vpop.f32.mrf.mxu0
    %v3017 = vadd.f32 0.0, %v3016
    %v3018 = vpop.f32.mrf.mxu0
    %v3019 = vadd.f32 0.0, %v3018
    %3020 = vmatprep.mubr.f32.mxu0 %v2588
    %3021 = vmatmul.mubr.f32.gmra.mxu0 %v2587
    %v3022 = vpop.f32.mrf.mxu0
    %v3023 = vadd.f32 0.0, %v3022
    %v3024 = vpop.f32.mrf.mxu0
    %v3025 = vadd.f32 0.0, %v3024
    %3026 = vmatprep.mubr.f32.mxu0 %v2854
    %3027 = vmatmul.mubr.f32.gmra.mxu0 %v2853
    %v3028 = vpop.f32.mrf.mxu0
    %v3029 = vadd.f32 0.0, %v3028
    %v3030 = vpop.f32.mrf.mxu0
    %v3031 = vadd.f32 0.0, %v3030
    %3032 = vdwg.mxu0
    %v3033 = vadd.f32 %v2837, %v2987
    %v3034 = vadd.f32 %v2838, %v2989
    %v3035 = vadd.f32 %v2839, %v2993
    %v3036 = vadd.f32 %v2840, %v2995
    %v3037 = vadd.f32 %v2841, %v2999
    %v3038 = vadd.f32 %v2842, %v3001
    %v3039 = vadd.f32 %v2843, %v3005
    %v3040 = vadd.f32 %v2844, %v3007
    %v3041 = vadd.f32 %v2845, %v3011
    %v3042 = vadd.f32 %v2846, %v3013
    %v3043 = vadd.f32 %v2847, %v3017
    %v3044 = vadd.f32 %v2848, %v3019
    %v3045 = vadd.f32 %v2849, %v3023
    %v3046 = vadd.f32 %v2850, %v3025
    %v3047 = vadd.f32 %v2851, %v3029
    %v3048 = vadd.f32 %v2852, %v3031
    %v3049 = vld [vmem:[%s4] sm:$0x3]
    %v3051 = vlaneseq
    %v3052 = vshrl.u32 %v3051, 7
    %v3053 = vsub.s32 0, %v3052
    %v3054 = vrot.slane %v3049, %v3053
    %v3055 = vlaneseq
    %v3056 = vshrl.u32 %v3055, 7
    %v3057 = vsub.s32 1, %v3056
    %v3058 = vrot.slane %v3049, %v3057
    %v3061 = vadd.f32 %v3033, %v3054
    %v3062 = vadd.f32 %v3034, %v3058
    %v3063 = vadd.f32 %v3035, %v3054
    %v3064 = vadd.f32 %v3036, %v3058
    %v3065 = vadd.f32 %v3037, %v3054
    %v3066 = vadd.f32 %v3038, %v3058
    %v3067 = vadd.f32 %v3039, %v3054
    %v3068 = vadd.f32 %v3040, %v3058
    %v3069 = vadd.f32 %v3041, %v3054
    %v3070 = vadd.f32 %v3042, %v3058
    %v3071 = vadd.f32 %v3043, %v3054
    %v3072 = vadd.f32 %v3044, %v3058
    %v3073 = vadd.f32 %v3045, %v3054
    %v3074 = vadd.f32 %v3046, %v3058
    %v3075 = vadd.f32 %v3047, %v3054
    %v3076 = vadd.f32 %v3048, %v3058
    %v3077 = vmax.f32 %v3061, 0.0
    %v3078 = vmax.f32 %v3062, 0.0
    %v3079 = vmax.f32 %v3063, 0.0
    %v3080 = vmax.f32 %v3064, 0.0
    %v3081 = vmax.f32 %v3065, 0.0
    %v3082 = vmax.f32 %v3066, 0.0
    %v3083 = vmax.f32 %v3067, 0.0
    %v3084 = vmax.f32 %v3068, 0.0
    %v3085 = vmax.f32 %v3069, 0.0
    %v3086 = vmax.f32 %v3070, 0.0
    %v3087 = vmax.f32 %v3071, 0.0
    %v3088 = vmax.f32 %v3072, 0.0
    %v3089 = vmax.f32 %v3073, 0.0
    %v3090 = vmax.f32 %v3074, 0.0
    %v3091 = vmax.f32 %v3075, 0.0
    %v3092 = vmax.f32 %v3076, 0.0
    %3093 = vst [vmem:[#allocation4] sm:$0xff] %v3077
    %3094 = vst [vmem:[#allocation4 + $0x8] sm:$0xff] %v3078
    %3095 = vst [vmem:[#allocation4 + $0x10] sm:$0xff] %v3079
    %3096 = vst [vmem:[#allocation4 + $0x18] sm:$0xff] %v3080
    %3097 = vst [vmem:[#allocation4 + $0x20] sm:$0xff] %v3081
    %3098 = vst [vmem:[#allocation4 + $0x28] sm:$0xff] %v3082
    %3099 = vst [vmem:[#allocation4 + $0x30] sm:$0xff] %v3083
    %3100 = vst [vmem:[#allocation4 + $0x38] sm:$0xff] %v3084
    %3101 = vst [vmem:[#allocation4 + $0x40] sm:$0xff] %v3085
    %3102 = vst [vmem:[#allocation4 + $0x48] sm:$0xff] %v3086
    %3103 = vst [vmem:[#allocation4 + $0x50] sm:$0xff] %v3087
    %3104 = vst [vmem:[#allocation4 + $0x58] sm:$0xff] %v3088
    %3105 = vst [vmem:[#allocation4 + $0x60] sm:$0xff] %v3089
    %3106 = vst [vmem:[#allocation4 + $0x68] sm:$0xff] %v3090
    %3107 = vst [vmem:[#allocation4 + $0x70] sm:$0xff] %v3091
    %3108 = vst [vmem:[#allocation4 + $0x78] sm:$0xff] %v3092
    %v3109 = vld [vmem:[#allocation4] sm:$0xff]
    %v3110 = vld [vmem:[#allocation4 + $0x8] sm:$0xff]
    %v3111 = vld [vmem:[#allocation4 + $0x10] sm:$0xff]
    %v3112 = vld [vmem:[#allocation4 + $0x18] sm:$0xff]
    %v3113 = vld [vmem:[#allocation4 + $0x20] sm:$0xff]
    %v3114 = vld [vmem:[#allocation4 + $0x28] sm:$0xff]
    %v3115 = vld [vmem:[#allocation4 + $0x30] sm:$0xff]
    %v3116 = vld [vmem:[#allocation4 + $0x38] sm:$0xff]
    %v3117 = vld [vmem:[#allocation4 + $0x40] sm:$0xff]
    %v3118 = vld [vmem:[#allocation4 + $0x48] sm:$0xff]
    %v3119 = vld [vmem:[#allocation4 + $0x50] sm:$0xff]
    %v3120 = vld [vmem:[#allocation4 + $0x58] sm:$0xff]
    %v3121 = vld [vmem:[#allocation4 + $0x60] sm:$0xff]
    %v3122 = vld [vmem:[#allocation4 + $0x68] sm:$0xff]
    %v3123 = vld [vmem:[#allocation4 + $0x70] sm:$0xff]
    %v3124 = vld [vmem:[#allocation4 + $0x78] sm:$0xff]
    %v3125 = vld [vmem:[#allocation4] sm:$0xf0]
    %v3126 = vld [vmem:[#allocation4 + $0x8] sm:$0xf0]
    %v3127 = vld [vmem:[#allocation4 + $0x80] sm:$0xf]
    %v3128 = vld [vmem:[#allocation4 + $0x88] sm:$0xf]
    %v3147 = vrot.slane %v3125, 4
    %v3148 = vrot.slane %v3111, 4
    %v3149 = vsel %vm996, %v3147, %v3148
    %v3150 = vrot.slane %v3126, 4
    %v3151 = vrot.slane %v3112, 4
    %v3152 = vsel %vm996, %v3150, %v3151
    %v3153 = vrot.slane %v3113, 4
    %v3154 = vsel %vm996, %v3148, %v3153
    %v3155 = vrot.slane %v3114, 4
    %v3156 = vsel %vm996, %v3151, %v3155
    %v3157 = vrot.slane %v3115, 4
    %v3158 = vsel %vm996, %v3153, %v3157
    %v3159 = vrot.slane %v3116, 4
    %v3160 = vsel %vm996, %v3155, %v3159
    %v3161 = vrot.slane %v3117, 4
    %v3162 = vsel %vm996, %v3157, %v3161
    %v3163 = vrot.slane %v3118, 4
    %v3164 = vsel %vm996, %v3159, %v3163
    %v3165 = vrot.slane %v3119, 4
    %v3166 = vsel %vm996, %v3161, %v3165
    %v3167 = vrot.slane %v3120, 4
    %v3168 = vsel %vm996, %v3163, %v3167
    %v3169 = vrot.slane %v3121, 4
    %v3170 = vsel %vm996, %v3165, %v3169
    %v3171 = vrot.slane %v3122, 4
    %v3172 = vsel %vm996, %v3167, %v3171
    %v3173 = vrot.slane %v3123, 4
    %v3174 = vsel %vm996, %v3169, %v3173
    %v3175 = vrot.slane %v3124, 4
    %v3176 = vsel %vm996, %v3171, %v3175
    %v3177 = vrot.slane %v3127, 4
    %v3178 = vsel %vm996, %v3173, %v3177
    %v3179 = vrot.slane %v3128, 4
    %v3180 = vsel %vm996, %v3175, %v3179
    %v3197 = vmax.f32 %v3109, %v3149
    %v3198 = vmax.f32 %v3110, %v3152
    %v3199 = vmax.f32 %v3111, %v3154
    %v3200 = vmax.f32 %v3112, %v3156
    %v3201 = vmax.f32 %v3113, %v3158
    %v3202 = vmax.f32 %v3114, %v3160
    %v3203 = vmax.f32 %v3115, %v3162
    %v3204 = vmax.f32 %v3116, %v3164
    %v3205 = vmax.f32 %v3117, %v3166
    %v3206 = vmax.f32 %v3118, %v3168
    %v3207 = vmax.f32 %v3119, %v3170
    %v3208 = vmax.f32 %v3120, %v3172
    %v3209 = vmax.f32 %v3121, %v3174
    %v3210 = vmax.f32 %v3122, %v3176
    %v3211 = vmax.f32 %v3123, %v3178
    %v3212 = vmax.f32 %v3124, %v3180
    %3213 = vmatprep.subr.mxu0 %v430
    %3214 = vmatpush1.msra.mxu0 %v429
    %3215 = vmatprep.subr.mxu0 %v428
    %3216 = vmatpush1.msra.mxu0 %v427
    %3217 = vmatprep.subr.mxu0 %v426
    %3218 = vmatpush1.msra.mxu0 %v425
    %3219 = vmatprep.subr.mxu0 %v424
    %3220 = vmatpush1.msra.mxu0 %v423
    %3221 = vmatprep.subr.mxu0 %v422
    %3222 = vmatpush1.msra.mxu0 %v421
    %3223 = vmatprep.subr.mxu0 %v420
    %3224 = vmatpush1.msra.mxu0 %v419
    %3225 = vmatprep.subr.mxu0 %v418
    %3226 = vmatpush1.msra.mxu0 %v417
    %3227 = vmatprep.subr.mxu0 %v416
    %3228 = vmatpush1.msra.mxu0 %v415
    %3229 = vmatprep.subr.mxu0 %v414
    %3230 = vmatpush1.msra.mxu0 %v413
    %3231 = vmatprep.subr.mxu0 %v412
    %3232 = vmatpush1.msra.mxu0 %v411
    %3233 = vmatprep.subr.mxu0 %v410
    %3234 = vmatpush1.msra.mxu0 %v409
    %3235 = vmatprep.subr.mxu0 %v408
    %3236 = vmatpush1.msra.mxu0 %v407
    %3237 = vmatprep.subr.mxu0 %v406
    %3238 = vmatpush1.msra.mxu0 %v405
    %3239 = vmatprep.subr.mxu0 %v404
    %3240 = vmatpush1.msra.mxu0 %v403
    %3241 = vmatprep.subr.mxu0 %v402
    %3242 = vmatpush1.msra.mxu0 %v401
    %3243 = vmatprep.subr.mxu0 %v400
    %3244 = vmatpush1.msra.mxu0 %v399
    %3245 = vmatprep.subr.mxu0 %v462
    %3246 = vmatpush2.msra.mxu0 %v461
    %3247 = vmatprep.subr.mxu0 %v460
    %3248 = vmatpush2.msra.mxu0 %v459
    %3249 = vmatprep.subr.mxu0 %v458
    %3250 = vmatpush2.msra.mxu0 %v457
    %3251 = vmatprep.subr.mxu0 %v456
    %3252 = vmatpush2.msra.mxu0 %v455
    %3253 = vmatprep.subr.mxu0 %v454
    %3254 = vmatpush2.msra.mxu0 %v453
    %3255 = vmatprep.subr.mxu0 %v452
    %3256 = vmatpush2.msra.mxu0 %v451
    %3257 = vmatprep.subr.mxu0 %v450
    %3258 = vmatpush2.msra.mxu0 %v449
    %3259 = vmatprep.subr.mxu0 %v448
    %3260 = vmatpush2.msra.mxu0 %v447
    %3261 = vmatprep.subr.mxu0 %v446
    %3262 = vmatpush2.msra.mxu0 %v445
    %3263 = vmatprep.subr.mxu0 %v444
    %3264 = vmatpush2.msra.mxu0 %v443
    %3265 = vmatprep.subr.mxu0 %v442
    %3266 = vmatpush2.msra.mxu0 %v441
    %3267 = vmatprep.subr.mxu0 %v440
    %3268 = vmatpush2.msra.mxu0 %v439
    %3269 = vmatprep.subr.mxu0 %v438
    %3270 = vmatpush2.msra.mxu0 %v437
    %3271 = vmatprep.subr.mxu0 %v436
    %3272 = vmatpush2.msra.mxu0 %v435
    %3273 = vmatprep.subr.mxu0 %v434
    %3274 = vmatpush2.msra.mxu0 %v433
    %3275 = vmatprep.subr.mxu0 %v432
    %3276 = vmatpush2.msra.mxu0 %v431
    %3277 = vmatprep.mubr.f32.mxu0 %v3198
    %3278 = vmatmul.mubr.f32.gmra.mxu0 %v3197
    %v3279 = vpop.f32.mrf.mxu0
    %v3280 = vadd.f32 0.0, %v3279
    %v3281 = vpop.f32.mrf.mxu0
    %v3282 = vadd.f32 0.0, %v3281
    %3283 = vmatprep.mubr.f32.mxu0 %v3200
    %3284 = vmatmul.mubr.f32.gmra.mxu0 %v3199
    %v3285 = vpop.f32.mrf.mxu0
    %v3286 = vadd.f32 0.0, %v3285
    %v3287 = vpop.f32.mrf.mxu0
    %v3288 = vadd.f32 0.0, %v3287
    %3289 = vmatprep.mubr.f32.mxu0 %v3202
    %3290 = vmatmul.mubr.f32.gmra.mxu0 %v3201
    %v3291 = vpop.f32.mrf.mxu0
    %v3292 = vadd.f32 0.0, %v3291
    %v3293 = vpop.f32.mrf.mxu0
    %v3294 = vadd.f32 0.0, %v3293
    %3295 = vmatprep.mubr.f32.mxu0 %v3204
    %3296 = vmatmul.mubr.f32.gmra.mxu0 %v3203
    %v3297 = vpop.f32.mrf.mxu0
    %v3298 = vadd.f32 0.0, %v3297
    %v3299 = vpop.f32.mrf.mxu0
    %v3300 = vadd.f32 0.0, %v3299
    %3301 = vmatprep.mubr.f32.mxu0 %v3206
    %3302 = vmatmul.mubr.f32.gmra.mxu0 %v3205
    %v3303 = vpop.f32.mrf.mxu0
    %v3304 = vadd.f32 0.0, %v3303
    %v3305 = vpop.f32.mrf.mxu0
    %v3306 = vadd.f32 0.0, %v3305
    %3307 = vmatprep.mubr.f32.mxu0 %v3208
    %3308 = vmatmul.mubr.f32.gmra.mxu0 %v3207
    %v3309 = vpop.f32.mrf.mxu0
    %v3310 = vadd.f32 0.0, %v3309
    %v3311 = vpop.f32.mrf.mxu0
    %v3312 = vadd.f32 0.0, %v3311
    %3313 = vmatprep.mubr.f32.mxu0 %v3210
    %3314 = vmatmul.mubr.f32.gmra.mxu0 %v3209
    %v3315 = vpop.f32.mrf.mxu0
    %v3316 = vadd.f32 0.0, %v3315
    %v3317 = vpop.f32.mrf.mxu0
    %v3318 = vadd.f32 0.0, %v3317
    %3319 = vmatprep.mubr.f32.mxu0 %v3212
    %3320 = vmatmul.mubr.f32.gmra.mxu0 %v3211
    %v3321 = vpop.f32.mrf.mxu0
    %v3322 = vadd.f32 0.0, %v3321
    %v3323 = vpop.f32.mrf.mxu0
    %v3324 = vadd.f32 0.0, %v3323
    %3325 = vdwg.mxu0
    %v3326 = vmax.f32 %v3197, %v3280
    %v3327 = vmax.f32 %v3198, %v3282
    %v3328 = vmax.f32 %v3199, %v3286
    %v3329 = vmax.f32 %v3200, %v3288
    %v3330 = vmax.f32 %v3201, %v3292
    %v3331 = vmax.f32 %v3202, %v3294
    %v3332 = vmax.f32 %v3203, %v3298
    %v3333 = vmax.f32 %v3204, %v3300
    %v3334 = vmax.f32 %v3205, %v3304
    %v3335 = vmax.f32 %v3206, %v3306
    %v3336 = vmax.f32 %v3207, %v3310
    %v3337 = vmax.f32 %v3208, %v3312
    %v3338 = vmax.f32 %v3209, %v3316
    %v3339 = vmax.f32 %v3210, %v3318
    %v3340 = vmax.f32 %v3211, %v3322
    %v3341 = vmax.f32 %v3212, %v3324
    %3342 = vst [vmem:[#allocation5] sm:$0xff] %v3326
    %3343 = vst [vmem:[#allocation5 + $0x8] sm:$0xff] %v3327
    %3344 = vst [vmem:[#allocation5 + $0x10] sm:$0xff] %v3328
    %3345 = vst [vmem:[#allocation5 + $0x18] sm:$0xff] %v3329
    %3346 = vst [vmem:[#allocation5 + $0x20] sm:$0xff] %v3330
    %3347 = vst [vmem:[#allocation5 + $0x28] sm:$0xff] %v3331
    %3348 = vst [vmem:[#allocation5 + $0x30] sm:$0xff] %v3332
    %3349 = vst [vmem:[#allocation5 + $0x38] sm:$0xff] %v3333
    %3350 = vst [vmem:[#allocation5 + $0x40] sm:$0xff] %v3334
    %3351 = vst [vmem:[#allocation5 + $0x48] sm:$0xff] %v3335
    %3352 = vst [vmem:[#allocation5 + $0x50] sm:$0xff] %v3336
    %3353 = vst [vmem:[#allocation5 + $0x58] sm:$0xff] %v3337
    %3354 = vst [vmem:[#allocation5 + $0x60] sm:$0xff] %v3338
    %3355 = vst [vmem:[#allocation5 + $0x68] sm:$0xff] %v3339
    %3356 = vst [vmem:[#allocation5 + $0x70] sm:$0xff] %v3340
    %3357 = vst [vmem:[#allocation5 + $0x78] sm:$0xff] %v3341
    %v3358 = vld [vmem:[#allocation5] sm:$0x3]
    %v3359 = vld [vmem:[#allocation5 + $0x8] sm:$0x3]
    %v3360 = vld [vmem:[%s5] sm:$0xff]
    %v3361 = vld [vmem:[%s5 + $0x8] sm:$0xff]
    %v3362 = vld [vmem:[%s5 + $0x10] sm:$0xff]
    %v3363 = vld [vmem:[%s5 + $0x18] sm:$0xff]
    %v3364 = vld [vmem:[%s5 + $0x20] sm:$0xff]
    %v3365 = vld [vmem:[%s5 + $0x28] sm:$0xff]
    %v3366 = vld [vmem:[%s5 + $0x30] sm:$0xff]
    %v3367 = vld [vmem:[%s5 + $0x38] sm:$0xff]
    %v3368 = vld [vmem:[%s5 + $0x40] sm:$0xff]
    %v3369 = vld [vmem:[%s5 + $0x48] sm:$0xff]
    %v3370 = vld [vmem:[%s5 + $0x50] sm:$0xff]
    %v3371 = vld [vmem:[%s5 + $0x58] sm:$0xff]
    %v3372 = vld [vmem:[%s5 + $0x60] sm:$0xff]
    %v3373 = vld [vmem:[%s5 + $0x68] sm:$0xff]
    %v3374 = vld [vmem:[%s5 + $0x70] sm:$0xff]
    %v3375 = vld [vmem:[%s5 + $0x78] sm:$0xff]
    %v3376 = vld [vmem:[%s5 + $0x80] sm:$0xff]
    %v3377 = vld [vmem:[%s5 + $0x88] sm:$0xff]
    %v3378 = vld [vmem:[%s5 + $0x90] sm:$0xff]
    %v3379 = vld [vmem:[%s5 + $0x98] sm:$0xff]
    %v3380 = vld [vmem:[%s5 + $0xa0] sm:$0xff]
    %v3381 = vld [vmem:[%s5 + $0xa8] sm:$0xff]
    %v3382 = vld [vmem:[%s5 + $0xb0] sm:$0xff]
    %v3383 = vld [vmem:[%s5 + $0xb8] sm:$0xff]
    %v3384 = vld [vmem:[%s5 + $0xc0] sm:$0xff]
    %v3385 = vld [vmem:[%s5 + $0xc8] sm:$0xff]
    %v3386 = vld [vmem:[%s5 + $0xd0] sm:$0xff]
    %v3387 = vld [vmem:[%s5 + $0xd8] sm:$0xff]
    %v3388 = vld [vmem:[%s5 + $0xe0] sm:$0xff]
    %v3389 = vld [vmem:[%s5 + $0xe8] sm:$0xff]
    %v3390 = vld [vmem:[%s5 + $0xf0] sm:$0xff]
    %v3391 = vld [vmem:[%s5 + $0xf8] sm:$0xff]
    %v3392 = vld [vmem:[#allocation5 + $0x10] sm:$0x3]
    %v3393 = vld [vmem:[#allocation5 + $0x18] sm:$0x3]
    %s3394 = scalar_lea.vmem %s5, 256
    %v3395 = vld [vmem:[%s3394] sm:$0xff]
    %v3396 = vld [vmem:[%s3394 + $0x8] sm:$0xff]
    %v3397 = vld [vmem:[%s3394 + $0x10] sm:$0xff]
    %v3398 = vld [vmem:[%s3394 + $0x18] sm:$0xff]
    %v3399 = vld [vmem:[%s3394 + $0x20] sm:$0xff]
    %v3400 = vld [vmem:[%s3394 + $0x28] sm:$0xff]
    %v3401 = vld [vmem:[%s3394 + $0x30] sm:$0xff]
    %v3402 = vld [vmem:[%s3394 + $0x38] sm:$0xff]
    %v3403 = vld [vmem:[%s3394 + $0x40] sm:$0xff]
    %v3404 = vld [vmem:[%s3394 + $0x48] sm:$0xff]
    %v3405 = vld [vmem:[%s3394 + $0x50] sm:$0xff]
    %v3406 = vld [vmem:[%s3394 + $0x58] sm:$0xff]
    %v3407 = vld [vmem:[%s3394 + $0x60] sm:$0xff]
    %v3408 = vld [vmem:[%s3394 + $0x68] sm:$0xff]
    %v3409 = vld [vmem:[%s3394 + $0x70] sm:$0xff]
    %v3410 = vld [vmem:[%s3394 + $0x78] sm:$0xff]
    %v3411 = vld [vmem:[%s3394 + $0x80] sm:$0xff]
    %v3412 = vld [vmem:[%s3394 + $0x88] sm:$0xff]
    %v3413 = vld [vmem:[%s3394 + $0x90] sm:$0xff]
    %v3414 = vld [vmem:[%s3394 + $0x98] sm:$0xff]
    %v3415 = vld [vmem:[%s3394 + $0xa0] sm:$0xff]
    %v3416 = vld [vmem:[%s3394 + $0xa8] sm:$0xff]
    %v3417 = vld [vmem:[%s3394 + $0xb0] sm:$0xff]
    %v3418 = vld [vmem:[%s3394 + $0xb8] sm:$0xff]
    %v3419 = vld [vmem:[%s3394 + $0xc0] sm:$0xff]
    %v3420 = vld [vmem:[%s3394 + $0xc8] sm:$0xff]
    %v3421 = vld [vmem:[%s3394 + $0xd0] sm:$0xff]
    %v3422 = vld [vmem:[%s3394 + $0xd8] sm:$0xff]
    %v3423 = vld [vmem:[%s3394 + $0xe0] sm:$0xff]
    %v3424 = vld [vmem:[%s3394 + $0xe8] sm:$0xff]
    %v3425 = vld [vmem:[%s3394 + $0xf0] sm:$0xff]
    %v3426 = vld [vmem:[%s3394 + $0xf8] sm:$0xff]
    %3427 = vmatprep.subr.mxu0 0.0
    %3428 = vmatpush1.msra.mxu0 %v3410
    %3429 = vmatprep.subr.mxu0 0.0
    %3430 = vmatpush1.msra.mxu0 %v3409
    %3431 = vmatprep.subr.mxu0 0.0
    %3432 = vmatpush1.msra.mxu0 %v3408
    %3433 = vmatprep.subr.mxu0 0.0
    %3434 = vmatpush1.msra.mxu0 %v3407
    %3435 = vmatprep.subr.mxu0 0.0
    %3436 = vmatpush1.msra.mxu0 %v3406
    %3437 = vmatprep.subr.mxu0 0.0
    %3438 = vmatpush1.msra.mxu0 %v3405
    %3439 = vmatprep.subr.mxu0 0.0
    %3440 = vmatpush1.msra.mxu0 %v3404
    %3441 = vmatprep.subr.mxu0 0.0
    %3442 = vmatpush1.msra.mxu0 %v3403
    %3443 = vmatprep.subr.mxu0 0.0
    %3444 = vmatpush1.msra.mxu0 %v3402
    %3445 = vmatprep.subr.mxu0 0.0
    %3446 = vmatpush1.msra.mxu0 %v3401
    %3447 = vmatprep.subr.mxu0 0.0
    %3448 = vmatpush1.msra.mxu0 %v3400
    %3449 = vmatprep.subr.mxu0 0.0
    %3450 = vmatpush1.msra.mxu0 %v3399
    %3451 = vmatprep.subr.mxu0 0.0
    %3452 = vmatpush1.msra.mxu0 %v3398
    %3453 = vmatprep.subr.mxu0 0.0
    %3454 = vmatpush1.msra.mxu0 %v3397
    %3455 = vmatprep.subr.mxu0 0.0
    %3456 = vmatpush1.msra.mxu0 %v3396
    %3457 = vmatprep.subr.mxu0 0.0
    %3458 = vmatpush1.msra.mxu0 %v3395
    %3459 = vmatprep.subr.mxu0 0.0
    %3460 = vmatpush2.msra.mxu0 %v3426
    %3461 = vmatprep.subr.mxu0 0.0
    %3462 = vmatpush2.msra.mxu0 %v3425
    %3463 = vmatprep.subr.mxu0 0.0
    %3464 = vmatpush2.msra.mxu0 %v3424
    %3465 = vmatprep.subr.mxu0 0.0
    %3466 = vmatpush2.msra.mxu0 %v3423
    %3467 = vmatprep.subr.mxu0 0.0
    %3468 = vmatpush2.msra.mxu0 %v3422
    %3469 = vmatprep.subr.mxu0 0.0
    %3470 = vmatpush2.msra.mxu0 %v3421
    %3471 = vmatprep.subr.mxu0 0.0
    %3472 = vmatpush2.msra.mxu0 %v3420
    %3473 = vmatprep.subr.mxu0 0.0
    %3474 = vmatpush2.msra.mxu0 %v3419
    %3475 = vmatprep.subr.mxu0 0.0
    %3476 = vmatpush2.msra.mxu0 %v3418
    %3477 = vmatprep.subr.mxu0 0.0
    %3478 = vmatpush2.msra.mxu0 %v3417
    %3479 = vmatprep.subr.mxu0 0.0
    %3480 = vmatpush2.msra.mxu0 %v3416
    %3481 = vmatprep.subr.mxu0 0.0
    %3482 = vmatpush2.msra.mxu0 %v3415
    %3483 = vmatprep.subr.mxu0 0.0
    %3484 = vmatpush2.msra.mxu0 %v3414
    %3485 = vmatprep.subr.mxu0 0.0
    %3486 = vmatpush2.msra.mxu0 %v3413
    %3487 = vmatprep.subr.mxu0 0.0
    %3488 = vmatpush2.msra.mxu0 %v3412
    %3489 = vmatprep.subr.mxu0 0.0
    %3490 = vmatpush2.msra.mxu0 %v3411
    %3491 = vmatprep.mubr.f32.mxu0 %v3393
    %3492 = vmatmul.mubr.f32.gmra.mxu0 %v3392
    %v3493 = vpop.f32.mrf.mxu0
    %v3494 = vadd.f32 0.0, %v3493
    %v3495 = vpop.f32.mrf.mxu0
    %3496 = vdwg.mxu0
    %3497 = vmatprep.subr.mxu0 0.0
    %3498 = vmatpush1.msra.mxu0 %v3375
    %3499 = vmatprep.subr.mxu0 0.0
    %3500 = vmatpush1.msra.mxu0 %v3374
    %3501 = vmatprep.subr.mxu0 0.0
    %3502 = vmatpush1.msra.mxu0 %v3373
    %3503 = vmatprep.subr.mxu0 0.0
    %3504 = vmatpush1.msra.mxu0 %v3372
    %3505 = vmatprep.subr.mxu0 0.0
    %3506 = vmatpush1.msra.mxu0 %v3371
    %3507 = vmatprep.subr.mxu0 0.0
    %3508 = vmatpush1.msra.mxu0 %v3370
    %3509 = vmatprep.subr.mxu0 0.0
    %3510 = vmatpush1.msra.mxu0 %v3369
    %3511 = vmatprep.subr.mxu0 0.0
    %3512 = vmatpush1.msra.mxu0 %v3368
    %3513 = vmatprep.subr.mxu0 0.0
    %3514 = vmatpush1.msra.mxu0 %v3367
    %3515 = vmatprep.subr.mxu0 0.0
    %3516 = vmatpush1.msra.mxu0 %v3366
    %3517 = vmatprep.subr.mxu0 0.0
    %3518 = vmatpush1.msra.mxu0 %v3365
    %3519 = vmatprep.subr.mxu0 0.0
    %3520 = vmatpush1.msra.mxu0 %v3364
    %3521 = vmatprep.subr.mxu0 0.0
    %3522 = vmatpush1.msra.mxu0 %v3363
    %3523 = vmatprep.subr.mxu0 0.0
    %3524 = vmatpush1.msra.mxu0 %v3362
    %3525 = vmatprep.subr.mxu0 0.0
    %3526 = vmatpush1.msra.mxu0 %v3361
    %3527 = vmatprep.subr.mxu0 0.0
    %3528 = vmatpush1.msra.mxu0 %v3360
    %3529 = vmatprep.subr.mxu0 0.0
    %3530 = vmatpush2.msra.mxu0 %v3391
    %3531 = vmatprep.subr.mxu0 0.0
    %3532 = vmatpush2.msra.mxu0 %v3390
    %3533 = vmatprep.subr.mxu0 0.0
    %3534 = vmatpush2.msra.mxu0 %v3389
    %3535 = vmatprep.subr.mxu0 0.0
    %3536 = vmatpush2.msra.mxu0 %v3388
    %3537 = vmatprep.subr.mxu0 0.0
    %3538 = vmatpush2.msra.mxu0 %v3387
    %3539 = vmatprep.subr.mxu0 0.0
    %3540 = vmatpush2.msra.mxu0 %v3386
    %3541 = vmatprep.subr.mxu0 0.0
    %3542 = vmatpush2.msra.mxu0 %v3385
    %3543 = vmatprep.subr.mxu0 0.0
    %3544 = vmatpush2.msra.mxu0 %v3384
    %3545 = vmatprep.subr.mxu0 0.0
    %3546 = vmatpush2.msra.mxu0 %v3383
    %3547 = vmatprep.subr.mxu0 0.0
    %3548 = vmatpush2.msra.mxu0 %v3382
    %3549 = vmatprep.subr.mxu0 0.0
    %3550 = vmatpush2.msra.mxu0 %v3381
    %3551 = vmatprep.subr.mxu0 0.0
    %3552 = vmatpush2.msra.mxu0 %v3380
    %3553 = vmatprep.subr.mxu0 0.0
    %3554 = vmatpush2.msra.mxu0 %v3379
    %3555 = vmatprep.subr.mxu0 0.0
    %3556 = vmatpush2.msra.mxu0 %v3378
    %3557 = vmatprep.subr.mxu0 0.0
    %3558 = vmatpush2.msra.mxu0 %v3377
    %3559 = vmatprep.subr.mxu0 0.0
    %3560 = vmatpush2.msra.mxu0 %v3376
    %3561 = vmatprep.mubr.f32.mxu0 %v3359
    %3562 = vmatmul.mubr.f32.gmra.mxu0 %v3358
    %v3563 = vpop.f32.mrf.mxu0
    %v3564 = vadd.f32 %v3494, %v3563
    %v3565 = vpop.f32.mrf.mxu0
    %3566 = vdwg.mxu0
    %v3567 = vld [vmem:[#allocation5 + $0x20] sm:$0x3]
    %v3568 = vld [vmem:[#allocation5 + $0x28] sm:$0x3]
    %s3569 = scalar_lea.vmem %s5, 512
    %v3570 = vld [vmem:[%s3569] sm:$0xff]
    %v3571 = vld [vmem:[%s3569 + $0x8] sm:$0xff]
    %v3572 = vld [vmem:[%s3569 + $0x10] sm:$0xff]
    %v3573 = vld [vmem:[%s3569 + $0x18] sm:$0xff]
    %v3574 = vld [vmem:[%s3569 + $0x20] sm:$0xff]
    %v3575 = vld [vmem:[%s3569 + $0x28] sm:$0xff]
    %v3576 = vld [vmem:[%s3569 + $0x30] sm:$0xff]
    %v3577 = vld [vmem:[%s3569 + $0x38] sm:$0xff]
    %v3578 = vld [vmem:[%s3569 + $0x40] sm:$0xff]
    %v3579 = vld [vmem:[%s3569 + $0x48] sm:$0xff]
    %v3580 = vld [vmem:[%s3569 + $0x50] sm:$0xff]
    %v3581 = vld [vmem:[%s3569 + $0x58] sm:$0xff]
    %v3582 = vld [vmem:[%s3569 + $0x60] sm:$0xff]
    %v3583 = vld [vmem:[%s3569 + $0x68] sm:$0xff]
    %v3584 = vld [vmem:[%s3569 + $0x70] sm:$0xff]
    %v3585 = vld [vmem:[%s3569 + $0x78] sm:$0xff]
    %v3586 = vld [vmem:[%s3569 + $0x80] sm:$0xff]
    %v3587 = vld [vmem:[%s3569 + $0x88] sm:$0xff]
    %v3588 = vld [vmem:[%s3569 + $0x90] sm:$0xff]
    %v3589 = vld [vmem:[%s3569 + $0x98] sm:$0xff]
    %v3590 = vld [vmem:[%s3569 + $0xa0] sm:$0xff]
    %v3591 = vld [vmem:[%s3569 + $0xa8] sm:$0xff]
    %v3592 = vld [vmem:[%s3569 + $0xb0] sm:$0xff]
    %v3593 = vld [vmem:[%s3569 + $0xb8] sm:$0xff]
    %v3594 = vld [vmem:[%s3569 + $0xc0] sm:$0xff]
    %v3595 = vld [vmem:[%s3569 + $0xc8] sm:$0xff]
    %v3596 = vld [vmem:[%s3569 + $0xd0] sm:$0xff]
    %v3597 = vld [vmem:[%s3569 + $0xd8] sm:$0xff]
    %v3598 = vld [vmem:[%s3569 + $0xe0] sm:$0xff]
    %v3599 = vld [vmem:[%s3569 + $0xe8] sm:$0xff]
    %v3600 = vld [vmem:[%s3569 + $0xf0] sm:$0xff]
    %v3601 = vld [vmem:[%s3569 + $0xf8] sm:$0xff]
    %3602 = vmatprep.subr.mxu0 0.0
    %3603 = vmatpush1.msra.mxu0 %v3585
    %3604 = vmatprep.subr.mxu0 0.0
    %3605 = vmatpush1.msra.mxu0 %v3584
    %3606 = vmatprep.subr.mxu0 0.0
    %3607 = vmatpush1.msra.mxu0 %v3583
    %3608 = vmatprep.subr.mxu0 0.0
    %3609 = vmatpush1.msra.mxu0 %v3582
    %3610 = vmatprep.subr.mxu0 0.0
    %3611 = vmatpush1.msra.mxu0 %v3581
    %3612 = vmatprep.subr.mxu0 0.0
    %3613 = vmatpush1.msra.mxu0 %v3580
    %3614 = vmatprep.subr.mxu0 0.0
    %3615 = vmatpush1.msra.mxu0 %v3579
    %3616 = vmatprep.subr.mxu0 0.0
    %3617 = vmatpush1.msra.mxu0 %v3578
    %3618 = vmatprep.subr.mxu0 0.0
    %3619 = vmatpush1.msra.mxu0 %v3577
    %3620 = vmatprep.subr.mxu0 0.0
    %3621 = vmatpush1.msra.mxu0 %v3576
    %3622 = vmatprep.subr.mxu0 0.0
    %3623 = vmatpush1.msra.mxu0 %v3575
    %3624 = vmatprep.subr.mxu0 0.0
    %3625 = vmatpush1.msra.mxu0 %v3574
    %3626 = vmatprep.subr.mxu0 0.0
    %3627 = vmatpush1.msra.mxu0 %v3573
    %3628 = vmatprep.subr.mxu0 0.0
    %3629 = vmatpush1.msra.mxu0 %v3572
    %3630 = vmatprep.subr.mxu0 0.0
    %3631 = vmatpush1.msra.mxu0 %v3571
    %3632 = vmatprep.subr.mxu0 0.0
    %3633 = vmatpush1.msra.mxu0 %v3570
    %3634 = vmatprep.subr.mxu0 0.0
    %3635 = vmatpush2.msra.mxu0 %v3601
    %3636 = vmatprep.subr.mxu0 0.0
    %3637 = vmatpush2.msra.mxu0 %v3600
    %3638 = vmatprep.subr.mxu0 0.0
    %3639 = vmatpush2.msra.mxu0 %v3599
    %3640 = vmatprep.subr.mxu0 0.0
    %3641 = vmatpush2.msra.mxu0 %v3598
    %3642 = vmatprep.subr.mxu0 0.0
    %3643 = vmatpush2.msra.mxu0 %v3597
    %3644 = vmatprep.subr.mxu0 0.0
    %3645 = vmatpush2.msra.mxu0 %v3596
    %3646 = vmatprep.subr.mxu0 0.0
    %3647 = vmatpush2.msra.mxu0 %v3595
    %3648 = vmatprep.subr.mxu0 0.0
    %3649 = vmatpush2.msra.mxu0 %v3594
    %3650 = vmatprep.subr.mxu0 0.0
    %3651 = vmatpush2.msra.mxu0 %v3593
    %3652 = vmatprep.subr.mxu0 0.0
    %3653 = vmatpush2.msra.mxu0 %v3592
    %3654 = vmatprep.subr.mxu0 0.0
    %3655 = vmatpush2.msra.mxu0 %v3591
    %3656 = vmatprep.subr.mxu0 0.0
    %3657 = vmatpush2.msra.mxu0 %v3590
    %3658 = vmatprep.subr.mxu0 0.0
    %3659 = vmatpush2.msra.mxu0 %v3589
    %3660 = vmatprep.subr.mxu0 0.0
    %3661 = vmatpush2.msra.mxu0 %v3588
    %3662 = vmatprep.subr.mxu0 0.0
    %3663 = vmatpush2.msra.mxu0 %v3587
    %3664 = vmatprep.subr.mxu0 0.0
    %3665 = vmatpush2.msra.mxu0 %v3586
    %3666 = vmatprep.mubr.f32.mxu0 %v3568
    %3667 = vmatmul.mubr.f32.gmra.mxu0 %v3567
    %v3668 = vpop.f32.mrf.mxu0
    %v3669 = vadd.f32 0.0, %v3668
    %v3670 = vpop.f32.mrf.mxu0
    %3671 = vdwg.mxu0
    %v3672 = vadd.f32 %v3564, %v3669
    %v3673 = vld [vmem:[#allocation5 + $0x30] sm:$0x3]
    %v3674 = vld [vmem:[#allocation5 + $0x38] sm:$0x3]
    %s3675 = scalar_lea.vmem %s5, 768
    %v3676 = vld [vmem:[%s3675] sm:$0xff]
    %v3677 = vld [vmem:[%s3675 + $0x8] sm:$0xff]
    %v3678 = vld [vmem:[%s3675 + $0x10] sm:$0xff]
    %v3679 = vld [vmem:[%s3675 + $0x18] sm:$0xff]
    %v3680 = vld [vmem:[%s3675 + $0x20] sm:$0xff]
    %v3681 = vld [vmem:[%s3675 + $0x28] sm:$0xff]
    %v3682 = vld [vmem:[%s3675 + $0x30] sm:$0xff]
    %v3683 = vld [vmem:[%s3675 + $0x38] sm:$0xff]
    %v3684 = vld [vmem:[%s3675 + $0x40] sm:$0xff]
    %v3685 = vld [vmem:[%s3675 + $0x48] sm:$0xff]
    %v3686 = vld [vmem:[%s3675 + $0x50] sm:$0xff]
    %v3687 = vld [vmem:[%s3675 + $0x58] sm:$0xff]
    %v3688 = vld [vmem:[%s3675 + $0x60] sm:$0xff]
    %v3689 = vld [vmem:[%s3675 + $0x68] sm:$0xff]
    %v3690 = vld [vmem:[%s3675 + $0x70] sm:$0xff]
    %v3691 = vld [vmem:[%s3675 + $0x78] sm:$0xff]
    %v3692 = vld [vmem:[%s3675 + $0x80] sm:$0xff]
    %v3693 = vld [vmem:[%s3675 + $0x88] sm:$0xff]
    %v3694 = vld [vmem:[%s3675 + $0x90] sm:$0xff]
    %v3695 = vld [vmem:[%s3675 + $0x98] sm:$0xff]
    %v3696 = vld [vmem:[%s3675 + $0xa0] sm:$0xff]
    %v3697 = vld [vmem:[%s3675 + $0xa8] sm:$0xff]
    %v3698 = vld [vmem:[%s3675 + $0xb0] sm:$0xff]
    %v3699 = vld [vmem:[%s3675 + $0xb8] sm:$0xff]
    %v3700 = vld [vmem:[%s3675 + $0xc0] sm:$0xff]
    %v3701 = vld [vmem:[%s3675 + $0xc8] sm:$0xff]
    %v3702 = vld [vmem:[%s3675 + $0xd0] sm:$0xff]
    %v3703 = vld [vmem:[%s3675 + $0xd8] sm:$0xff]
    %v3704 = vld [vmem:[%s3675 + $0xe0] sm:$0xff]
    %v3705 = vld [vmem:[%s3675 + $0xe8] sm:$0xff]
    %v3706 = vld [vmem:[%s3675 + $0xf0] sm:$0xff]
    %v3707 = vld [vmem:[%s3675 + $0xf8] sm:$0xff]
    %3708 = vmatprep.subr.mxu0 0.0
    %3709 = vmatpush1.msra.mxu0 %v3691
    %3710 = vmatprep.subr.mxu0 0.0
    %3711 = vmatpush1.msra.mxu0 %v3690
    %3712 = vmatprep.subr.mxu0 0.0
    %3713 = vmatpush1.msra.mxu0 %v3689
    %3714 = vmatprep.subr.mxu0 0.0
    %3715 = vmatpush1.msra.mxu0 %v3688
    %3716 = vmatprep.subr.mxu0 0.0
    %3717 = vmatpush1.msra.mxu0 %v3687
    %3718 = vmatprep.subr.mxu0 0.0
    %3719 = vmatpush1.msra.mxu0 %v3686
    %3720 = vmatprep.subr.mxu0 0.0
    %3721 = vmatpush1.msra.mxu0 %v3685
    %3722 = vmatprep.subr.mxu0 0.0
    %3723 = vmatpush1.msra.mxu0 %v3684
    %3724 = vmatprep.subr.mxu0 0.0
    %3725 = vmatpush1.msra.mxu0 %v3683
    %3726 = vmatprep.subr.mxu0 0.0
    %3727 = vmatpush1.msra.mxu0 %v3682
    %3728 = vmatprep.subr.mxu0 0.0
    %3729 = vmatpush1.msra.mxu0 %v3681
    %3730 = vmatprep.subr.mxu0 0.0
    %3731 = vmatpush1.msra.mxu0 %v3680
    %3732 = vmatprep.subr.mxu0 0.0
    %3733 = vmatpush1.msra.mxu0 %v3679
    %3734 = vmatprep.subr.mxu0 0.0
    %3735 = vmatpush1.msra.mxu0 %v3678
    %3736 = vmatprep.subr.mxu0 0.0
    %3737 = vmatpush1.msra.mxu0 %v3677
    %3738 = vmatprep.subr.mxu0 0.0
    %3739 = vmatpush1.msra.mxu0 %v3676
    %3740 = vmatprep.subr.mxu0 0.0
    %3741 = vmatpush2.msra.mxu0 %v3707
    %3742 = vmatprep.subr.mxu0 0.0
    %3743 = vmatpush2.msra.mxu0 %v3706
    %3744 = vmatprep.subr.mxu0 0.0
    %3745 = vmatpush2.msra.mxu0 %v3705
    %3746 = vmatprep.subr.mxu0 0.0
    %3747 = vmatpush2.msra.mxu0 %v3704
    %3748 = vmatprep.subr.mxu0 0.0
    %3749 = vmatpush2.msra.mxu0 %v3703
    %3750 = vmatprep.subr.mxu0 0.0
    %3751 = vmatpush2.msra.mxu0 %v3702
    %3752 = vmatprep.subr.mxu0 0.0
    %3753 = vmatpush2.msra.mxu0 %v3701
    %3754 = vmatprep.subr.mxu0 0.0
    %3755 = vmatpush2.msra.mxu0 %v3700
    %3756 = vmatprep.subr.mxu0 0.0
    %3757 = vmatpush2.msra.mxu0 %v3699
    %3758 = vmatprep.subr.mxu0 0.0
    %3759 = vmatpush2.msra.mxu0 %v3698
    %3760 = vmatprep.subr.mxu0 0.0
    %3761 = vmatpush2.msra.mxu0 %v3697
    %3762 = vmatprep.subr.mxu0 0.0
    %3763 = vmatpush2.msra.mxu0 %v3696
    %3764 = vmatprep.subr.mxu0 0.0
    %3765 = vmatpush2.msra.mxu0 %v3695
    %3766 = vmatprep.subr.mxu0 0.0
    %3767 = vmatpush2.msra.mxu0 %v3694
    %3768 = vmatprep.subr.mxu0 0.0
    %3769 = vmatpush2.msra.mxu0 %v3693
    %3770 = vmatprep.subr.mxu0 0.0
    %3771 = vmatpush2.msra.mxu0 %v3692
    %3772 = vmatprep.mubr.f32.mxu0 %v3674
    %3773 = vmatmul.mubr.f32.gmra.mxu0 %v3673
    %v3774 = vpop.f32.mrf.mxu0
    %v3775 = vadd.f32 0.0, %v3774
    %v3776 = vpop.f32.mrf.mxu0
    %3777 = vdwg.mxu0
    %v3778 = vadd.f32 %v3672, %v3775
    %v3779 = vld [vmem:[#allocation5 + $0x40] sm:$0x3]
    %v3780 = vld [vmem:[#allocation5 + $0x48] sm:$0x3]
    %s3781 = scalar_lea.vmem %s5, 1024
    %v3782 = vld [vmem:[%s3781] sm:$0xff]
    %v3783 = vld [vmem:[%s3781 + $0x8] sm:$0xff]
    %v3784 = vld [vmem:[%s3781 + $0x10] sm:$0xff]
    %v3785 = vld [vmem:[%s3781 + $0x18] sm:$0xff]
    %v3786 = vld [vmem:[%s3781 + $0x20] sm:$0xff]
    %v3787 = vld [vmem:[%s3781 + $0x28] sm:$0xff]
    %v3788 = vld [vmem:[%s3781 + $0x30] sm:$0xff]
    %v3789 = vld [vmem:[%s3781 + $0x38] sm:$0xff]
    %v3790 = vld [vmem:[%s3781 + $0x40] sm:$0xff]
    %v3791 = vld [vmem:[%s3781 + $0x48] sm:$0xff]
    %v3792 = vld [vmem:[%s3781 + $0x50] sm:$0xff]
    %v3793 = vld [vmem:[%s3781 + $0x58] sm:$0xff]
    %v3794 = vld [vmem:[%s3781 + $0x60] sm:$0xff]
    %v3795 = vld [vmem:[%s3781 + $0x68] sm:$0xff]
    %v3796 = vld [vmem:[%s3781 + $0x70] sm:$0xff]
    %v3797 = vld [vmem:[%s3781 + $0x78] sm:$0xff]
    %v3798 = vld [vmem:[%s3781 + $0x80] sm:$0xff]
    %v3799 = vld [vmem:[%s3781 + $0x88] sm:$0xff]
    %v3800 = vld [vmem:[%s3781 + $0x90] sm:$0xff]
    %v3801 = vld [vmem:[%s3781 + $0x98] sm:$0xff]
    %v3802 = vld [vmem:[%s3781 + $0xa0] sm:$0xff]
    %v3803 = vld [vmem:[%s3781 + $0xa8] sm:$0xff]
    %v3804 = vld [vmem:[%s3781 + $0xb0] sm:$0xff]
    %v3805 = vld [vmem:[%s3781 + $0xb8] sm:$0xff]
    %v3806 = vld [vmem:[%s3781 + $0xc0] sm:$0xff]
    %v3807 = vld [vmem:[%s3781 + $0xc8] sm:$0xff]
    %v3808 = vld [vmem:[%s3781 + $0xd0] sm:$0xff]
    %v3809 = vld [vmem:[%s3781 + $0xd8] sm:$0xff]
    %v3810 = vld [vmem:[%s3781 + $0xe0] sm:$0xff]
    %v3811 = vld [vmem:[%s3781 + $0xe8] sm:$0xff]
    %v3812 = vld [vmem:[%s3781 + $0xf0] sm:$0xff]
    %v3813 = vld [vmem:[%s3781 + $0xf8] sm:$0xff]
    %3814 = vmatprep.subr.mxu0 0.0
    %3815 = vmatpush1.msra.mxu0 %v3797
    %3816 = vmatprep.subr.mxu0 0.0
    %3817 = vmatpush1.msra.mxu0 %v3796
    %3818 = vmatprep.subr.mxu0 0.0
    %3819 = vmatpush1.msra.mxu0 %v3795
    %3820 = vmatprep.subr.mxu0 0.0
    %3821 = vmatpush1.msra.mxu0 %v3794
    %3822 = vmatprep.subr.mxu0 0.0
    %3823 = vmatpush1.msra.mxu0 %v3793
    %3824 = vmatprep.subr.mxu0 0.0
    %3825 = vmatpush1.msra.mxu0 %v3792
    %3826 = vmatprep.subr.mxu0 0.0
    %3827 = vmatpush1.msra.mxu0 %v3791
    %3828 = vmatprep.subr.mxu0 0.0
    %3829 = vmatpush1.msra.mxu0 %v3790
    %3830 = vmatprep.subr.mxu0 0.0
    %3831 = vmatpush1.msra.mxu0 %v3789
    %3832 = vmatprep.subr.mxu0 0.0
    %3833 = vmatpush1.msra.mxu0 %v3788
    %3834 = vmatprep.subr.mxu0 0.0
    %3835 = vmatpush1.msra.mxu0 %v3787
    %3836 = vmatprep.subr.mxu0 0.0
    %3837 = vmatpush1.msra.mxu0 %v3786
    %3838 = vmatprep.subr.mxu0 0.0
    %3839 = vmatpush1.msra.mxu0 %v3785
    %3840 = vmatprep.subr.mxu0 0.0
    %3841 = vmatpush1.msra.mxu0 %v3784
    %3842 = vmatprep.subr.mxu0 0.0
    %3843 = vmatpush1.msra.mxu0 %v3783
    %3844 = vmatprep.subr.mxu0 0.0
    %3845 = vmatpush1.msra.mxu0 %v3782
    %3846 = vmatprep.subr.mxu0 0.0
    %3847 = vmatpush2.msra.mxu0 %v3813
    %3848 = vmatprep.subr.mxu0 0.0
    %3849 = vmatpush2.msra.mxu0 %v3812
    %3850 = vmatprep.subr.mxu0 0.0
    %3851 = vmatpush2.msra.mxu0 %v3811
    %3852 = vmatprep.subr.mxu0 0.0
    %3853 = vmatpush2.msra.mxu0 %v3810
    %3854 = vmatprep.subr.mxu0 0.0
    %3855 = vmatpush2.msra.mxu0 %v3809
    %3856 = vmatprep.subr.mxu0 0.0
    %3857 = vmatpush2.msra.mxu0 %v3808
    %3858 = vmatprep.subr.mxu0 0.0
    %3859 = vmatpush2.msra.mxu0 %v3807
    %3860 = vmatprep.subr.mxu0 0.0
    %3861 = vmatpush2.msra.mxu0 %v3806
    %3862 = vmatprep.subr.mxu0 0.0
    %3863 = vmatpush2.msra.mxu0 %v3805
    %3864 = vmatprep.subr.mxu0 0.0
    %3865 = vmatpush2.msra.mxu0 %v3804
    %3866 = vmatprep.subr.mxu0 0.0
    %3867 = vmatpush2.msra.mxu0 %v3803
    %3868 = vmatprep.subr.mxu0 0.0
    %3869 = vmatpush2.msra.mxu0 %v3802
    %3870 = vmatprep.subr.mxu0 0.0
    %3871 = vmatpush2.msra.mxu0 %v3801
    %3872 = vmatprep.subr.mxu0 0.0
    %3873 = vmatpush2.msra.mxu0 %v3800
    %3874 = vmatprep.subr.mxu0 0.0
    %3875 = vmatpush2.msra.mxu0 %v3799
    %3876 = vmatprep.subr.mxu0 0.0
    %3877 = vmatpush2.msra.mxu0 %v3798
    %3878 = vmatprep.mubr.f32.mxu0 %v3780
    %3879 = vmatmul.mubr.f32.gmra.mxu0 %v3779
    %v3880 = vpop.f32.mrf.mxu0
    %v3881 = vadd.f32 0.0, %v3880
    %v3882 = vpop.f32.mrf.mxu0
    %3883 = vdwg.mxu0
    %v3884 = vadd.f32 %v3778, %v3881
    %v3885 = vld [vmem:[%s6] sm:$0x1]
    %v3887 = vlaneseq
    %v3888 = vshrl.u32 %v3887, 7
    %v3889 = vsub.s32 0, %v3888
    %v3890 = vrot.slane %v3885, %v3889
    %v3892 = vadd.f32 %v3884, %v3890
    %v3893 = vmax.f32 %v3892, 0.0
    %v3894 = vld [vmem:[%s7] sm:$0xff]
    %v3895 = vld [vmem:[%s7 + $0x8] sm:$0xff]
    %v3896 = vld [vmem:[%s7 + $0x10] sm:$0xff]
    %v3897 = vld [vmem:[%s7 + $0x18] sm:$0xff]
    %v3898 = vld [vmem:[%s7 + $0x20] sm:$0xff]
    %v3899 = vld [vmem:[%s7 + $0x28] sm:$0xff]
    %v3900 = vld [vmem:[%s7 + $0x30] sm:$0xff]
    %v3901 = vld [vmem:[%s7 + $0x38] sm:$0xff]
    %v3902 = vld [vmem:[%s7 + $0x40] sm:$0xff]
    %v3903 = vld [vmem:[%s7 + $0x48] sm:$0xff]
    %v3904 = vld [vmem:[%s7 + $0x50] sm:$0xff]
    %v3905 = vld [vmem:[%s7 + $0x58] sm:$0xff]
    %v3906 = vld [vmem:[%s7 + $0x60] sm:$0xff]
    %v3907 = vld [vmem:[%s7 + $0x68] sm:$0xff]
    %v3908 = vld [vmem:[%s7 + $0x70] sm:$0xff]
    %v3909 = vld [vmem:[%s7 + $0x78] sm:$0xff]
    %v3910 = vld [vmem:[%s8] sm:$0x1]
    %v3912 = vlaneseq
    %v3913 = vshrl.u32 %v3912, 7
    %v3914 = vsub.s32 0, %v3913
    %v3915 = vrot.slane %v3910, %v3914
    %3917 = vmatprep.subr.mxu0 0.0
    %3918 = vmatpush1.msra.mxu0 %v3909
    %3919 = vmatprep.subr.mxu0 0.0
    %3920 = vmatpush1.msra.mxu0 %v3908
    %3921 = vmatprep.subr.mxu0 0.0
    %3922 = vmatpush1.msra.mxu0 %v3907
    %3923 = vmatprep.subr.mxu0 0.0
    %3924 = vmatpush1.msra.mxu0 %v3906
    %3925 = vmatprep.subr.mxu0 0.0
    %3926 = vmatpush1.msra.mxu0 %v3905
    %3927 = vmatprep.subr.mxu0 0.0
    %3928 = vmatpush1.msra.mxu0 %v3904
    %3929 = vmatprep.subr.mxu0 0.0
    %3930 = vmatpush1.msra.mxu0 %v3903
    %3931 = vmatprep.subr.mxu0 0.0
    %3932 = vmatpush1.msra.mxu0 %v3902
    %3933 = vmatprep.subr.mxu0 0.0
    %3934 = vmatpush1.msra.mxu0 %v3901
    %3935 = vmatprep.subr.mxu0 0.0
    %3936 = vmatpush1.msra.mxu0 %v3900
    %3937 = vmatprep.subr.mxu0 0.0
    %3938 = vmatpush1.msra.mxu0 %v3899
    %3939 = vmatprep.subr.mxu0 0.0
    %3940 = vmatpush1.msra.mxu0 %v3898
    %3941 = vmatprep.subr.mxu0 0.0
    %3942 = vmatpush1.msra.mxu0 %v3897
    %3943 = vmatprep.subr.mxu0 0.0
    %3944 = vmatpush1.msra.mxu0 %v3896
    %3945 = vmatprep.subr.mxu0 0.0
    %3946 = vmatpush1.msra.mxu0 %v3895
    %3947 = vmatprep.subr.mxu0 0.0
    %3948 = vmatpush1.msra.mxu0 %v3894
    %3949 = vmatprep.subr.mxu0 0.0
    %3950 = vmatpush2.msra.mxu0 0.0
    %3951 = vmatprep.subr.mxu0 0.0
    %3952 = vmatpush2.msra.mxu0 0.0
    %3953 = vmatprep.subr.mxu0 0.0
    %3954 = vmatpush2.msra.mxu0 0.0
    %3955 = vmatprep.subr.mxu0 0.0
    %3956 = vmatpush2.msra.mxu0 0.0
    %3957 = vmatprep.subr.mxu0 0.0
    %3958 = vmatpush2.msra.mxu0 0.0
    %3959 = vmatprep.subr.mxu0 0.0
    %3960 = vmatpush2.msra.mxu0 0.0
    %3961 = vmatprep.subr.mxu0 0.0
    %3962 = vmatpush2.msra.mxu0 0.0
    %3963 = vmatprep.subr.mxu0 0.0
    %3964 = vmatpush2.msra.mxu0 0.0
    %3965 = vmatprep.subr.mxu0 0.0
    %3966 = vmatpush2.msra.mxu0 0.0
    %3967 = vmatprep.subr.mxu0 0.0
    %3968 = vmatpush2.msra.mxu0 0.0
    %3969 = vmatprep.subr.mxu0 0.0
    %3970 = vmatpush2.msra.mxu0 0.0
    %3971 = vmatprep.subr.mxu0 0.0
    %3972 = vmatpush2.msra.mxu0 0.0
    %3973 = vmatprep.subr.mxu0 0.0
    %3974 = vmatpush2.msra.mxu0 0.0
    %3975 = vmatprep.subr.mxu0 0.0
    %3976 = vmatpush2.msra.mxu0 0.0
    %3977 = vmatprep.subr.mxu0 0.0
    %3978 = vmatpush2.msra.mxu0 0.0
    %3979 = vmatprep.subr.mxu0 0.0
    %3980 = vmatpush2.msra.mxu0 0.0
    %3981 = vmatprep.mubr.f32.mxu0 0.0
    %3982 = vmatmul.mubr.f32.gmra.mxu0 %v3893
    %v3983 = vpop.f32.mrf.mxu0
    %v3984 = vadd.f32 %v3915, %v3983
    %v3985 = vpop.f32.mrf.mxu0
    %3986 = vdwg.mxu0
    %v3987 = vmax.f32 %v3984, 0.0
    %v3988 = vld [vmem:[%s9] sm:$0xff]
    %v3989 = vld [vmem:[%s9 + $0x8] sm:$0xff]
    %v3990 = vld [vmem:[%s9 + $0x10] sm:$0xff]
    %v3991 = vld [vmem:[%s9 + $0x18] sm:$0xff]
    %v3992 = vld [vmem:[%s9 + $0x20] sm:$0xff]
    %v3993 = vld [vmem:[%s9 + $0x28] sm:$0xff]
    %v3994 = vld [vmem:[%s9 + $0x30] sm:$0xff]
    %v3995 = vld [vmem:[%s9 + $0x38] sm:$0xff]
    %v3996 = vld [vmem:[%s9 + $0x40] sm:$0xff]
    %v3997 = vld [vmem:[%s9 + $0x48] sm:$0xff]
    %v3998 = vld [vmem:[%s9 + $0x50] sm:$0xff]
    %v3999 = vld [vmem:[%s9 + $0x58] sm:$0xff]
    %v4000 = vld [vmem:[%s9 + $0x60] sm:$0xff]
    %v4001 = vld [vmem:[%s9 + $0x68] sm:$0xff]
    %v4002 = vld [vmem:[%s9 + $0x70] sm:$0xff]
    %v4003 = vld [vmem:[%s9 + $0x78] sm:$0xff]
    %v4004 = vld [vmem:[%s10] sm:$0x1]
    %v4006 = vlaneseq
    %v4007 = vshrl.u32 %v4006, 7
    %v4008 = vsub.s32 0, %v4007
    %v4009 = vrot.slane %v4004, %v4008
    %4011 = vmatprep.subr.mxu0 0.0
    %4012 = vmatpush1.msra.mxu0 %v4003
    %4013 = vmatprep.subr.mxu0 0.0
    %4014 = vmatpush1.msra.mxu0 %v4002
    %4015 = vmatprep.subr.mxu0 0.0
    %4016 = vmatpush1.msra.mxu0 %v4001
    %4017 = vmatprep.subr.mxu0 0.0
    %4018 = vmatpush1.msra.mxu0 %v4000
    %4019 = vmatprep.subr.mxu0 0.0
    %4020 = vmatpush1.msra.mxu0 %v3999
    %4021 = vmatprep.subr.mxu0 0.0
    %4022 = vmatpush1.msra.mxu0 %v3998
    %4023 = vmatprep.subr.mxu0 0.0
    %4024 = vmatpush1.msra.mxu0 %v3997
    %4025 = vmatprep.subr.mxu0 0.0
    %4026 = vmatpush1.msra.mxu0 %v3996
    %4027 = vmatprep.subr.mxu0 0.0
    %4028 = vmatpush1.msra.mxu0 %v3995
    %4029 = vmatprep.subr.mxu0 0.0
    %4030 = vmatpush1.msra.mxu0 %v3994
    %4031 = vmatprep.subr.mxu0 0.0
    %4032 = vmatpush1.msra.mxu0 %v3993
    %4033 = vmatprep.subr.mxu0 0.0
    %4034 = vmatpush1.msra.mxu0 %v3992
    %4035 = vmatprep.subr.mxu0 0.0
    %4036 = vmatpush1.msra.mxu0 %v3991
    %4037 = vmatprep.subr.mxu0 0.0
    %4038 = vmatpush1.msra.mxu0 %v3990
    %4039 = vmatprep.subr.mxu0 0.0
    %4040 = vmatpush1.msra.mxu0 %v3989
    %4041 = vmatprep.subr.mxu0 0.0
    %4042 = vmatpush1.msra.mxu0 %v3988
    %4043 = vmatprep.subr.mxu0 0.0
    %4044 = vmatpush2.msra.mxu0 0.0
    %4045 = vmatprep.subr.mxu0 0.0
    %4046 = vmatpush2.msra.mxu0 0.0
    %4047 = vmatprep.subr.mxu0 0.0
    %4048 = vmatpush2.msra.mxu0 0.0
    %4049 = vmatprep.subr.mxu0 0.0
    %4050 = vmatpush2.msra.mxu0 0.0
    %4051 = vmatprep.subr.mxu0 0.0
    %4052 = vmatpush2.msra.mxu0 0.0
    %4053 = vmatprep.subr.mxu0 0.0
    %4054 = vmatpush2.msra.mxu0 0.0
    %4055 = vmatprep.subr.mxu0 0.0
    %4056 = vmatpush2.msra.mxu0 0.0
    %4057 = vmatprep.subr.mxu0 0.0
    %4058 = vmatpush2.msra.mxu0 0.0
    %4059 = vmatprep.subr.mxu0 0.0
    %4060 = vmatpush2.msra.mxu0 0.0
    %4061 = vmatprep.subr.mxu0 0.0
    %4062 = vmatpush2.msra.mxu0 0.0
    %4063 = vmatprep.subr.mxu0 0.0
    %4064 = vmatpush2.msra.mxu0 0.0
    %4065 = vmatprep.subr.mxu0 0.0
    %4066 = vmatpush2.msra.mxu0 0.0
    %4067 = vmatprep.subr.mxu0 0.0
    %4068 = vmatpush2.msra.mxu0 0.0
    %4069 = vmatprep.subr.mxu0 0.0
    %4070 = vmatpush2.msra.mxu0 0.0
    %4071 = vmatprep.subr.mxu0 0.0
    %4072 = vmatpush2.msra.mxu0 0.0
    %4073 = vmatprep.subr.mxu0 0.0
    %4074 = vmatpush2.msra.mxu0 0.0
    %4075 = vmatprep.mubr.f32.mxu0 0.0
    %4076 = vmatmul.mubr.f32.gmra.mxu0 %v3987
    %v4077 = vpop.f32.mrf.mxu0
    %v4078 = vadd.f32 %v4009, %v4077
    %v4079 = vpop.f32.mrf.mxu0
    %4080 = vdwg.mxu0
    %4081 = vst [vmem:[#allocation6] sm:$0x3] %v4078
    // Predicated region
    $region46: #{lenet_forward.1} parent=1 // pred_check
      _
    $region47: #{lenet_forward.1} parent=1 // pred_check_branch
      %4083 = sbr.rel (0) target = $region49
    $region48: #{lenet_forward.1} parent=1 // pred_region
      %s4085 = ssub.s32 32, 32
      %4086 = vsyncadd [#allocation7], %s4085
      %s4088 = sshll.u32 [#allocation6], 4
      %s4089 = int_to_ptr.vmem [resolvable:$true] %s4088
      %4091 = dma.vmem_to_hbm [thread:$0]  %s4089, 32, %s11, [#allocation7]
    $region49: #{lenet_forward.1} parent=1 // pred_fallthru
      _
    // Predicated region
    $region50: #{lenet_forward.1} parent=1 // pred_check
      _
    $region51: #{lenet_forward.1} parent=1 // pred_check_branch
      %4093 = sbr.rel (0) target = $region53
    $region52: #{lenet_forward.1} parent=1 // pred_region
      %4094 = dma.done [#allocation7], 32
    $region53: #{lenet_forward.1} parent=1 // pred_fallthru
      _
    %4095 = vsyncpa [#allocation7], 1

</llo_original>
